<compile_context>
chip_gen: v6e
topology: v6e:2x2x1
jax: 0.10.0
libtpu: 0.0.40
codegen_flags: <defaults>
</compile_context>

<pallas_src>
import math

import jax
import jax.numpy as jnp
from jax.experimental import pallas as pl
from jax.experimental.pallas import tpu as pltpu

EPS = 1e-5


# ----------------------------------------------------------------------------
# Fused (sum of matmuls + shift + optional residual + Mish) Pallas kernel
# ----------------------------------------------------------------------------
def _make_kernel(n_terms: int, has_res: bool, act: str, multi_k: bool):
    """Kernel computing act(sum_t(x_t @ w_t) + shift [+ residual])."""

    def kernel(*refs):
        idx = 0
        xs, ws = [], []
        for _ in range(n_terms):
            xs.append(refs[idx])
            ws.append(refs[idx + 1])
            idx += 2
        sh_ref = refs[idx]
        idx += 1
        r_ref = None
        if has_res:
            r_ref = refs[idx]
            idx += 1
        o_ref = refs[idx]
        idx += 1
        acc_ref = refs[idx] if multi_k else None

        def partial_sum():
            # bf16 x bf16 -> fp32 accumulate on the MXU
            s = jnp.dot(xs[0][...], ws[0][...], preferred_element_type=jnp.float32)
            for t in range(1, n_terms):
                s = s + jnp.dot(
                    xs[t][...], ws[t][...], preferred_element_type=jnp.float32
                )
            return s

        def epilogue(y):
            # BN scale is already folded into the weights; only the shift remains.
            y = y + sh_ref[...]
            if has_res:
                y = y + r_ref[...].astype(jnp.float32)
            if act == "mish":
                # mish(y) = y * tanh(softplus(y)); numerically stable softplus
                sp = jnp.maximum(y, 0.0) + jnp.log1p(jnp.exp(-jnp.abs(y)))
                y = y * jnp.tanh(sp)
            o_ref[...] = y.astype(o_ref.dtype)

        if multi_k:
            k = pl.program_id(2)

            @pl.when(k == 0)
            def _():
                acc_ref[...] = jnp.zeros_like(acc_ref)

            acc_ref[...] += partial_sum()

            @pl.when(k == pl.num_programs(2) - 1)
            def _():
                epilogue(acc_ref[...])
        else:
            # Single reduction step: skip the scratch accumulator entirely.
            epilogue(partial_sum())

    return kernel


# ----------------------------------------------------------------------------
# Tiling helpers (static Python ints)
# ----------------------------------------------------------------------------
def _cdiv(a, b):
    return (a + b - 1) // b


def _round_up(a, b):
    return _cdiv(a, b) * b


def _kn_tiles(K, N):
    """Padded K/N sizes and tile sizes (chosen once per layer at init)."""
    Kp = _round_up(K, 128)
    nk = _cdiv(Kp, 2048)                     # deep K tiles: few reduction steps
    tk = _round_up(_cdiv(Kp, nk), 128)
    Kp = tk * nk
    Np = _round_up(N, 128)
    nn = _cdiv(Np, 512)                      # wide, lane-dense N tiles
    tn = _round_up(_cdiv(Np, nn), 128)
    Np = tn * nn
    return Kp, Np, tk, tn


def _m_tiles(M, n_blocks_n):
    Mp = _round_up(M, 16)                    # bf16 sublane packing: min 16 rows
    nm = _cdiv(Mp, 512)                      # M tiles up to 512 rows
    tm = _round_up(_cdiv(Mp, nm), 16)
    Mp = tm * nm
    # v7x has 2 TensorCores sharded over "parallel" axes: keep >= 2 blocks.
    if nm == 1 and n_blocks_n == 1 and Mp >= 32 and (Mp // 2) % 16 == 0:
        tm = Mp // 2
        nm = 2
    return Mp, tm, nm


# ----------------------------------------------------------------------------
# Fused matmul wrapper: out = act(sum_t(x_t @ w_t) + shift [+ residual])
# ----------------------------------------------------------------------------
def fused_matmul(xs, layer, residual=None, act="mish"):
    ws = layer["ws"]        # list of (Kp, Np) bf16, BN-scale folded, pre-padded
    sh = layer["shift"]     # (1, Np) fp32
    Kp, Np = ws[0].shape
    tk, tn = layer["tk"], layer["tn"]
    Nout = layer["N"]
    nn = Np // tn
    nk = Kp // tk
    M = xs[0].shape[0]
    Mp, tm, nm = _m_tiles(M, nn)

    xps = [
        jnp.pad(x.astype(jnp.bfloat16), ((0, Mp - M), (0, Kp - x.shape[1])))
        for x in xs
    ]

    multi_k = nk > 1
    has_res = residual is not None

    if multi_k:
        x_map = lambda i, j, k: (i, k)
        w_map = lambda i, j, k: (k, j)
        sh_map = lambda i, j, k: (0, j)
        mn_map = lambda i, j, k: (i, j)
        grid = (nm, nn, nk)
        sem = ("parallel", "parallel", "arbitrary")
        scratch = [pltpu.VMEM((tm, tn), jnp.float32)]
    else:
        x_map = lambda i, j: (i, 0)
        w_map = lambda i, j: (0, j)
        sh_map = lambda i, j: (0, j)
        mn_map = lambda i, j: (i, j)
        grid = (nm, nn)
        sem = ("parallel", "parallel")
        scratch = []

    inputs = []
    in_specs = []
    for xp, wp in zip(xps, ws):
        inputs += [xp, wp]
        in_specs += [
            pl.BlockSpec((tm, tk), x_map),
            pl.BlockSpec((tk, tn), w_map),
        ]
    inputs.append(sh)
    in_specs.append(pl.BlockSpec((1, tn), sh_map))
    if has_res:
        rp = jnp.pad(residual.astype(jnp.bfloat16), ((0, Mp - M), (0, Np - Nout)))
        inputs.append(rp)
        in_specs.append(pl.BlockSpec((tm, tn), mn_map))

    out = pl.pallas_call(
        _make_kernel(len(xs), has_res, act, multi_k),
        out_shape=jax.ShapeDtypeStruct((Mp, Np), jnp.bfloat16),
        grid_spec=pltpu.PrefetchScalarGridSpec(
            num_scalar_prefetch=0,
            grid=grid,
            in_specs=in_specs,
            out_specs=pl.BlockSpec((tm, tn), mn_map),
            scratch_shapes=scratch,
        ),
        compiler_params=pltpu.CompilerParams(
            dimension_semantics=sem,
            vmem_limit_bytes=32 * 1024 * 1024,
        ),
    )(*inputs)
    return out[:M, :Nout]


# ----------------------------------------------------------------------------
# Conv glue: im2col in plain JAX (bf16), hot path in the fused kernel
# ----------------------------------------------------------------------------
def _im2col(x, kh, kw, stride, pad):
    # x: (B, H, W, C) NHWC, bf16
    B, H, W, C = x.shape
    if kh == 1 and kw == 1 and stride == 1 and pad == 0:
        return x.reshape(B * H * W, C), H, W
    # TODO(synk): fold the kh*kw taps into the K grid axis so the patch tensor is
    #             never materialized in HBM (currently emitted in bf16 only).
    xp = jnp.pad(x, ((0, 0), (pad, pad), (pad, pad), (0, 0)))
    Hp, Wp = H + 2 * pad, W + 2 * pad
    Ho = (Hp - kh) // stride + 1
    Wo = (Wp - kw) // stride + 1
    cols = []
    for i in range(kh):
        for j in range(kw):
            cols.append(
                xp[
                    :,
                    i : i + (Ho - 1) * stride + 1 : stride,
                    j : j + (Wo - 1) * stride + 1 : stride,
                    :,
                ]
            )
    patches = jnp.concatenate(cols, axis=-1)  # (B, Ho, Wo, kh*kw*C), matches w layout
    return patches.reshape(B * Ho * Wo, kh * kw * C), Ho, Wo


def conv_layer(x, layer, stride, pad, act="mish", residual=None):
    B = x.shape[0]
    kh, kw = layer["kh"], layer["kw"]
    patches, Ho, Wo = _im2col(x, kh, kw, stride, pad)
    res = residual.reshape(-1, layer["N"]) if residual is not None else None
    out = fused_matmul([patches], layer, residual=res, act=act)
    return out.reshape(B, Ho, Wo, layer["N"])


# ----------------------------------------------------------------------------
# Deterministic parameter init + host-side prep (BN fold, pad, bf16 cast)
# ----------------------------------------------------------------------------
class KeyGen:
    def __init__(self, key):
        self.key = key

    def __call__(self):
        self.key, k = jax.random.split(self.key)
        return k


def _conv_init(key, kh, kw, cin, cout):
    fan_in = kh * kw * cin
    return jax.random.normal(key, (kh, kw, cin, cout), jnp.float32) / math.sqrt(fan_in)


def _bn_init(key, c):
    k1, k2, k3, k4 = jax.random.split(key, 4)
    return {
        "gamma": 1.0 + 0.1 * jax.random.normal(k1, (c,), jnp.float32),
        "beta": 0.1 * jax.random.normal(k2, (c,), jnp.float32),
        "mean": 0.1 * jax.random.normal(k3, (c,), jnp.float32),
        "var": 1.0 + 0.1 * jax.random.uniform(k4, (c,), jnp.float32),
    }


def _fold_conv_bn(kg, kh, kw, cin, cout):
    """Conv weight with inference-mode BN scale folded in; returns (K,N) fp32 + shift."""
    w = _conv_init(kg(), kh, kw, cin, cout)
    bn = _bn_init(kg(), cout)
    scale = bn["gamma"] / jnp.sqrt(bn["var"] + EPS)
    shift = bn["beta"] - bn["mean"] * scale
    w_folded = (w * scale).reshape(kh * kw * cin, cout)
    return w_folded, shift


def _pack_layer(ws, shift, kh=1, kw=1):
    """Pad + bf16-cast weight slabs (sharing K and N) once at init."""
    K, N = ws[0].shape
    for w in ws:
        assert w.shape == (K, N)
    Kp, Np, tk, tn = _kn_tiles(K, N)
    wps = [jnp.pad(w, ((0, Kp - K), (0, Np - N))).astype(jnp.bfloat16) for w in ws]
    shp = jnp.pad(shift, (0, Np - N)).reshape(1, Np).astype(jnp.float32)
    return {"ws": wps, "shift": shp, "K": K, "N": N, "tk": tk, "tn": tn,
            "kh": kh, "kw": kw}


def init_cspfirst(kg, cin, cout):
    # dsample: 3x3 stride-2 conv + BN + Mish
    w_ds, s_ds = _fold_conv_bn(kg, 3, 3, cin, cout)
    # trans_0 / trans_1: two 1x1 convs over the same input -> fuse weights along N
    w_t0, s_t0 = _fold_conv_bn(kg, 1, 1, cout, cout)
    w_t1, s_t1 = _fold_conv_bn(kg, 1, 1, cout, cout)
    w_t01 = jnp.concatenate([w_t0, w_t1], axis=1)
    s_t01 = jnp.concatenate([s_t0, s_t1], axis=0)
    # residual block: 1x1 (Mish) then 3x3 + BN + residual + Mish
    w_b1, s_b1 = _fold_conv_bn(kg, 1, 1, cout, cout // 2)
    w_b2, s_b2 = _fold_conv_bn(kg, 3, 3, cout // 2, cout)
    # trans_cat over concat(out0, out1): split into two K-halves so the channel
    # concat is fused away (dual-input matmul kernel).
    w_tc, s_tc = _fold_conv_bn(kg, 1, 1, 2 * cout, cout)
    w_tc_a, w_tc_b = w_tc[:cout], w_tc[cout:]
    return {
        "dsample": _pack_layer([w_ds], s_ds, 3, 3),
        "trans_01": _pack_layer([w_t01], s_t01),
        "block": {
            "conv1": _pack_layer([w_b1], s_b1),
            "conv2": _pack_layer([w_b2], s_b2, 3, 3),
        },
        "trans_cat": _pack_layer([w_tc_a, w_tc_b], s_tc),
        "cout": cout,
    }


# ----------------------------------------------------------------------------
# Forward pass (mirrors the PyTorch module structure)
# ----------------------------------------------------------------------------
def resblock_forward(x, p):
    out = conv_layer(x, p["conv1"], 1, 0, act="mish")
    # conv2 -> bn -> (+ x) -> mish, fused in a single kernel call
    out = conv_layer(out, p["conv2"], 1, 1, act="mish", residual=x)
    return out


def cspfirst_forward(x_nchw, p):
    # accepts NCHW like PyTorch, computes in NHWC / bf16 internally
    cout = p["cout"]
    x = jnp.transpose(x_nchw, (0, 2, 3, 1)).astype(jnp.bfloat16)
    x = conv_layer(x, p["dsample"], 2, 1)            # 3x3 stride-2 + BN + Mish
    B, Ho, Wo, _ = x.shape
    # trans_0 + trans_1 fused: one matmul over x producing 2*cout channels
    y01 = conv_layer(x, p["trans_01"], 1, 0)         # (B, Ho, Wo, 2*cout)
    out0 = y01[..., :cout]
    out1 = y01[..., cout:]
    out1 = resblock_forward(out1, p["block"])
    # concat + trans_cat fused: act(out0 @ Wa + out1 @ Wb + shift), no HBM concat
    out = fused_matmul(
        [out0.reshape(-1, cout), out1.reshape(-1, cout)], p["trans_cat"], act="mish"
    )
    out = out.reshape(B, Ho, Wo, cout)
    return jnp.transpose(out, (0, 3, 1, 2)).astype(jnp.float32)


# ----------------------------------------------------------------------------
if __name__ == "__main__":
    key = jax.random.PRNGKey(0)
    k_params, k_input = jax.random.split(key)
    kg = KeyGen(k_params)

    in_channels, out_channels = 32, 64          # CSPFirst(32, 64) as in CSP-Darknet53
    params = init_cspfirst(kg, in_channels, out_channels)

    x = jax.random.normal(k_input, (2, in_channels, 32, 32), jnp.float32)

    fwd = jax.jit(lambda inp: cspfirst_forward(inp, params))
    out = jax.block_until_ready(fwd(x))

    assert out.shape == (2, out_channels, 16, 16)
    assert bool(jnp.all(jnp.isfinite(out)))
    print("KERNEL_OK")
</pallas_src>

<mosaic_0001>
module attributes {stable_mosaic.version = 11 : i64} {
  func.func @kernel(%arg0: i32, %arg1: i32, %arg2: memref<256x384xbf16, #tpu.memory_space<vmem>>, %arg3: memref<384x128xbf16, #tpu.memory_space<vmem>>, %arg4: memref<1x128xf32, #tpu.memory_space<vmem>>, %arg5: memref<256x128xbf16, #tpu.memory_space<vmem>>) attributes {dimension_semantics = [#tpu.dimension_semantics<parallel>, #tpu.dimension_semantics<parallel>], iteration_bounds = array<i64: 2, 1>, scalar_prefetch = 0 : i64, scratch_operands = 0 : i64, tpu.core_type = #tpu.core_type<tc>, window_params = [{transform_indices = @transform_0, window_bounds = array<i64: 256, 384>}, {transform_indices = @transform_1, window_bounds = array<i64: 384, 128>}, {transform_indices = @transform_2, window_bounds = array<i64: 1, 128>}, {transform_indices = @transform_3, window_bounds = array<i64: 256, 128>}]} {
    %c0 = arith.constant 0 : index
    %c0_0 = arith.constant 0 : index
    %0 = vector.load %arg2[%c0, %c0_0] : memref<256x384xbf16, #tpu.memory_space<vmem>>, vector<256x384xbf16>
    %c0_1 = arith.constant 0 : index
    %c0_2 = arith.constant 0 : index
    %1 = vector.load %arg3[%c0_1, %c0_2] : memref<384x128xbf16, #tpu.memory_space<vmem>>, vector<384x128xbf16>
    %cst = arith.constant dense<0.000000e+00> : vector<256x128xf32>
    %2 = tpu.matmul %0, %1, %cst {dimension_numbers = #tpu.dot_dimension_numbers<[1], [0], [0], [1], [0, 0, 1, 1], [], []>} : vector<256x384xbf16>, vector<384x128xbf16>, vector<256x128xf32> -> vector<256x128xf32>
    %c0_3 = arith.constant 0 : index
    %c0_4 = arith.constant 0 : index
    %3 = vector.load %arg4[%c0_3, %c0_4] : memref<1x128xf32, #tpu.memory_space<vmem>>, vector<1x128xf32>
    %4 = vector.broadcast %3 : vector<1x128xf32> to vector<256x128xf32>
    %5 = arith.addf %2, %4 : vector<256x128xf32>
    %cst_5 = arith.constant 0.000000e+00 : f32
    %6 = vector.broadcast %cst_5 : f32 to vector<256x128xf32>
    %7 = arith.maximumf %5, %6 : vector<256x128xf32>
    %8 = math.absf %5 : vector<256x128xf32>
    %cst_6 = arith.constant 0.000000e+00 : f32
    %9 = vector.broadcast %cst_6 : f32 to vector<256x128xf32>
    %10 = arith.subf %9, %8 : vector<256x128xf32>
    %11 = math.exp %10 : vector<256x128xf32>
    %12 = math.log1p %11 : vector<256x128xf32>
    %13 = arith.addf %7, %12 : vector<256x128xf32>
    %14 = math.tanh %13 : vector<256x128xf32>
    %15 = arith.mulf %5, %14 : vector<256x128xf32>
    %16 = arith.truncf %15 : vector<256x128xf32> to vector<256x128xbf16>
    %c0_7 = arith.constant 0 : index
    %c0_8 = arith.constant 0 : index
    %17 = vector.load %arg5[%c0_7, %c0_8] : memref<256x128xbf16, #tpu.memory_space<vmem>>, vector<256x128xbf16>
    tpu.vector_store %arg5[%c0_7, %c0_8], %16 {strides = array<i32>} : memref<256x128xbf16, #tpu.memory_space<vmem>>, vector<256x128xbf16>,
    return
  }
  func.func @transform_0(%arg0: i32, %arg1: i32) -> (i32, i32) {
    %c0_i32 = arith.constant 0 : i32
    %c0_i32_0 = arith.constant 0 : i32
    return %arg0, %c0_i32 : i32, i32
  }
  func.func @transform_1(%arg0: i32, %arg1: i32) -> (i32, i32) {
    %c0_i32 = arith.constant 0 : i32
    %c0_i32_0 = arith.constant 0 : i32
    return %c0_i32, %arg1 : i32, i32
  }
  func.func @transform_2(%arg0: i32, %arg1: i32) -> (i32, i32) {
    %c0_i32 = arith.constant 0 : i32
    %c0_i32_0 = arith.constant 0 : i32
    return %c0_i32, %arg1 : i32, i32
  }
  func.func @transform_3(%arg0: i32, %arg1: i32) -> (i32, i32) {
    %c0_i32 = arith.constant 0 : i32
    return %arg0, %arg1 : i32, i32
  }
}

module attributes {stable_mosaic.version = 11 : i64} {
  func.func @kernel(%arg0: i32, %arg1: i32, %arg2: memref<256x128xbf16, #tpu.memory_space<vmem>>, %arg3: memref<128x128xbf16, #tpu.memory_space<vmem>>, %arg4: memref<1x128xf32, #tpu.memory_space<vmem>>, %arg5: memref<256x128xbf16, #tpu.memory_space<vmem>>) attributes {dimension_semantics = [#tpu.dimension_semantics<parallel>, #tpu.dimension_semantics<parallel>], iteration_bounds = array<i64: 2, 1>, scalar_prefetch = 0 : i64, scratch_operands = 0 : i64, tpu.core_type = #tpu.core_type<tc>, window_params = [{transform_indices = @transform_0, window_bounds = array<i64: 256, 128>}, {transform_indices = @transform_1, window_bounds = array<i64: 128, 128>}, {transform_indices = @transform_2, window_bounds = array<i64: 1, 128>}, {transform_indices = @transform_3, window_bounds = array<i64: 256, 128>}]} {
    %c0 = arith.constant 0 : index
    %c0_0 = arith.constant 0 : index
    %0 = vector.load %arg2[%c0, %c0_0] : memref<256x128xbf16, #tpu.memory_space<vmem>>, vector<256x128xbf16>
    %c0_1 = arith.constant 0 : index
    %c0_2 = arith.constant 0 : index
    %1 = vector.load %arg3[%c0_1, %c0_2] : memref<128x128xbf16, #tpu.memory_space<vmem>>, vector<128x128xbf16>
    %cst = arith.constant dense<0.000000e+00> : vector<256x128xf32>
    %2 = tpu.matmul %0, %1, %cst {dimension_numbers = #tpu.dot_dimension_numbers<[1], [0], [0], [1], [0, 0, 1, 1], [], []>} : vector<256x128xbf16>, vector<128x128xbf16>, vector<256x128xf32> -> vector<256x128xf32>
    %c0_3 = arith.constant 0 : index
    %c0_4 = arith.constant 0 : index
    %3 = vector.load %arg4[%c0_3, %c0_4] : memref<1x128xf32, #tpu.memory_space<vmem>>, vector<1x128xf32>
    %4 = vector.broadcast %3 : vector<1x128xf32> to vector<256x128xf32>
    %5 = arith.addf %2, %4 : vector<256x128xf32>
    %cst_5 = arith.constant 0.000000e+00 : f32
    %6 = vector.broadcast %cst_5 : f32 to vector<256x128xf32>
    %7 = arith.maximumf %5, %6 : vector<256x128xf32>
    %8 = math.absf %5 : vector<256x128xf32>
    %cst_6 = arith.constant 0.000000e+00 : f32
    %9 = vector.broadcast %cst_6 : f32 to vector<256x128xf32>
    %10 = arith.subf %9, %8 : vector<256x128xf32>
    %11 = math.exp %10 : vector<256x128xf32>
    %12 = math.log1p %11 : vector<256x128xf32>
    %13 = arith.addf %7, %12 : vector<256x128xf32>
    %14 = math.tanh %13 : vector<256x128xf32>
    %15 = arith.mulf %5, %14 : vector<256x128xf32>
    %16 = arith.truncf %15 : vector<256x128xf32> to vector<256x128xbf16>
    %c0_7 = arith.constant 0 : index
    %c0_8 = arith.constant 0 : index
    %17 = vector.load %arg5[%c0_7, %c0_8] : memref<256x128xbf16, #tpu.memory_space<vmem>>, vector<256x128xbf16>
    tpu.vector_store %arg5[%c0_7, %c0_8], %16 {strides = array<i32>} : memref<256x128xbf16, #tpu.memory_space<vmem>>, vector<256x128xbf16>,
    return
  }
  func.func @transform_0(%arg0: i32, %arg1: i32) -> (i32, i32) {
    %c0_i32 = arith.constant 0 : i32
    %c0_i32_0 = arith.constant 0 : i32
    return %arg0, %c0_i32 : i32, i32
  }
  func.func @transform_1(%arg0: i32, %arg1: i32) -> (i32, i32) {
    %c0_i32 = arith.constant 0 : i32
    %c0_i32_0 = arith.constant 0 : i32
    return %c0_i32, %arg1 : i32, i32
  }
  func.func @transform_2(%arg0: i32, %arg1: i32) -> (i32, i32) {
    %c0_i32 = arith.constant 0 : i32
    %c0_i32_0 = arith.constant 0 : i32
    return %c0_i32, %arg1 : i32, i32
  }
  func.func @transform_3(%arg0: i32, %arg1: i32) -> (i32, i32) {
    %c0_i32 = arith.constant 0 : i32
    return %arg0, %arg1 : i32, i32
  }
}

module attributes {stable_mosaic.version = 11 : i64} {
  func.func @kernel(%arg0: i32, %arg1: i32, %arg2: memref<256x384xbf16, #tpu.memory_space<vmem>>, %arg3: memref<384x128xbf16, #tpu.memory_space<vmem>>, %arg4: memref<1x128xf32, #tpu.memory_space<vmem>>, %arg5: memref<256x128xbf16, #tpu.memory_space<vmem>>, %arg6: memref<256x128xbf16, #tpu.memory_space<vmem>>) attributes {dimension_semantics = [#tpu.dimension_semantics<parallel>, #tpu.dimension_semantics<parallel>], iteration_bounds = array<i64: 2, 1>, scalar_prefetch = 0 : i64, scratch_operands = 0 : i64, tpu.core_type = #tpu.core_type<tc>, window_params = [{transform_indices = @transform_0, window_bounds = array<i64: 256, 384>}, {transform_indices = @transform_1, window_bounds = array<i64: 384, 128>}, {transform_indices = @transform_2, window_bounds = array<i64: 1, 128>}, {transform_indices = @transform_3, window_bounds = array<i64: 256, 128>}, {transform_indices = @transform_4, window_bounds = array<i64: 256, 128>}]} {
    %c0 = arith.constant 0 : index
    %c0_0 = arith.constant 0 : index
    %0 = vector.load %arg2[%c0, %c0_0] : memref<256x384xbf16, #tpu.memory_space<vmem>>, vector<256x384xbf16>
    %c0_1 = arith.constant 0 : index
    %c0_2 = arith.constant 0 : index
    %1 = vector.load %arg3[%c0_1, %c0_2] : memref<384x128xbf16, #tpu.memory_space<vmem>>, vector<384x128xbf16>
    %cst = arith.constant dense<0.000000e+00> : vector<256x128xf32>
    %2 = tpu.matmul %0, %1, %cst {dimension_numbers = #tpu.dot_dimension_numbers<[1], [0], [0], [1], [0, 0, 1, 1], [], []>} : vector<256x384xbf16>, vector<384x128xbf16>, vector<256x128xf32> -> vector<256x128xf32>
    %c0_3 = arith.constant 0 : index
    %c0_4 = arith.constant 0 : index
    %3 = vector.load %arg4[%c0_3, %c0_4] : memref<1x128xf32, #tpu.memory_space<vmem>>, vector<1x128xf32>
    %4 = vector.broadcast %3 : vector<1x128xf32> to vector<256x128xf32>
    %5 = arith.addf %2, %4 : vector<256x128xf32>
    %c0_5 = arith.constant 0 : index
    %c0_6 = arith.constant 0 : index
    %6 = vector.load %arg5[%c0_5, %c0_6] : memref<256x128xbf16, #tpu.memory_space<vmem>>, vector<256x128xbf16>
    %7 = arith.extf %6 : vector<256x128xbf16> to vector<256x128xf32>
    %8 = arith.addf %5, %7 : vector<256x128xf32>
    %cst_7 = arith.constant 0.000000e+00 : f32
    %9 = vector.broadcast %cst_7 : f32 to vector<256x128xf32>
    %10 = arith.maximumf %8, %9 : vector<256x128xf32>
    %11 = math.absf %8 : vector<256x128xf32>
    %cst_8 = arith.constant 0.000000e+00 : f32
    %12 = vector.broadcast %cst_8 : f32 to vector<256x128xf32>
    %13 = arith.subf %12, %11 : vector<256x128xf32>
    %14 = math.exp %13 : vector<256x128xf32>
    %15 = math.log1p %14 : vector<256x128xf32>
    %16 = arith.addf %10, %15 : vector<256x128xf32>
    %17 = math.tanh %16 : vector<256x128xf32>
    %18 = arith.mulf %8, %17 : vector<256x128xf32>
    %19 = arith.truncf %18 : vector<256x128xf32> to vector<256x128xbf16>
    %c0_9 = arith.constant 0 : index
    %c0_10 = arith.constant 0 : index
    %20 = vector.load %arg6[%c0_9, %c0_10] : memref<256x128xbf16, #tpu.memory_space<vmem>>, vector<256x128xbf16>
    tpu.vector_store %arg6[%c0_9, %c0_10], %19 {strides = array<i32>} : memref<256x128xbf16, #tpu.memory_space<vmem>>, vector<256x128xbf16>,
    return
  }
  func.func @transform_0(%arg0: i32, %arg1: i32) -> (i32, i32) {
    %c0_i32 = arith.constant 0 : i32
    %c0_i32_0 = arith.constant 0 : i32
    return %arg0, %c0_i32 : i32, i32
  }
  func.func @transform_1(%arg0: i32, %arg1: i32) -> (i32, i32) {
    %c0_i32 = arith.constant 0 : i32
    %c0_i32_0 = arith.constant 0 : i32
    return %c0_i32, %arg1 : i32, i32
  }
  func.func @transform_2(%arg0: i32, %arg1: i32) -> (i32, i32) {
    %c0_i32 = arith.constant 0 : i32
    %c0_i32_0 = arith.constant 0 : i32
    return %c0_i32, %arg1 : i32, i32
  }
  func.func @transform_3(%arg0: i32, %arg1: i32) -> (i32, i32) {
    %c0_i32 = arith.constant 0 : i32
    return %arg0, %arg1 : i32, i32
  }
  func.func @transform_4(%arg0: i32, %arg1: i32) -> (i32, i32) {
    %c0_i32 = arith.constant 0 : i32
    return %arg0, %arg1 : i32, i32
  }
}

module attributes {stable_mosaic.version = 11 : i64} {
  func.func @kernel(%arg0: i32, %arg1: i32, %arg2: memref<256x128xbf16, #tpu.memory_space<vmem>>, %arg3: memref<128x128xbf16, #tpu.memory_space<vmem>>, %arg4: memref<256x128xbf16, #tpu.memory_space<vmem>>, %arg5: memref<128x128xbf16, #tpu.memory_space<vmem>>, %arg6: memref<1x128xf32, #tpu.memory_space<vmem>>, %arg7: memref<256x128xbf16, #tpu.memory_space<vmem>>) attributes {dimension_semantics = [#tpu.dimension_semantics<parallel>, #tpu.dimension_semantics<parallel>], iteration_bounds = array<i64: 2, 1>, scalar_prefetch = 0 : i64, scratch_operands = 0 : i64, tpu.core_type = #tpu.core_type<tc>, window_params = [{transform_indices = @transform_0, window_bounds = array<i64: 256, 128>}, {transform_indices = @transform_1, window_bounds = array<i64: 128, 128>}, {transform_indices = @transform_2, window_bounds = array<i64: 256, 128>}, {transform_indices = @transform_3, window_bounds = array<i64: 128, 128>}, {transform_indices = @transform_4, window_bounds = array<i64: 1, 128>}, {transform_indices = @transform_5, window_bounds = array<i64: 256, 128>}]} {
    %c0 = arith.constant 0 : index
    %c0_0 = arith.constant 0 : index
    %0 = vector.load %arg2[%c0, %c0_0] : memref<256x128xbf16, #tpu.memory_space<vmem>>, vector<256x128xbf16>
    %c0_1 = arith.constant 0 : index
    %c0_2 = arith.constant 0 : index
    %1 = vector.load %arg3[%c0_1, %c0_2] : memref<128x128xbf16, #tpu.memory_space<vmem>>, vector<128x128xbf16>
    %cst = arith.constant dense<0.000000e+00> : vector<256x128xf32>
    %2 = tpu.matmul %0, %1, %cst {dimension_numbers = #tpu.dot_dimension_numbers<[1], [0], [0], [1], [0, 0, 1, 1], [], []>} : vector<256x128xbf16>, vector<128x128xbf16>, vector<256x128xf32> -> vector<256x128xf32>
    %c0_3 = arith.constant 0 : index
    %c0_4 = arith.constant 0 : index
    %3 = vector.load %arg4[%c0_3, %c0_4] : memref<256x128xbf16, #tpu.memory_space<vmem>>, vector<256x128xbf16>
    %c0_5 = arith.constant 0 : index
    %c0_6 = arith.constant 0 : index
    %4 = vector.load %arg5[%c0_5, %c0_6] : memref<128x128xbf16, #tpu.memory_space<vmem>>, vector<128x128xbf16>
    %cst_7 = arith.constant dense<0.000000e+00> : vector<256x128xf32>
    %5 = tpu.matmul %3, %4, %cst_7 {dimension_numbers = #tpu.dot_dimension_numbers<[1], [0], [0], [1], [0, 0, 1, 1], [], []>} : vector<256x128xbf16>, vector<128x128xbf16>, vector<256x128xf32> -> vector<256x128xf32>
    %6 = arith.addf %2, %5 : vector<256x128xf32>
    %c0_8 = arith.constant 0 : index
    %c0_9 = arith.constant 0 : index
    %7 = vector.load %arg6[%c0_8, %c0_9] : memref<1x128xf32, #tpu.memory_space<vmem>>, vector<1x128xf32>
    %8 = vector.broadcast %7 : vector<1x128xf32> to vector<256x128xf32>
    %9 = arith.addf %6, %8 : vector<256x128xf32>
    %cst_10 = arith.constant 0.000000e+00 : f32
    %10 = vector.broadcast %cst_10 : f32 to vector<256x128xf32>
    %11 = arith.maximumf %9, %10 : vector<256x128xf32>
    %12 = math.absf %9 : vector<256x128xf32>
    %cst_11 = arith.constant 0.000000e+00 : f32
    %13 = vector.broadcast %cst_11 : f32 to vector<256x128xf32>
    %14 = arith.subf %13, %12 : vector<256x128xf32>
    %15 = math.exp %14 : vector<256x128xf32>
    %16 = math.log1p %15 : vector<256x128xf32>
    %17 = arith.addf %11, %16 : vector<256x128xf32>
    %18 = math.tanh %17 : vector<256x128xf32>
    %19 = arith.mulf %9, %18 : vector<256x128xf32>
    %20 = arith.truncf %19 : vector<256x128xf32> to vector<256x128xbf16>
    %c0_12 = arith.constant 0 : index
    %c0_13 = arith.constant 0 : index
    %21 = vector.load %arg7[%c0_12, %c0_13] : memref<256x128xbf16, #tpu.memory_space<vmem>>, vector<256x128xbf16>
    tpu.vector_store %arg7[%c0_12, %c0_13], %20 {strides = array<i32>} : memref<256x128xbf16, #tpu.memory_space<vmem>>, vector<256x128xbf16>,
    return
  }
  func.func @transform_0(%arg0: i32, %arg1: i32) -> (i32, i32) {
    %c0_i32 = arith.constant 0 : i32
    %c0_i32_0 = arith.constant 0 : i32
    return %arg0, %c0_i32 : i32, i32
  }
  func.func @transform_1(%arg0: i32, %arg1: i32) -> (i32, i32) {
    %c0_i32 = arith.constant 0 : i32
    %c0_i32_0 = arith.constant 0 : i32
    return %c0_i32, %arg1 : i32, i32
  }
  func.func @transform_2(%arg0: i32, %arg1: i32) -> (i32, i32) {
    %c0_i32 = arith.constant 0 : i32
    %c0_i32_0 = arith.constant 0 : i32
    return %arg0, %c0_i32 : i32, i32
  }
  func.func @transform_3(%arg0: i32, %arg1: i32) -> (i32, i32) {
    %c0_i32 = arith.constant 0 : i32
    %c0_i32_0 = arith.constant 0 : i32
    return %c0_i32, %arg1 : i32, i32
  }
  func.func @transform_4(%arg0: i32, %arg1: i32) -> (i32, i32) {
    %c0_i32 = arith.constant 0 : i32
    %c0_i32_0 = arith.constant 0 : i32
    return %c0_i32, %arg1 : i32, i32
  }
  func.func @transform_5(%arg0: i32, %arg1: i32) -> (i32, i32) {
    %c0_i32 = arith.constant 0 : i32
    return %arg0, %arg1 : i32, i32
  }
}

</mosaic_0001>

<llo_original>
// kernel: _lambda_.5
$region0: #{_lambda_.5}
  #allocation0 [shape = 'u32[]', space=smem, size = 0x4, offset = 0x4, fixed_abs, tag = 'smem constant byte address 0x4 - core index']
  #allocation1 [shape = 'u32[144,128]{1,0:T(1,128)}', space=vmem, size = 0x12000, scoped, tag = 'internal scratch']
  %s0 = inlined_call_operand.vmem [shape: bf16[512,384], index: 0, kind: input, shape index: {}]
  %s1 = inlined_call_operand.vmem [shape: bf16[384,128], index: 1, kind: input, shape index: {}]
  %s2 = inlined_call_operand.vmem [shape: f32[1,128], index: 2, kind: input, shape index: {}]
  %s3 = inlined_call_operand.vmem [shape: bf16[512,128], index: 3, kind: output, shape index: {}]
  %s4 = sld [smem:[#allocation0]]
  $region45: #{_lambda_.5} parent=0
    _
  %s6 = ssub.s32 1, %s4
  %s7 = scalar_select 0, %s6, %s4
  loop: start=0, step=1, limit=4
  $region2: #{_lambda_.5} parent=0 // loop_pre_header
    _
  $region3: #{_lambda_.5} parent=0 // loop_header
    %s9 = sphi 0, %s13
    %p10 = scmp.ge.s32.totalorder %s9, 4
    %s16 = sphi 0, %s28
    %s17 = sphi 0, %s24
    %s18 = sphi 0, %s16
    %s19 = sphi 0, %s17
    %s20 = sphi 0, %s18
    %s21 = sphi 0, %s19
    %s31 = sphi 0, %s33
    %s34 = sphi 0, %s31
    %s35 = sphi 0, %s34
    %s51 = sphi 0, %s35
    %s57 = sphi 0, %s59
    %s60 = sphi 0, %s57
    %s61 = sphi 0, %s60
    %s77 = sphi 0, %s61
    %s83 = sphi 0, %s85
    %s86 = sphi 0, %s83
    %s87 = sphi 0, %s86
    %s103 = sphi 0, %s87
    %s111 = sphi 0, %s113
    %s114 = sphi 0, %s111
    %s115 = sphi 0, %s114
    %s131 = sphi 0, %s115
  $region4: #{_lambda_.5} parent=0 // loop_header_branch
    %12 = sbr.rel (%p10) target = $region8
  $region5: #{_lambda_.5} parent=0 // loop_body
    %s14 = ssub.s32 %s9, 1
    %s15 = ssub.s32 %s9, 2
    %s22 = sadd.s32 1, %s17
    %p23 = scmp.ge.s32.totalorder %s22, 1
    %s24 = scalar_select %p23, 0, %s22
    %s25 = sadd.s32 1, %s16
    %s26 = scalar_select %p23, %s25, %s16
    %p27 = scmp.ge.s32.totalorder %s26, 2
    %s28 = scalar_select %p27, 0, %s26
    %s29 = ssub.s32 %s16, %s28
    %p30 = scmp.eq.s32.totalorder %s29, 0
    %s32 = sadd.s32 %s31, 1
    %s33 = scalar_select %p30, %s31, %s32
    %p36 = pneg %p30
    %p37 = scmp.eq.s32.totalorder %s9, 1
    %p38 = por %p36, %p37
    %p39 = scmp.ne.s32.totalorder %s31, %s34
    %p40 = scmp.eq.s32.totalorder %s9, 0
    %p41 = por %p39, %p40
    %p42 = scmp.ne.s32.totalorder %s31, %s34
    %p43 = scmp.eq.s32.totalorder %s14, 1
    %p44 = por %p42, %p43
    %p45 = scmp.ne.s32.totalorder %s34, %s35
    %p46 = scmp.eq.s32.totalorder %s14, 0
    %p47 = por %p45, %p46
    %p48 = scmp.ne.s32.totalorder %s34, %s35
    %p49 = scmp.eq.s32.totalorder %s15, 1
    %p50 = por %p48, %p49
    %p52 = scmp.ne.s32.totalorder %s35, %s51
    %p53 = scmp.eq.s32.totalorder %s15, 0
    %p54 = por %p52, %p53
    %s55 = ssub.s32 %s17, %s24
    %p56 = scmp.eq.s32.totalorder %s55, 0
    %s58 = sadd.s32 %s57, 1
    %s59 = scalar_select %p56, %s57, %s58
    %p62 = pneg %p56
    %p63 = scmp.eq.s32.totalorder %s9, 1
    %p64 = por %p62, %p63
    %p65 = scmp.ne.s32.totalorder %s57, %s60
    %p66 = scmp.eq.s32.totalorder %s9, 0
    %p67 = por %p65, %p66
    %p68 = scmp.ne.s32.totalorder %s57, %s60
    %p69 = scmp.eq.s32.totalorder %s14, 1
    %p70 = por %p68, %p69
    %p71 = scmp.ne.s32.totalorder %s60, %s61
    %p72 = scmp.eq.s32.totalorder %s14, 0
    %p73 = por %p71, %p72
    %p74 = scmp.ne.s32.totalorder %s60, %s61
    %p75 = scmp.eq.s32.totalorder %s15, 1
    %p76 = por %p74, %p75
    %p78 = scmp.ne.s32.totalorder %s61, %s77
    %p79 = scmp.eq.s32.totalorder %s15, 0
    %p80 = por %p78, %p79
    %s81 = ssub.s32 %s17, %s24
    %p82 = scmp.eq.s32.totalorder %s81, 0
    %s84 = sadd.s32 %s83, 1
    %s85 = scalar_select %p82, %s83, %s84
    %p88 = pneg %p82
    %p89 = scmp.eq.s32.totalorder %s9, 1
    %p90 = por %p88, %p89
    %p91 = scmp.ne.s32.totalorder %s83, %s86
    %p92 = scmp.eq.s32.totalorder %s9, 0
    %p93 = por %p91, %p92
    %p94 = scmp.ne.s32.totalorder %s83, %s86
    %p95 = scmp.eq.s32.totalorder %s14, 1
    %p96 = por %p94, %p95
    %p97 = scmp.ne.s32.totalorder %s86, %s87
    %p98 = scmp.eq.s32.totalorder %s14, 0
    %p99 = por %p97, %p98
    %p100 = scmp.ne.s32.totalorder %s86, %s87
    %p101 = scmp.eq.s32.totalorder %s15, 1
    %p102 = por %p100, %p101
    %p104 = scmp.ne.s32.totalorder %s87, %s103
    %p105 = scmp.eq.s32.totalorder %s15, 0
    %p106 = por %p104, %p105
    %s107 = ssub.s32 %s16, %s28
    %s108 = ssub.s32 %s17, %s24
    %s109 = sor.u32 %s107, %s108
    %p110 = scmp.eq.s32.totalorder %s109, 0
    %s112 = sadd.s32 %s111, 1
    %s113 = scalar_select %p110, %s111, %s112
    %p116 = pneg %p110
    %p117 = scmp.eq.s32.totalorder %s9, 1
    %p118 = por %p116, %p117
    %p119 = scmp.ne.s32.totalorder %s111, %s114
    %p120 = scmp.eq.s32.totalorder %s9, 0
    %p121 = por %p119, %p120
    %p122 = scmp.ne.s32.totalorder %s111, %s114
    %p123 = scmp.eq.s32.totalorder %s14, 1
    %p124 = por %p122, %p123
    %p125 = scmp.ne.s32.totalorder %s114, %s115
    %p126 = scmp.eq.s32.totalorder %s14, 0
    %p127 = por %p125, %p126
    %p128 = scmp.ne.s32.totalorder %s114, %s115
    %p129 = scmp.eq.s32.totalorder %s15, 1
    %p130 = por %p128, %p129
    %p132 = scmp.ne.s32.totalorder %s115, %s131
    %p133 = scmp.eq.s32.totalorder %s15, 0
    %p134 = por %p132, %p133
    %p135 = scmp.le.s32.totalorder 1, %s9
    %p136 = scmp.lt.s32.totalorder %s9, 3
    %p137 = pnand %p135, %p136
    %p138 = pneg %p137
    // Predicated region
    $region9: #{_lambda_.5} parent=5 // pred_check
      _
    $region10: #{_lambda_.5} parent=5 // pred_check_branch
      %140 = sbr.rel (%p137) target = $region12
    $region11: #{_lambda_.5} parent=5 // pred_region
      %s141 = ssub.s32 %s9, 1
      // Predicated region
      $region13: #{_lambda_.5} parent=11 // pred_check
        %p142 = pneg %p73
      $region14: #{_lambda_.5} parent=11 // pred_check_branch
        %144 = sbr.rel (%p142) target = $region16
      $region15: #{_lambda_.5} parent=11 // pred_region
        %p145 = scmp.lt.s32.totalorder %s19, 0
        %s146 = scalar_select %p145, %s19, 0
        %s147 = smul.addr %s146, 4
        %s148 = scalar_lea.vmem %s1, %s147
      $region16: #{_lambda_.5} parent=11 // pred_fallthru
        _
      // Predicated region
      $region17: #{_lambda_.5} parent=11 // pred_check
        %p149 = pneg %p99
      $region18: #{_lambda_.5} parent=11 // pred_check_branch
        %151 = sbr.rel (%p149) target = $region20
      $region19: #{_lambda_.5} parent=11 // pred_region
        %p152 = scmp.lt.s32.totalorder %s19, 0
        %s153 = scalar_select %p152, %s19, 0
        %s154 = scalar_lea.vmem %s2, %s153
      $region20: #{_lambda_.5} parent=11 // pred_fallthru
        _
    $region12: #{_lambda_.5} parent=5 // pred_fallthru
      _
    %p155 = scmp.lt.s32.totalorder %s9, 2
    // Predicated region
    $region21: #{_lambda_.5} parent=5 // pred_check
      %p156 = pneg %p155
    $region22: #{_lambda_.5} parent=5 // pred_check_branch
      %158 = sbr.rel (%p156) target = $region24
    $region23: #{_lambda_.5} parent=5 // pred_region
      // Predicated region
      $region25: #{_lambda_.5} parent=23 // pred_check
        %p159 = pneg %p41
      $region26: #{_lambda_.5} parent=23 // pred_check_branch
        %161 = sbr.rel (%p159) target = $region28
      $region27: #{_lambda_.5} parent=23 // pred_region
        %s162 = smul.u32 32, %s16
        %p163 = scmp.lt.s32.totalorder %s162, 63
        %s164 = scalar_select %p163, %s162, 63
        %s165 = smul.addr %s164, 3
        %s166 = smul.addr %s165, 4
        %s167 = scalar_lea.vmem %s0, %s166
        %s168 = smul.u32 32, %s16
      $region28: #{_lambda_.5} parent=23 // pred_fallthru
        _
    $region24: #{_lambda_.5} parent=5 // pred_fallthru
      _
    %p169 = scmp.le.s32.totalorder 1, %s9
    %p170 = scmp.lt.s32.totalorder %s9, 3
    %p171 = pnand %p169, %p170
    %p172 = pneg %p171
    // Predicated region
    $region29: #{_lambda_.5} parent=5 // pred_check
      _
    $region30: #{_lambda_.5} parent=5 // pred_check_branch
      %174 = sbr.rel (%p171) target = $region32
    $region31: #{_lambda_.5} parent=5 // pred_region
      %s175 = ssub.s32 %s9, 1
      %s176 = smul.u32 32, %s18
      %p177 = scmp.lt.s32.totalorder %s176, 63
      %s178 = scalar_select %p177, %s176, 63
      %s179 = smul.addr %s178, 3
      %s180 = smul.addr %s179, 4
      %s181 = scalar_lea.vmem %s0, %s180
      %p182 = pneg %p47
      %p183 = pneg %p44
      %p184 = scmp.lt.s32.totalorder %s19, 0
      %s185 = scalar_select %p184, %s19, 0
      %s186 = smul.addr %s185, 4
      %s187 = scalar_lea.vmem %s1, %s186
      %p188 = pneg %p73
      %p189 = pneg %p70
      %p190 = scmp.lt.s32.totalorder %s19, 0
      %s191 = scalar_select %p190, %s19, 0
      %s192 = scalar_lea.vmem %s2, %s191
      %p193 = pneg %p99
      %p194 = pneg %p96
      %p195 = pneg %p127
      %p196 = pneg %p124
      %s197 = smul.u32 32, %s18
      %p198 = scmp.lt.s32.totalorder %s197, 63
      %s199 = scalar_select %p198, %s197, 63
      %p200 = scmp.lt.s32.totalorder %s19, 0
      %s201 = scalar_select %p200, %s19, 0
      %s202 = sadd.s32 %s201, %s199
      %s203 = smul.addr %s202, 4
      %s204 = scalar_lea.vmem %s3, %s203
      %s205 = smul.u32 32, %s18
      %p206 = scmp.lt.s32.totalorder %s205, 63
      %s207 = scalar_select %p206, %s205, 63
      %s208 = smul.addr %s207, 3
      %s209 = smul.addr %s208, 4
      %s210 = scalar_lea.vmem %s0, %s209
      %s211 = smul.u32 32, %s18
      %p212 = scmp.lt.s32.totalorder %s19, 0
      %s213 = scalar_select %p212, %s19, 0
      %s214 = smul.addr %s213, 4
      %s215 = scalar_lea.vmem %s1, %s214
      %p216 = scmp.lt.s32.totalorder %s19, 0
      %s217 = scalar_select %p216, %s19, 0
      %s218 = scalar_lea.vmem %s2, %s217
      %s219 = smul.u32 32, %s18
      %p220 = scmp.lt.s32.totalorder %s219, 63
      %s221 = scalar_select %p220, %s219, 63
      %p222 = scmp.lt.s32.totalorder %s19, 0
      %s223 = scalar_select %p222, %s19, 0
      %s224 = sadd.s32 %s223, %s221
      %s225 = smul.addr %s224, 4
      %s226 = scalar_lea.vmem %s3, %s225
      %s227 = smul.u32 32, %s18
      %v229 = vld [vmem:[%s210] sm:$0xff]
      %v230 = vld [vmem:[%s210 + $0x8] sm:$0xf]
      %v231 = vld [vmem:[%s210 + $0xc] sm:$0xff]
      %v232 = vld [vmem:[%s210 + $0x14] sm:$0xf]
      %v233 = vld [vmem:[%s210 + $0x18] sm:$0xff]
      %v234 = vld [vmem:[%s210 + $0x20] sm:$0xf]
      %v235 = vld [vmem:[%s210 + $0x24] sm:$0xff]
      %v236 = vld [vmem:[%s210 + $0x2c] sm:$0xf]
      %v237 = vld [vmem:[%s210 + $0x30] sm:$0xff]
      %v238 = vld [vmem:[%s210 + $0x38] sm:$0xf]
      %v239 = vld [vmem:[%s210 + $0x3c] sm:$0xff]
      %v240 = vld [vmem:[%s210 + $0x44] sm:$0xf]
      %v241 = vld [vmem:[%s210 + $0x48] sm:$0xff]
      %v242 = vld [vmem:[%s210 + $0x50] sm:$0xf]
      %v243 = vld [vmem:[%s210 + $0x54] sm:$0xff]
      %v244 = vld [vmem:[%s210 + $0x5c] sm:$0xf]
      %v245 = vld [vmem:[%s210 + $0x60] sm:$0xff]
      %v246 = vld [vmem:[%s210 + $0x68] sm:$0xf]
      %v247 = vld [vmem:[%s210 + $0x6c] sm:$0xff]
      %v248 = vld [vmem:[%s210 + $0x74] sm:$0xf]
      %v249 = vld [vmem:[%s210 + $0x78] sm:$0xff]
      %v250 = vld [vmem:[%s210 + $0x80] sm:$0xf]
      %v251 = vld [vmem:[%s210 + $0x84] sm:$0xff]
      %v252 = vld [vmem:[%s210 + $0x8c] sm:$0xf]
      %v253 = vld [vmem:[%s210 + $0x90] sm:$0xff]
      %v254 = vld [vmem:[%s210 + $0x98] sm:$0xf]
      %v255 = vld [vmem:[%s210 + $0x9c] sm:$0xff]
      %v256 = vld [vmem:[%s210 + $0xa4] sm:$0xf]
      %v257 = vld [vmem:[%s210 + $0xa8] sm:$0xff]
      %v258 = vld [vmem:[%s210 + $0xb0] sm:$0xf]
      %v259 = vld [vmem:[%s210 + $0xb4] sm:$0xff]
      %v260 = vld [vmem:[%s210 + $0xbc] sm:$0xf]
      %v261 = vld [vmem:[%s210 + $0xc0] sm:$0xff]
      %v262 = vld [vmem:[%s210 + $0xc8] sm:$0xf]
      %v263 = vld [vmem:[%s210 + $0xcc] sm:$0xff]
      %v264 = vld [vmem:[%s210 + $0xd4] sm:$0xf]
      %v265 = vld [vmem:[%s210 + $0xd8] sm:$0xff]
      %v266 = vld [vmem:[%s210 + $0xe0] sm:$0xf]
      %v267 = vld [vmem:[%s210 + $0xe4] sm:$0xff]
      %v268 = vld [vmem:[%s210 + $0xec] sm:$0xf]
      %v269 = vld [vmem:[%s210 + $0xf0] sm:$0xff]
      %v270 = vld [vmem:[%s210 + $0xf8] sm:$0xf]
      %v271 = vld [vmem:[%s210 + $0xfc] sm:$0xff]
      %v272 = vld [vmem:[%s210 + $0x104] sm:$0xf]
      %v273 = vld [vmem:[%s210 + $0x108] sm:$0xff]
      %v274 = vld [vmem:[%s210 + $0x110] sm:$0xf]
      %v275 = vld [vmem:[%s210 + $0x114] sm:$0xff]
      %v276 = vld [vmem:[%s210 + $0x11c] sm:$0xf]
      %v277 = vld [vmem:[%s210 + $0x120] sm:$0xff]
      %v278 = vld [vmem:[%s210 + $0x128] sm:$0xf]
      %v279 = vld [vmem:[%s210 + $0x12c] sm:$0xff]
      %v280 = vld [vmem:[%s210 + $0x134] sm:$0xf]
      %v281 = vld [vmem:[%s210 + $0x138] sm:$0xff]
      %v282 = vld [vmem:[%s210 + $0x140] sm:$0xf]
      %v283 = vld [vmem:[%s210 + $0x144] sm:$0xff]
      %v284 = vld [vmem:[%s210 + $0x14c] sm:$0xf]
      %v285 = vld [vmem:[%s210 + $0x150] sm:$0xff]
      %v286 = vld [vmem:[%s210 + $0x158] sm:$0xf]
      %v287 = vld [vmem:[%s210 + $0x15c] sm:$0xff]
      %v288 = vld [vmem:[%s210 + $0x164] sm:$0xf]
      %v289 = vld [vmem:[%s210 + $0x168] sm:$0xff]
      %v290 = vld [vmem:[%s210 + $0x170] sm:$0xf]
      %v291 = vld [vmem:[%s210 + $0x174] sm:$0xff]
      %v292 = vld [vmem:[%s210 + $0x17c] sm:$0xf]
      %v293 = vld [vmem:[%s215] sm:$0xf]
      %v294 = vld [vmem:[%s215 + $0x4] sm:$0xf]
      %v295 = vld [vmem:[%s215 + $0x8] sm:$0xf]
      %v296 = vld [vmem:[%s215 + $0xc] sm:$0xf]
      %v297 = vld [vmem:[%s215 + $0x10] sm:$0xf]
      %v298 = vld [vmem:[%s215 + $0x14] sm:$0xf]
      %v299 = vld [vmem:[%s215 + $0x18] sm:$0xf]
      %v300 = vld [vmem:[%s215 + $0x1c] sm:$0xf]
      %v301 = vld [vmem:[%s215 + $0x20] sm:$0xf]
      %v302 = vld [vmem:[%s215 + $0x24] sm:$0xf]
      %v303 = vld [vmem:[%s215 + $0x28] sm:$0xf]
      %v304 = vld [vmem:[%s215 + $0x2c] sm:$0xf]
      %v305 = vld [vmem:[%s215 + $0x30] sm:$0xf]
      %v306 = vld [vmem:[%s215 + $0x34] sm:$0xf]
      %v307 = vld [vmem:[%s215 + $0x38] sm:$0xf]
      %v308 = vld [vmem:[%s215 + $0x3c] sm:$0xf]
      %v309 = vld [vmem:[%s215 + $0x40] sm:$0xf]
      %v310 = vld [vmem:[%s215 + $0x44] sm:$0xf]
      %v311 = vld [vmem:[%s215 + $0x48] sm:$0xf]
      %v312 = vld [vmem:[%s215 + $0x4c] sm:$0xf]
      %v313 = vld [vmem:[%s215 + $0x50] sm:$0xf]
      %v314 = vld [vmem:[%s215 + $0x54] sm:$0xf]
      %v315 = vld [vmem:[%s215 + $0x58] sm:$0xf]
      %v316 = vld [vmem:[%s215 + $0x5c] sm:$0xf]
      %v317 = vld [vmem:[%s215 + $0x60] sm:$0xf]
      %v318 = vld [vmem:[%s215 + $0x64] sm:$0xf]
      %v319 = vld [vmem:[%s215 + $0x68] sm:$0xf]
      %v320 = vld [vmem:[%s215 + $0x6c] sm:$0xf]
      %v321 = vld [vmem:[%s215 + $0x70] sm:$0xf]
      %v322 = vld [vmem:[%s215 + $0x74] sm:$0xf]
      %v323 = vld [vmem:[%s215 + $0x78] sm:$0xf]
      %v324 = vld [vmem:[%s215 + $0x7c] sm:$0xf]
      %v325 = vld [vmem:[%s215 + $0x80] sm:$0xf]
      %v326 = vld [vmem:[%s215 + $0x84] sm:$0xf]
      %v327 = vld [vmem:[%s215 + $0x88] sm:$0xf]
      %v328 = vld [vmem:[%s215 + $0x8c] sm:$0xf]
      %v329 = vld [vmem:[%s215 + $0x90] sm:$0xf]
      %v330 = vld [vmem:[%s215 + $0x94] sm:$0xf]
      %v331 = vld [vmem:[%s215 + $0x98] sm:$0xf]
      %v332 = vld [vmem:[%s215 + $0x9c] sm:$0xf]
      %v333 = vld [vmem:[%s215 + $0xa0] sm:$0xf]
      %v334 = vld [vmem:[%s215 + $0xa4] sm:$0xf]
      %v335 = vld [vmem:[%s215 + $0xa8] sm:$0xf]
      %v336 = vld [vmem:[%s215 + $0xac] sm:$0xf]
      %v337 = vld [vmem:[%s215 + $0xb0] sm:$0xf]
      %v338 = vld [vmem:[%s215 + $0xb4] sm:$0xf]
      %v339 = vld [vmem:[%s215 + $0xb8] sm:$0xf]
      %v340 = vld [vmem:[%s215 + $0xbc] sm:$0xf]
      %v341 = vld [vmem:[%s218] sm:$0x1]
      %v343 = vlaneseq
      %v344 = vshrl.u32 %v343, 7
      %v345 = vsub.s32 0, %v344
      %v346 = vrot.slane %v341, %v345
      %v412 = vunpack.c.l.b16 %v229
      %v413 = vunpack.c.h.b16 %v229
      %v414 = vunpack.c.l.b16 %v230
      %v415 = vunpack.c.l.b16 %v231
      %v416 = vunpack.c.h.b16 %v231
      %v417 = vunpack.c.l.b16 %v232
      %v418 = vunpack.c.l.b16 %v233
      %v419 = vunpack.c.h.b16 %v233
      %v420 = vunpack.c.l.b16 %v234
      %v421 = vunpack.c.l.b16 %v235
      %v422 = vunpack.c.h.b16 %v235
      %v423 = vunpack.c.l.b16 %v236
      %v424 = vunpack.c.l.b16 %v237
      %v425 = vunpack.c.h.b16 %v237
      %v426 = vunpack.c.l.b16 %v238
      %v427 = vunpack.c.l.b16 %v239
      %v428 = vunpack.c.h.b16 %v239
      %v429 = vunpack.c.l.b16 %v240
      %v430 = vunpack.c.l.b16 %v241
      %v431 = vunpack.c.h.b16 %v241
      %v432 = vunpack.c.l.b16 %v242
      %v433 = vunpack.c.l.b16 %v243
      %v434 = vunpack.c.h.b16 %v243
      %v435 = vunpack.c.l.b16 %v244
      %v436 = vunpack.c.l.b16 %v245
      %v437 = vunpack.c.h.b16 %v245
      %v438 = vunpack.c.l.b16 %v246
      %v439 = vunpack.c.l.b16 %v247
      %v440 = vunpack.c.h.b16 %v247
      %v441 = vunpack.c.l.b16 %v248
      %v442 = vunpack.c.l.b16 %v249
      %v443 = vunpack.c.h.b16 %v249
      %v444 = vunpack.c.l.b16 %v250
      %v445 = vunpack.c.l.b16 %v251
      %v446 = vunpack.c.h.b16 %v251
      %v447 = vunpack.c.l.b16 %v252
      %v448 = vunpack.c.l.b16 %v253
      %v449 = vunpack.c.h.b16 %v253
      %v450 = vunpack.c.l.b16 %v254
      %v451 = vunpack.c.l.b16 %v255
      %v452 = vunpack.c.h.b16 %v255
      %v453 = vunpack.c.l.b16 %v256
      %v454 = vunpack.c.l.b16 %v257
      %v455 = vunpack.c.h.b16 %v257
      %v456 = vunpack.c.l.b16 %v258
      %v457 = vunpack.c.l.b16 %v259
      %v458 = vunpack.c.h.b16 %v259
      %v459 = vunpack.c.l.b16 %v260
      %v460 = vunpack.c.l.b16 %v261
      %v461 = vunpack.c.h.b16 %v261
      %v462 = vunpack.c.l.b16 %v262
      %v463 = vunpack.c.l.b16 %v263
      %v464 = vunpack.c.h.b16 %v263
      %v465 = vunpack.c.l.b16 %v264
      %v466 = vunpack.c.l.b16 %v265
      %v467 = vunpack.c.h.b16 %v265
      %v468 = vunpack.c.l.b16 %v266
      %v469 = vunpack.c.l.b16 %v267
      %v470 = vunpack.c.h.b16 %v267
      %v471 = vunpack.c.l.b16 %v268
      %v472 = vunpack.c.l.b16 %v269
      %v473 = vunpack.c.h.b16 %v269
      %v474 = vunpack.c.l.b16 %v270
      %v475 = vunpack.c.l.b16 %v271
      %v476 = vunpack.c.h.b16 %v271
      %v477 = vunpack.c.l.b16 %v272
      %v478 = vunpack.c.l.b16 %v273
      %v479 = vunpack.c.h.b16 %v273
      %v480 = vunpack.c.l.b16 %v274
      %v481 = vunpack.c.l.b16 %v275
      %v482 = vunpack.c.h.b16 %v275
      %v483 = vunpack.c.l.b16 %v276
      %v484 = vunpack.c.l.b16 %v277
      %v485 = vunpack.c.h.b16 %v277
      %v486 = vunpack.c.l.b16 %v278
      %v487 = vunpack.c.l.b16 %v279
      %v488 = vunpack.c.h.b16 %v279
      %v489 = vunpack.c.l.b16 %v280
      %v490 = vunpack.c.l.b16 %v281
      %v491 = vunpack.c.h.b16 %v281
      %v492 = vunpack.c.l.b16 %v282
      %v493 = vunpack.c.l.b16 %v283
      %v494 = vunpack.c.h.b16 %v283
      %v495 = vunpack.c.l.b16 %v284
      %v496 = vunpack.c.l.b16 %v285
      %v497 = vunpack.c.h.b16 %v285
      %v498 = vunpack.c.l.b16 %v286
      %v499 = vunpack.c.l.b16 %v287
      %v500 = vunpack.c.h.b16 %v287
      %v501 = vunpack.c.l.b16 %v288
      %v502 = vunpack.c.l.b16 %v289
      %v503 = vunpack.c.h.b16 %v289
      %v504 = vunpack.c.l.b16 %v290
      %v505 = vunpack.c.l.b16 %v291
      %v506 = vunpack.c.h.b16 %v291
      %v507 = vunpack.c.l.b16 %v292
      %v508 = vpack.c.b16 %v415, %v412
      %v509 = vpack.c.b16 %v416, %v413
      %v510 = vpack.c.b16 %v417, %v414
      %v511 = vpack.c.b16 %v421, %v418
      %v512 = vpack.c.b16 %v422, %v419
      %v513 = vpack.c.b16 %v423, %v420
      %v514 = vpack.c.b16 %v427, %v424
      %v515 = vpack.c.b16 %v428, %v425
      %v516 = vpack.c.b16 %v429, %v426
      %v517 = vpack.c.b16 %v433, %v430
      %v518 = vpack.c.b16 %v434, %v431
      %v519 = vpack.c.b16 %v435, %v432
      %v520 = vpack.c.b16 %v439, %v436
      %v521 = vpack.c.b16 %v440, %v437
      %v522 = vpack.c.b16 %v441, %v438
      %v523 = vpack.c.b16 %v445, %v442
      %v524 = vpack.c.b16 %v446, %v443
      %v525 = vpack.c.b16 %v447, %v444
      %v526 = vpack.c.b16 %v451, %v448
      %v527 = vpack.c.b16 %v452, %v449
      %v528 = vpack.c.b16 %v453, %v450
      %v529 = vpack.c.b16 %v457, %v454
      %v530 = vpack.c.b16 %v458, %v455
      %v531 = vpack.c.b16 %v459, %v456
      %v532 = vpack.c.b16 %v463, %v460
      %v533 = vpack.c.b16 %v464, %v461
      %v534 = vpack.c.b16 %v465, %v462
      %v535 = vpack.c.b16 %v469, %v466
      %v536 = vpack.c.b16 %v470, %v467
      %v537 = vpack.c.b16 %v471, %v468
      %v538 = vpack.c.b16 %v475, %v472
      %v539 = vpack.c.b16 %v476, %v473
      %v540 = vpack.c.b16 %v477, %v474
      %v541 = vpack.c.b16 %v481, %v478
      %v542 = vpack.c.b16 %v482, %v479
      %v543 = vpack.c.b16 %v483, %v480
      %v544 = vpack.c.b16 %v487, %v484
      %v545 = vpack.c.b16 %v488, %v485
      %v546 = vpack.c.b16 %v489, %v486
      %v547 = vpack.c.b16 %v493, %v490
      %v548 = vpack.c.b16 %v494, %v491
      %v549 = vpack.c.b16 %v495, %v492
      %v550 = vpack.c.b16 %v499, %v496
      %v551 = vpack.c.b16 %v500, %v497
      %v552 = vpack.c.b16 %v501, %v498
      %v553 = vpack.c.b16 %v505, %v502
      %v554 = vpack.c.b16 %v506, %v503
      %v555 = vpack.c.b16 %v507, %v504
      %v652 = vunpack.c.l.b16 %v293
      %v653 = vunpack.c.l.b16 %v294
      %v654 = vunpack.c.l.b16 %v295
      %v655 = vunpack.c.l.b16 %v296
      %v656 = vunpack.c.l.b16 %v297
      %v657 = vunpack.c.l.b16 %v298
      %v658 = vunpack.c.l.b16 %v299
      %v659 = vunpack.c.l.b16 %v300
      %v660 = vunpack.c.l.b16 %v301
      %v661 = vunpack.c.l.b16 %v302
      %v662 = vunpack.c.l.b16 %v303
      %v663 = vunpack.c.l.b16 %v304
      %v664 = vunpack.c.l.b16 %v305
      %v665 = vunpack.c.l.b16 %v306
      %v666 = vunpack.c.l.b16 %v307
      %v667 = vunpack.c.l.b16 %v308
      %v668 = vunpack.c.l.b16 %v309
      %v669 = vunpack.c.l.b16 %v310
      %v670 = vunpack.c.l.b16 %v311
      %v671 = vunpack.c.l.b16 %v312
      %v672 = vunpack.c.l.b16 %v313
      %v673 = vunpack.c.l.b16 %v314
      %v674 = vunpack.c.l.b16 %v315
      %v675 = vunpack.c.l.b16 %v316
      %v676 = vunpack.c.l.b16 %v317
      %v677 = vunpack.c.l.b16 %v318
      %v678 = vunpack.c.l.b16 %v319
      %v679 = vunpack.c.l.b16 %v320
      %v680 = vunpack.c.l.b16 %v321
      %v681 = vunpack.c.l.b16 %v322
      %v682 = vunpack.c.l.b16 %v323
      %v683 = vunpack.c.l.b16 %v324
      %v684 = vunpack.c.l.b16 %v325
      %v685 = vunpack.c.l.b16 %v326
      %v686 = vunpack.c.l.b16 %v327
      %v687 = vunpack.c.l.b16 %v328
      %v688 = vunpack.c.l.b16 %v329
      %v689 = vunpack.c.l.b16 %v330
      %v690 = vunpack.c.l.b16 %v331
      %v691 = vunpack.c.l.b16 %v332
      %v692 = vunpack.c.l.b16 %v333
      %v693 = vunpack.c.l.b16 %v334
      %v694 = vunpack.c.l.b16 %v335
      %v695 = vunpack.c.l.b16 %v336
      %v696 = vunpack.c.l.b16 %v337
      %v697 = vunpack.c.l.b16 %v338
      %v698 = vunpack.c.l.b16 %v339
      %v699 = vunpack.c.l.b16 %v340
      %v700 = vpack.c.b16 %v653, %v652
      %v701 = vpack.c.b16 %v655, %v654
      %v702 = vpack.c.b16 %v657, %v656
      %v703 = vpack.c.b16 %v659, %v658
      %v704 = vpack.c.b16 %v661, %v660
      %v705 = vpack.c.b16 %v663, %v662
      %v706 = vpack.c.b16 %v665, %v664
      %v707 = vpack.c.b16 %v667, %v666
      %v708 = vpack.c.b16 %v669, %v668
      %v709 = vpack.c.b16 %v671, %v670
      %v710 = vpack.c.b16 %v673, %v672
      %v711 = vpack.c.b16 %v675, %v674
      %v712 = vpack.c.b16 %v677, %v676
      %v713 = vpack.c.b16 %v679, %v678
      %v714 = vpack.c.b16 %v681, %v680
      %v715 = vpack.c.b16 %v683, %v682
      %v716 = vpack.c.b16 %v685, %v684
      %v717 = vpack.c.b16 %v687, %v686
      %v718 = vpack.c.b16 %v689, %v688
      %v719 = vpack.c.b16 %v691, %v690
      %v720 = vpack.c.b16 %v693, %v692
      %v721 = vpack.c.b16 %v695, %v694
      %v722 = vpack.c.b16 %v697, %v696
      %v723 = vpack.c.b16 %v699, %v698
      %748 = vmatprep.subr.bf16.mxu0 0
      %749 = vmatpush1.bf16.msra.mxu0 %v707
      %750 = vmatprep.subr.bf16.mxu0 0
      %751 = vmatpush1.bf16.msra.mxu0 %v706
      %752 = vmatprep.subr.bf16.mxu0 0
      %753 = vmatpush1.bf16.msra.mxu0 %v705
      %754 = vmatprep.subr.bf16.mxu0 0
      %755 = vmatpush1.bf16.msra.mxu0 %v704
      %756 = vmatprep.subr.bf16.mxu0 0
      %757 = vmatpush1.bf16.msra.mxu0 %v703
      %758 = vmatprep.subr.bf16.mxu0 0
      %759 = vmatpush1.bf16.msra.mxu0 %v702
      %760 = vmatprep.subr.bf16.mxu0 0
      %761 = vmatpush1.bf16.msra.mxu0 %v701
      %762 = vmatprep.subr.bf16.mxu0 0
      %763 = vmatpush1.bf16.msra.mxu0 %v700
      %764 = vmatprep.subr.bf16.mxu0 0
      %765 = vmatpush2.bf16.msra.mxu0 %v715
      %766 = vmatprep.subr.bf16.mxu0 0
      %767 = vmatpush2.bf16.msra.mxu0 %v714
      %768 = vmatprep.subr.bf16.mxu0 0
      %769 = vmatpush2.bf16.msra.mxu0 %v713
      %770 = vmatprep.subr.bf16.mxu0 0
      %771 = vmatpush2.bf16.msra.mxu0 %v712
      %772 = vmatprep.subr.bf16.mxu0 0
      %773 = vmatpush2.bf16.msra.mxu0 %v711
      %774 = vmatprep.subr.bf16.mxu0 0
      %775 = vmatpush2.bf16.msra.mxu0 %v710
      %776 = vmatprep.subr.bf16.mxu0 0
      %777 = vmatpush2.bf16.msra.mxu0 %v709
      %778 = vmatprep.subr.bf16.mxu0 0
      %779 = vmatpush2.bf16.msra.mxu0 %v708
      %780 = vmatprep.mubr.bf16.mxu0 %v509
      %781 = vmatmul.mubr.bf16.gmra.mxu0 %v508
      %v782 = vpop.f32.mrf.mxu0
      %v783 = vadd.f32 %v346, %v782
      %v784 = vpop.f32.mrf.mxu0
      %v785 = vpop.f32.mrf.mxu0
      %v786 = vadd.f32 %v346, %v785
      %v787 = vpop.f32.mrf.mxu0
      %788 = vmatprep.mubr.bf16.mxu0 %v512
      %789 = vmatmul.mubr.bf16.gmra.mxu0 %v511
      %v790 = vpop.f32.mrf.mxu0
      %v791 = vadd.f32 %v346, %v790
      %v792 = vpop.f32.mrf.mxu0
      %v793 = vpop.f32.mrf.mxu0
      %v794 = vadd.f32 %v346, %v793
      %v795 = vpop.f32.mrf.mxu0
      %796 = vmatprep.mubr.bf16.mxu0 %v515
      %797 = vmatmul.mubr.bf16.gmra.mxu0 %v514
      %v798 = vpop.f32.mrf.mxu0
      %v799 = vadd.f32 %v346, %v798
      %v800 = vpop.f32.mrf.mxu0
      %v801 = vpop.f32.mrf.mxu0
      %v802 = vadd.f32 %v346, %v801
      %v803 = vpop.f32.mrf.mxu0
      %804 = vmatprep.mubr.bf16.mxu0 %v518
      %805 = vmatmul.mubr.bf16.gmra.mxu0 %v517
      %v806 = vpop.f32.mrf.mxu0
      %v807 = vadd.f32 %v346, %v806
      %v808 = vpop.f32.mrf.mxu0
      %v809 = vpop.f32.mrf.mxu0
      %v810 = vadd.f32 %v346, %v809
      %v811 = vpop.f32.mrf.mxu0
      %812 = vmatprep.mubr.bf16.mxu0 %v521
      %813 = vmatmul.mubr.bf16.gmra.mxu0 %v520
      %v814 = vpop.f32.mrf.mxu0
      %v815 = vadd.f32 %v346, %v814
      %v816 = vpop.f32.mrf.mxu0
      %v817 = vpop.f32.mrf.mxu0
      %v818 = vadd.f32 %v346, %v817
      %v819 = vpop.f32.mrf.mxu0
      %820 = vmatprep.mubr.bf16.mxu0 %v524
      %821 = vmatmul.mubr.bf16.gmra.mxu0 %v523
      %v822 = vpop.f32.mrf.mxu0
      %v823 = vadd.f32 %v346, %v822
      %v824 = vpop.f32.mrf.mxu0
      %v825 = vpop.f32.mrf.mxu0
      %v826 = vadd.f32 %v346, %v825
      %v827 = vpop.f32.mrf.mxu0
      %828 = vmatprep.mubr.bf16.mxu0 %v527
      %829 = vmatmul.mubr.bf16.gmra.mxu0 %v526
      %v830 = vpop.f32.mrf.mxu0
      %v831 = vadd.f32 %v346, %v830
      %v832 = vpop.f32.mrf.mxu0
      %v833 = vpop.f32.mrf.mxu0
      %v834 = vadd.f32 %v346, %v833
      %v835 = vpop.f32.mrf.mxu0
      %836 = vmatprep.mubr.bf16.mxu0 %v530
      %837 = vmatmul.mubr.bf16.gmra.mxu0 %v529
      %v838 = vpop.f32.mrf.mxu0
      %v839 = vadd.f32 %v346, %v838
      %v840 = vpop.f32.mrf.mxu0
      %v841 = vpop.f32.mrf.mxu0
      %v842 = vadd.f32 %v346, %v841
      %v843 = vpop.f32.mrf.mxu0
      %844 = vmatprep.mubr.bf16.mxu0 %v533
      %845 = vmatmul.mubr.bf16.gmra.mxu0 %v532
      %v846 = vpop.f32.mrf.mxu0
      %v847 = vadd.f32 %v346, %v846
      %v848 = vpop.f32.mrf.mxu0
      %v849 = vpop.f32.mrf.mxu0
      %v850 = vadd.f32 %v346, %v849
      %v851 = vpop.f32.mrf.mxu0
      %852 = vmatprep.mubr.bf16.mxu0 %v536
      %853 = vmatmul.mubr.bf16.gmra.mxu0 %v535
      %v854 = vpop.f32.mrf.mxu0
      %v855 = vadd.f32 %v346, %v854
      %v856 = vpop.f32.mrf.mxu0
      %v857 = vpop.f32.mrf.mxu0
      %v858 = vadd.f32 %v346, %v857
      %v859 = vpop.f32.mrf.mxu0
      %860 = vmatprep.mubr.bf16.mxu0 %v539
      %861 = vmatmul.mubr.bf16.gmra.mxu0 %v538
      %v862 = vpop.f32.mrf.mxu0
      %v863 = vadd.f32 %v346, %v862
      %v864 = vpop.f32.mrf.mxu0
      %v865 = vpop.f32.mrf.mxu0
      %v866 = vadd.f32 %v346, %v865
      %v867 = vpop.f32.mrf.mxu0
      %868 = vmatprep.mubr.bf16.mxu0 %v542
      %869 = vmatmul.mubr.bf16.gmra.mxu0 %v541
      %v870 = vpop.f32.mrf.mxu0
      %v871 = vadd.f32 %v346, %v870
      %v872 = vpop.f32.mrf.mxu0
      %v873 = vpop.f32.mrf.mxu0
      %v874 = vadd.f32 %v346, %v873
      %v875 = vpop.f32.mrf.mxu0
      %876 = vmatprep.mubr.bf16.mxu0 %v545
      %877 = vmatmul.mubr.bf16.gmra.mxu0 %v544
      %v878 = vpop.f32.mrf.mxu0
      %v879 = vadd.f32 %v346, %v878
      %v880 = vpop.f32.mrf.mxu0
      %v881 = vpop.f32.mrf.mxu0
      %v882 = vadd.f32 %v346, %v881
      %v883 = vpop.f32.mrf.mxu0
      %884 = vmatprep.mubr.bf16.mxu0 %v548
      %885 = vmatmul.mubr.bf16.gmra.mxu0 %v547
      %v886 = vpop.f32.mrf.mxu0
      %v887 = vadd.f32 %v346, %v886
      %v888 = vpop.f32.mrf.mxu0
      %v889 = vpop.f32.mrf.mxu0
      %v890 = vadd.f32 %v346, %v889
      %v891 = vpop.f32.mrf.mxu0
      %892 = vmatprep.mubr.bf16.mxu0 %v551
      %893 = vmatmul.mubr.bf16.gmra.mxu0 %v550
      %v894 = vpop.f32.mrf.mxu0
      %v895 = vadd.f32 %v346, %v894
      %v896 = vpop.f32.mrf.mxu0
      %v897 = vpop.f32.mrf.mxu0
      %v898 = vadd.f32 %v346, %v897
      %v899 = vpop.f32.mrf.mxu0
      %900 = vmatprep.mubr.bf16.mxu0 %v554
      %901 = vmatmul.mubr.bf16.gmra.mxu0 %v553
      %v902 = vpop.f32.mrf.mxu0
      %v903 = vadd.f32 %v346, %v902
      %v904 = vpop.f32.mrf.mxu0
      %v905 = vpop.f32.mrf.mxu0
      %v906 = vadd.f32 %v346, %v905
      %v907 = vpop.f32.mrf.mxu0
      %908 = vdwg.mxu0
      %909 = vmatprep.subr.bf16.mxu0 0
      %910 = vmatpush1.bf16.msra.mxu0 %v723
      %911 = vmatprep.subr.bf16.mxu0 0
      %912 = vmatpush1.bf16.msra.mxu0 %v722
      %913 = vmatprep.subr.bf16.mxu0 0
      %914 = vmatpush1.bf16.msra.mxu0 %v721
      %915 = vmatprep.subr.bf16.mxu0 0
      %916 = vmatpush1.bf16.msra.mxu0 %v720
      %917 = vmatprep.subr.bf16.mxu0 0
      %918 = vmatpush1.bf16.msra.mxu0 %v719
      %919 = vmatprep.subr.bf16.mxu0 0
      %920 = vmatpush1.bf16.msra.mxu0 %v718
      %921 = vmatprep.subr.bf16.mxu0 0
      %922 = vmatpush1.bf16.msra.mxu0 %v717
      %923 = vmatprep.subr.bf16.mxu0 0
      %924 = vmatpush1.bf16.msra.mxu0 %v716
      %925 = vmatprep.subr.bf16.mxu0 0
      %926 = vmatpush2.bf16.msra.mxu0 0
      %927 = vmatprep.subr.bf16.mxu0 0
      %928 = vmatpush2.bf16.msra.mxu0 0
      %929 = vmatprep.subr.bf16.mxu0 0
      %930 = vmatpush2.bf16.msra.mxu0 0
      %931 = vmatprep.subr.bf16.mxu0 0
      %932 = vmatpush2.bf16.msra.mxu0 0
      %933 = vmatprep.subr.bf16.mxu0 0
      %934 = vmatpush2.bf16.msra.mxu0 0
      %935 = vmatprep.subr.bf16.mxu0 0
      %936 = vmatpush2.bf16.msra.mxu0 0
      %937 = vmatprep.subr.bf16.mxu0 0
      %938 = vmatpush2.bf16.msra.mxu0 0
      %939 = vmatprep.subr.bf16.mxu0 0
      %940 = vmatpush2.bf16.msra.mxu0 0
      %941 = vmatprep.mubr.bf16.mxu0 0
      %942 = vmatmul.mubr.bf16.gmra.mxu0 %v510
      %v943 = vpop.f32.mrf.mxu0
      %v944 = vadd.f32 %v783, %v943
      %v945 = vpop.f32.mrf.mxu0
      %v946 = vpop.f32.mrf.mxu0
      %v947 = vadd.f32 %v786, %v946
      %v948 = vpop.f32.mrf.mxu0
      %949 = vmatprep.mubr.bf16.mxu0 0
      %950 = vmatmul.mubr.bf16.gmra.mxu0 %v513
      %v951 = vpop.f32.mrf.mxu0
      %v952 = vadd.f32 %v791, %v951
      %v953 = vpop.f32.mrf.mxu0
      %v954 = vpop.f32.mrf.mxu0
      %v955 = vadd.f32 %v794, %v954
      %v956 = vpop.f32.mrf.mxu0
      %957 = vmatprep.mubr.bf16.mxu0 0
      %958 = vmatmul.mubr.bf16.gmra.mxu0 %v516
      %v959 = vpop.f32.mrf.mxu0
      %v960 = vadd.f32 %v799, %v959
      %v961 = vpop.f32.mrf.mxu0
      %v962 = vpop.f32.mrf.mxu0
      %v963 = vadd.f32 %v802, %v962
      %v964 = vpop.f32.mrf.mxu0
      %965 = vmatprep.mubr.bf16.mxu0 0
      %966 = vmatmul.mubr.bf16.gmra.mxu0 %v519
      %v967 = vpop.f32.mrf.mxu0
      %v968 = vadd.f32 %v807, %v967
      %v969 = vpop.f32.mrf.mxu0
      %v970 = vpop.f32.mrf.mxu0
      %v971 = vadd.f32 %v810, %v970
      %v972 = vpop.f32.mrf.mxu0
      %973 = vmatprep.mubr.bf16.mxu0 0
      %974 = vmatmul.mubr.bf16.gmra.mxu0 %v522
      %v975 = vpop.f32.mrf.mxu0
      %v976 = vadd.f32 %v815, %v975
      %v977 = vpop.f32.mrf.mxu0
      %v978 = vpop.f32.mrf.mxu0
      %v979 = vadd.f32 %v818, %v978
      %v980 = vpop.f32.mrf.mxu0
      %981 = vmatprep.mubr.bf16.mxu0 0
      %982 = vmatmul.mubr.bf16.gmra.mxu0 %v525
      %v983 = vpop.f32.mrf.mxu0
      %v984 = vadd.f32 %v823, %v983
      %v985 = vpop.f32.mrf.mxu0
      %v986 = vpop.f32.mrf.mxu0
      %v987 = vadd.f32 %v826, %v986
      %v988 = vpop.f32.mrf.mxu0
      %989 = vmatprep.mubr.bf16.mxu0 0
      %990 = vmatmul.mubr.bf16.gmra.mxu0 %v528
      %v991 = vpop.f32.mrf.mxu0
      %v992 = vadd.f32 %v831, %v991
      %v993 = vpop.f32.mrf.mxu0
      %v994 = vpop.f32.mrf.mxu0
      %v995 = vadd.f32 %v834, %v994
      %v996 = vpop.f32.mrf.mxu0
      %997 = vmatprep.mubr.bf16.mxu0 0
      %998 = vmatmul.mubr.bf16.gmra.mxu0 %v531
      %v999 = vpop.f32.mrf.mxu0
      %v1000 = vadd.f32 %v839, %v999
      %v1001 = vpop.f32.mrf.mxu0
      %v1002 = vpop.f32.mrf.mxu0
      %v1003 = vadd.f32 %v842, %v1002
      %v1004 = vpop.f32.mrf.mxu0
      %1005 = vmatprep.mubr.bf16.mxu0 0
      %1006 = vmatmul.mubr.bf16.gmra.mxu0 %v534
      %v1007 = vpop.f32.mrf.mxu0
      %v1008 = vadd.f32 %v847, %v1007
      %v1009 = vpop.f32.mrf.mxu0
      %v1010 = vpop.f32.mrf.mxu0
      %v1011 = vadd.f32 %v850, %v1010
      %v1012 = vpop.f32.mrf.mxu0
      %1013 = vmatprep.mubr.bf16.mxu0 0
      %1014 = vmatmul.mubr.bf16.gmra.mxu0 %v537
      %v1015 = vpop.f32.mrf.mxu0
      %v1016 = vadd.f32 %v855, %v1015
      %v1017 = vpop.f32.mrf.mxu0
      %v1018 = vpop.f32.mrf.mxu0
      %v1019 = vadd.f32 %v858, %v1018
      %v1020 = vpop.f32.mrf.mxu0
      %1021 = vmatprep.mubr.bf16.mxu0 0
      %1022 = vmatmul.mubr.bf16.gmra.mxu0 %v540
      %v1023 = vpop.f32.mrf.mxu0
      %v1024 = vadd.f32 %v863, %v1023
      %v1025 = vpop.f32.mrf.mxu0
      %v1026 = vpop.f32.mrf.mxu0
      %v1027 = vadd.f32 %v866, %v1026
      %v1028 = vpop.f32.mrf.mxu0
      %1029 = vmatprep.mubr.bf16.mxu0 0
      %1030 = vmatmul.mubr.bf16.gmra.mxu0 %v543
      %v1031 = vpop.f32.mrf.mxu0
      %v1032 = vadd.f32 %v871, %v1031
      %v1033 = vpop.f32.mrf.mxu0
      %v1034 = vpop.f32.mrf.mxu0
      %v1035 = vadd.f32 %v874, %v1034
      %v1036 = vpop.f32.mrf.mxu0
      %1037 = vmatprep.mubr.bf16.mxu0 0
      %1038 = vmatmul.mubr.bf16.gmra.mxu0 %v546
      %v1039 = vpop.f32.mrf.mxu0
      %v1040 = vadd.f32 %v879, %v1039
      %v1041 = vpop.f32.mrf.mxu0
      %v1042 = vpop.f32.mrf.mxu0
      %v1043 = vadd.f32 %v882, %v1042
      %v1044 = vpop.f32.mrf.mxu0
      %1045 = vmatprep.mubr.bf16.mxu0 0
      %1046 = vmatmul.mubr.bf16.gmra.mxu0 %v549
      %v1047 = vpop.f32.mrf.mxu0
      %v1048 = vadd.f32 %v887, %v1047
      %v1049 = vpop.f32.mrf.mxu0
      %v1050 = vpop.f32.mrf.mxu0
      %v1051 = vadd.f32 %v890, %v1050
      %v1052 = vpop.f32.mrf.mxu0
      %1053 = vmatprep.mubr.bf16.mxu0 0
      %1054 = vmatmul.mubr.bf16.gmra.mxu0 %v552
      %v1055 = vpop.f32.mrf.mxu0
      %v1056 = vadd.f32 %v895, %v1055
      %v1057 = vpop.f32.mrf.mxu0
      %v1058 = vpop.f32.mrf.mxu0
      %v1059 = vadd.f32 %v898, %v1058
      %v1060 = vpop.f32.mrf.mxu0
      %1061 = vmatprep.mubr.bf16.mxu0 0
      %1062 = vmatmul.mubr.bf16.gmra.mxu0 %v555
      %v1063 = vpop.f32.mrf.mxu0
      %v1064 = vadd.f32 %v903, %v1063
      %v1065 = vpop.f32.mrf.mxu0
      %v1066 = vpop.f32.mrf.mxu0
      %v1067 = vadd.f32 %v906, %v1066
      %v1068 = vpop.f32.mrf.mxu0
      %1069 = vdwg.mxu0
      %v1070 = vmax.f32 %v944, 0.0
      %v1071 = vmax.f32 %v947, 0.0
      %v1072 = vmax.f32 %v952, 0.0
      %v1073 = vmax.f32 %v955, 0.0
      %v1074 = vmax.f32 %v960, 0.0
      %v1075 = vmax.f32 %v963, 0.0
      %v1076 = vmax.f32 %v968, 0.0
      %v1077 = vmax.f32 %v971, 0.0
      %v1078 = vmax.f32 %v976, 0.0
      %v1079 = vmax.f32 %v979, 0.0
      %v1080 = vmax.f32 %v984, 0.0
      %v1081 = vmax.f32 %v987, 0.0
      %v1082 = vmax.f32 %v992, 0.0
      %v1083 = vmax.f32 %v995, 0.0
      %v1084 = vmax.f32 %v1000, 0.0
      %v1085 = vmax.f32 %v1003, 0.0
      %v1086 = vmax.f32 %v1008, 0.0
      %v1087 = vmax.f32 %v1011, 0.0
      %v1088 = vmax.f32 %v1016, 0.0
      %v1089 = vmax.f32 %v1019, 0.0
      %v1090 = vmax.f32 %v1024, 0.0
      %v1091 = vmax.f32 %v1027, 0.0
      %v1092 = vmax.f32 %v1032, 0.0
      %v1093 = vmax.f32 %v1035, 0.0
      %v1094 = vmax.f32 %v1040, 0.0
      %v1095 = vmax.f32 %v1043, 0.0
      %v1096 = vmax.f32 %v1048, 0.0
      %v1097 = vmax.f32 %v1051, 0.0
      %v1098 = vmax.f32 %v1056, 0.0
      %v1099 = vmax.f32 %v1059, 0.0
      %v1100 = vmax.f32 %v1064, 0.0
      %v1101 = vmax.f32 %v1067, 0.0
      %v1102 = vand.u32 2147483647, %v944
      %v1103 = vand.u32 2147483647, %v947
      %v1104 = vand.u32 2147483647, %v952
      %v1105 = vand.u32 2147483647, %v955
      %v1106 = vand.u32 2147483647, %v960
      %v1107 = vand.u32 2147483647, %v963
      %v1108 = vand.u32 2147483647, %v968
      %v1109 = vand.u32 2147483647, %v971
      %v1110 = vand.u32 2147483647, %v976
      %v1111 = vand.u32 2147483647, %v979
      %v1112 = vand.u32 2147483647, %v984
      %v1113 = vand.u32 2147483647, %v987
      %v1114 = vand.u32 2147483647, %v992
      %v1115 = vand.u32 2147483647, %v995
      %v1116 = vand.u32 2147483647, %v1000
      %v1117 = vand.u32 2147483647, %v1003
      %v1118 = vand.u32 2147483647, %v1008
      %v1119 = vand.u32 2147483647, %v1011
      %v1120 = vand.u32 2147483647, %v1016
      %v1121 = vand.u32 2147483647, %v1019
      %v1122 = vand.u32 2147483647, %v1024
      %v1123 = vand.u32 2147483647, %v1027
      %v1124 = vand.u32 2147483647, %v1032
      %v1125 = vand.u32 2147483647, %v1035
      %v1126 = vand.u32 2147483647, %v1040
      %v1127 = vand.u32 2147483647, %v1043
      %v1128 = vand.u32 2147483647, %v1048
      %v1129 = vand.u32 2147483647, %v1051
      %v1130 = vand.u32 2147483647, %v1056
      %v1131 = vand.u32 2147483647, %v1059
      %v1132 = vand.u32 2147483647, %v1064
      %v1133 = vand.u32 2147483647, %v1067
      %v1134 = vsub.f32 0.0, %v1102
      %v1135 = vsub.f32 0.0, %v1103
      %v1136 = vsub.f32 0.0, %v1104
      %v1137 = vsub.f32 0.0, %v1105
      %v1138 = vsub.f32 0.0, %v1106
      %v1139 = vsub.f32 0.0, %v1107
      %v1140 = vsub.f32 0.0, %v1108
      %v1141 = vsub.f32 0.0, %v1109
      %v1142 = vsub.f32 0.0, %v1110
      %v1143 = vsub.f32 0.0, %v1111
      %v1144 = vsub.f32 0.0, %v1112
      %v1145 = vsub.f32 0.0, %v1113
      %v1146 = vsub.f32 0.0, %v1114
      %v1147 = vsub.f32 0.0, %v1115
      %v1148 = vsub.f32 0.0, %v1116
      %v1149 = vsub.f32 0.0, %v1117
      %v1150 = vsub.f32 0.0, %v1118
      %v1151 = vsub.f32 0.0, %v1119
      %v1152 = vsub.f32 0.0, %v1120
      %v1153 = vsub.f32 0.0, %v1121
      %v1154 = vsub.f32 0.0, %v1122
      %v1155 = vsub.f32 0.0, %v1123
      %v1156 = vsub.f32 0.0, %v1124
      %v1157 = vsub.f32 0.0, %v1125
      %v1158 = vsub.f32 0.0, %v1126
      %v1159 = vsub.f32 0.0, %v1127
      %v1160 = vsub.f32 0.0, %v1128
      %v1161 = vsub.f32 0.0, %v1129
      %v1162 = vsub.f32 0.0, %v1130
      %v1163 = vsub.f32 0.0, %v1131
      %v1164 = vsub.f32 0.0, %v1132
      %v1165 = vsub.f32 0.0, %v1133
      %v1166 = vmul.f32 %v1134, 1.442695
      %v1167 = vpow.pop %v1166
      %v1168 = vmul.f32 %v1135, 1.442695
      %v1169 = vpow.pop %v1168
      %v1170 = vmul.f32 %v1136, 1.442695
      %v1171 = vpow.pop %v1170
      %v1172 = vmul.f32 %v1137, 1.442695
      %v1173 = vpow.pop %v1172
      %v1174 = vmul.f32 %v1138, 1.442695
      %v1175 = vpow.pop %v1174
      %v1176 = vmul.f32 %v1139, 1.442695
      %v1177 = vpow.pop %v1176
      %v1178 = vmul.f32 %v1140, 1.442695
      %v1179 = vpow.pop %v1178
      %v1180 = vmul.f32 %v1141, 1.442695
      %v1181 = vpow.pop %v1180
      %v1182 = vmul.f32 %v1142, 1.442695
      %v1183 = vpow.pop %v1182
      %v1184 = vmul.f32 %v1143, 1.442695
      %v1185 = vpow.pop %v1184
      %v1186 = vmul.f32 %v1144, 1.442695
      %v1187 = vpow.pop %v1186
      %v1188 = vmul.f32 %v1145, 1.442695
      %v1189 = vpow.pop %v1188
      %v1190 = vmul.f32 %v1146, 1.442695
      %v1191 = vpow.pop %v1190
      %v1192 = vmul.f32 %v1147, 1.442695
      %v1193 = vpow.pop %v1192
      %v1194 = vmul.f32 %v1148, 1.442695
      %v1195 = vpow.pop %v1194
      %v1196 = vmul.f32 %v1149, 1.442695
      %v1197 = vpow.pop %v1196
      %v1198 = vmul.f32 %v1150, 1.442695
      %v1199 = vpow.pop %v1198
      %v1200 = vmul.f32 %v1151, 1.442695
      %v1201 = vpow.pop %v1200
      %v1202 = vmul.f32 %v1152, 1.442695
      %v1203 = vpow.pop %v1202
      %v1204 = vmul.f32 %v1153, 1.442695
      %v1205 = vpow.pop %v1204
      %v1206 = vmul.f32 %v1154, 1.442695
      %v1207 = vpow.pop %v1206
      %v1208 = vmul.f32 %v1155, 1.442695
      %v1209 = vpow.pop %v1208
      %v1210 = vmul.f32 %v1156, 1.442695
      %v1211 = vpow.pop %v1210
      %v1212 = vmul.f32 %v1157, 1.442695
      %v1213 = vpow.pop %v1212
      %v1214 = vmul.f32 %v1158, 1.442695
      %v1215 = vpow.pop %v1214
      %v1216 = vmul.f32 %v1159, 1.442695
      %v1217 = vpow.pop %v1216
      %v1218 = vmul.f32 %v1160, 1.442695
      %v1219 = vpow.pop %v1218
      %v1220 = vmul.f32 %v1161, 1.442695
      %v1221 = vpow.pop %v1220
      %v1222 = vmul.f32 %v1162, 1.442695
      %v1223 = vpow.pop %v1222
      %v1224 = vmul.f32 %v1163, 1.442695
      %v1225 = vpow.pop %v1224
      %v1226 = vmul.f32 %v1164, 1.442695
      %v1227 = vpow.pop %v1226
      %v1228 = vmul.f32 %v1165, 1.442695
      %v1229 = vpow.pop %v1228
      %v1230 = vadd.f32 %v1167, 1.0
      %v1231 = vlog2.pop %v1230
      %v1232 = vmul.f32 %v1231, 0.6931472
      %v1233 = vmul.f32 -0.5, %v1167
      %v1234 = vadd.f32 %v1233, 1.0
      %v1235 = vmul.f32 %v1234, %v1167
      %v1236 = vand.u32 2147483647, %v1167
      %vm1237 = vcmp.lt.f32.partialorder %v1236, 0.0004427343
      %v1238 = vsel %vm1237, %v1235, %v1232
      %v1239 = vadd.f32 %v1169, 1.0
      %v1240 = vlog2.pop %v1239
      %v1241 = vmul.f32 %v1240, 0.6931472
      %v1242 = vmul.f32 -0.5, %v1169
      %v1243 = vadd.f32 %v1242, 1.0
      %v1244 = vmul.f32 %v1243, %v1169
      %v1245 = vand.u32 2147483647, %v1169
      %vm1246 = vcmp.lt.f32.partialorder %v1245, 0.0004427343
      %v1247 = vsel %vm1246, %v1244, %v1241
      %v1248 = vadd.f32 %v1171, 1.0
      %v1249 = vlog2.pop %v1248
      %v1250 = vmul.f32 %v1249, 0.6931472
      %v1251 = vmul.f32 -0.5, %v1171
      %v1252 = vadd.f32 %v1251, 1.0
      %v1253 = vmul.f32 %v1252, %v1171
      %v1254 = vand.u32 2147483647, %v1171
      %vm1255 = vcmp.lt.f32.partialorder %v1254, 0.0004427343
      %v1256 = vsel %vm1255, %v1253, %v1250
      %v1257 = vadd.f32 %v1173, 1.0
      %v1258 = vlog2.pop %v1257
      %v1259 = vmul.f32 %v1258, 0.6931472
      %v1260 = vmul.f32 -0.5, %v1173
      %v1261 = vadd.f32 %v1260, 1.0
      %v1262 = vmul.f32 %v1261, %v1173
      %v1263 = vand.u32 2147483647, %v1173
      %vm1264 = vcmp.lt.f32.partialorder %v1263, 0.0004427343
      %v1265 = vsel %vm1264, %v1262, %v1259
      %v1266 = vadd.f32 %v1175, 1.0
      %v1267 = vlog2.pop %v1266
      %v1268 = vmul.f32 %v1267, 0.6931472
      %v1269 = vmul.f32 -0.5, %v1175
      %v1270 = vadd.f32 %v1269, 1.0
      %v1271 = vmul.f32 %v1270, %v1175
      %v1272 = vand.u32 2147483647, %v1175
      %vm1273 = vcmp.lt.f32.partialorder %v1272, 0.0004427343
      %v1274 = vsel %vm1273, %v1271, %v1268
      %v1275 = vadd.f32 %v1177, 1.0
      %v1276 = vlog2.pop %v1275
      %v1277 = vmul.f32 %v1276, 0.6931472
      %v1278 = vmul.f32 -0.5, %v1177
      %v1279 = vadd.f32 %v1278, 1.0
      %v1280 = vmul.f32 %v1279, %v1177
      %v1281 = vand.u32 2147483647, %v1177
      %vm1282 = vcmp.lt.f32.partialorder %v1281, 0.0004427343
      %v1283 = vsel %vm1282, %v1280, %v1277
      %v1284 = vadd.f32 %v1179, 1.0
      %v1285 = vlog2.pop %v1284
      %v1286 = vmul.f32 %v1285, 0.6931472
      %v1287 = vmul.f32 -0.5, %v1179
      %v1288 = vadd.f32 %v1287, 1.0
      %v1289 = vmul.f32 %v1288, %v1179
      %v1290 = vand.u32 2147483647, %v1179
      %vm1291 = vcmp.lt.f32.partialorder %v1290, 0.0004427343
      %v1292 = vsel %vm1291, %v1289, %v1286
      %v1293 = vadd.f32 %v1181, 1.0
      %v1294 = vlog2.pop %v1293
      %v1295 = vmul.f32 %v1294, 0.6931472
      %v1296 = vmul.f32 -0.5, %v1181
      %v1297 = vadd.f32 %v1296, 1.0
      %v1298 = vmul.f32 %v1297, %v1181
      %v1299 = vand.u32 2147483647, %v1181
      %vm1300 = vcmp.lt.f32.partialorder %v1299, 0.0004427343
      %v1301 = vsel %vm1300, %v1298, %v1295
      %v1302 = vadd.f32 %v1183, 1.0
      %v1303 = vlog2.pop %v1302
      %v1304 = vmul.f32 %v1303, 0.6931472
      %v1305 = vmul.f32 -0.5, %v1183
      %v1306 = vadd.f32 %v1305, 1.0
      %v1307 = vmul.f32 %v1306, %v1183
      %v1308 = vand.u32 2147483647, %v1183
      %vm1309 = vcmp.lt.f32.partialorder %v1308, 0.0004427343
      %v1310 = vsel %vm1309, %v1307, %v1304
      %v1311 = vadd.f32 %v1185, 1.0
      %v1312 = vlog2.pop %v1311
      %v1313 = vmul.f32 %v1312, 0.6931472
      %v1314 = vmul.f32 -0.5, %v1185
      %v1315 = vadd.f32 %v1314, 1.0
      %v1316 = vmul.f32 %v1315, %v1185
      %v1317 = vand.u32 2147483647, %v1185
      %vm1318 = vcmp.lt.f32.partialorder %v1317, 0.0004427343
      %v1319 = vsel %vm1318, %v1316, %v1313
      %v1320 = vadd.f32 %v1187, 1.0
      %v1321 = vlog2.pop %v1320
      %v1322 = vmul.f32 %v1321, 0.6931472
      %v1323 = vmul.f32 -0.5, %v1187
      %v1324 = vadd.f32 %v1323, 1.0
      %v1325 = vmul.f32 %v1324, %v1187
      %v1326 = vand.u32 2147483647, %v1187
      %vm1327 = vcmp.lt.f32.partialorder %v1326, 0.0004427343
      %v1328 = vsel %vm1327, %v1325, %v1322
      %v1329 = vadd.f32 %v1189, 1.0
      %v1330 = vlog2.pop %v1329
      %v1331 = vmul.f32 %v1330, 0.6931472
      %v1332 = vmul.f32 -0.5, %v1189
      %v1333 = vadd.f32 %v1332, 1.0
      %v1334 = vmul.f32 %v1333, %v1189
      %v1335 = vand.u32 2147483647, %v1189
      %vm1336 = vcmp.lt.f32.partialorder %v1335, 0.0004427343
      %v1337 = vsel %vm1336, %v1334, %v1331
      %v1338 = vadd.f32 %v1191, 1.0
      %v1339 = vlog2.pop %v1338
      %v1340 = vmul.f32 %v1339, 0.6931472
      %v1341 = vmul.f32 -0.5, %v1191
      %v1342 = vadd.f32 %v1341, 1.0
      %v1343 = vmul.f32 %v1342, %v1191
      %v1344 = vand.u32 2147483647, %v1191
      %vm1345 = vcmp.lt.f32.partialorder %v1344, 0.0004427343
      %v1346 = vsel %vm1345, %v1343, %v1340
      %v1347 = vadd.f32 %v1193, 1.0
      %v1348 = vlog2.pop %v1347
      %v1349 = vmul.f32 %v1348, 0.6931472
      %v1350 = vmul.f32 -0.5, %v1193
      %v1351 = vadd.f32 %v1350, 1.0
      %v1352 = vmul.f32 %v1351, %v1193
      %v1353 = vand.u32 2147483647, %v1193
      %vm1354 = vcmp.lt.f32.partialorder %v1353, 0.0004427343
      %v1355 = vsel %vm1354, %v1352, %v1349
      %v1356 = vadd.f32 %v1195, 1.0
      %v1357 = vlog2.pop %v1356
      %v1358 = vmul.f32 %v1357, 0.6931472
      %v1359 = vmul.f32 -0.5, %v1195
      %v1360 = vadd.f32 %v1359, 1.0
      %v1361 = vmul.f32 %v1360, %v1195
      %v1362 = vand.u32 2147483647, %v1195
      %vm1363 = vcmp.lt.f32.partialorder %v1362, 0.0004427343
      %v1364 = vsel %vm1363, %v1361, %v1358
      %v1365 = vadd.f32 %v1197, 1.0
      %v1366 = vlog2.pop %v1365
      %v1367 = vmul.f32 %v1366, 0.6931472
      %v1368 = vmul.f32 -0.5, %v1197
      %v1369 = vadd.f32 %v1368, 1.0
      %v1370 = vmul.f32 %v1369, %v1197
      %v1371 = vand.u32 2147483647, %v1197
      %vm1372 = vcmp.lt.f32.partialorder %v1371, 0.0004427343
      %v1373 = vsel %vm1372, %v1370, %v1367
      %v1374 = vadd.f32 %v1199, 1.0
      %v1375 = vlog2.pop %v1374
      %v1376 = vmul.f32 %v1375, 0.6931472
      %v1377 = vmul.f32 -0.5, %v1199
      %v1378 = vadd.f32 %v1377, 1.0
      %v1379 = vmul.f32 %v1378, %v1199
      %v1380 = vand.u32 2147483647, %v1199
      %vm1381 = vcmp.lt.f32.partialorder %v1380, 0.0004427343
      %v1382 = vsel %vm1381, %v1379, %v1376
      %v1383 = vadd.f32 %v1201, 1.0
      %v1384 = vlog2.pop %v1383
      %v1385 = vmul.f32 %v1384, 0.6931472
      %v1386 = vmul.f32 -0.5, %v1201
      %v1387 = vadd.f32 %v1386, 1.0
      %v1388 = vmul.f32 %v1387, %v1201
      %v1389 = vand.u32 2147483647, %v1201
      %vm1390 = vcmp.lt.f32.partialorder %v1389, 0.0004427343
      %v1391 = vsel %vm1390, %v1388, %v1385
      %v1392 = vadd.f32 %v1203, 1.0
      %v1393 = vlog2.pop %v1392
      %v1394 = vmul.f32 %v1393, 0.6931472
      %v1395 = vmul.f32 -0.5, %v1203
      %v1396 = vadd.f32 %v1395, 1.0
      %v1397 = vmul.f32 %v1396, %v1203
      %v1398 = vand.u32 2147483647, %v1203
      %vm1399 = vcmp.lt.f32.partialorder %v1398, 0.0004427343
      %v1400 = vsel %vm1399, %v1397, %v1394
      %v1401 = vadd.f32 %v1205, 1.0
      %v1402 = vlog2.pop %v1401
      %v1403 = vmul.f32 %v1402, 0.6931472
      %v1404 = vmul.f32 -0.5, %v1205
      %v1405 = vadd.f32 %v1404, 1.0
      %v1406 = vmul.f32 %v1405, %v1205
      %v1407 = vand.u32 2147483647, %v1205
      %vm1408 = vcmp.lt.f32.partialorder %v1407, 0.0004427343
      %v1409 = vsel %vm1408, %v1406, %v1403
      %v1410 = vadd.f32 %v1207, 1.0
      %v1411 = vlog2.pop %v1410
      %v1412 = vmul.f32 %v1411, 0.6931472
      %v1413 = vmul.f32 -0.5, %v1207
      %v1414 = vadd.f32 %v1413, 1.0
      %v1415 = vmul.f32 %v1414, %v1207
      %v1416 = vand.u32 2147483647, %v1207
      %vm1417 = vcmp.lt.f32.partialorder %v1416, 0.0004427343
      %v1418 = vsel %vm1417, %v1415, %v1412
      %v1419 = vadd.f32 %v1209, 1.0
      %v1420 = vlog2.pop %v1419
      %v1421 = vmul.f32 %v1420, 0.6931472
      %v1422 = vmul.f32 -0.5, %v1209
      %v1423 = vadd.f32 %v1422, 1.0
      %v1424 = vmul.f32 %v1423, %v1209
      %v1425 = vand.u32 2147483647, %v1209
      %vm1426 = vcmp.lt.f32.partialorder %v1425, 0.0004427343
      %v1427 = vsel %vm1426, %v1424, %v1421
      %v1428 = vadd.f32 %v1211, 1.0
      %v1429 = vlog2.pop %v1428
      %v1430 = vmul.f32 %v1429, 0.6931472
      %v1431 = vmul.f32 -0.5, %v1211
      %v1432 = vadd.f32 %v1431, 1.0
      %v1433 = vmul.f32 %v1432, %v1211
      %v1434 = vand.u32 2147483647, %v1211
      %vm1435 = vcmp.lt.f32.partialorder %v1434, 0.0004427343
      %v1436 = vsel %vm1435, %v1433, %v1430
      %v1437 = vadd.f32 %v1213, 1.0
      %v1438 = vlog2.pop %v1437
      %v1439 = vmul.f32 %v1438, 0.6931472
      %v1440 = vmul.f32 -0.5, %v1213
      %v1441 = vadd.f32 %v1440, 1.0
      %v1442 = vmul.f32 %v1441, %v1213
      %v1443 = vand.u32 2147483647, %v1213
      %vm1444 = vcmp.lt.f32.partialorder %v1443, 0.0004427343
      %v1445 = vsel %vm1444, %v1442, %v1439
      %v1446 = vadd.f32 %v1215, 1.0
      %v1447 = vlog2.pop %v1446
      %v1448 = vmul.f32 %v1447, 0.6931472
      %v1449 = vmul.f32 -0.5, %v1215
      %v1450 = vadd.f32 %v1449, 1.0
      %v1451 = vmul.f32 %v1450, %v1215
      %v1452 = vand.u32 2147483647, %v1215
      %vm1453 = vcmp.lt.f32.partialorder %v1452, 0.0004427343
      %v1454 = vsel %vm1453, %v1451, %v1448
      %v1455 = vadd.f32 %v1217, 1.0
      %v1456 = vlog2.pop %v1455
      %v1457 = vmul.f32 %v1456, 0.6931472
      %v1458 = vmul.f32 -0.5, %v1217
      %v1459 = vadd.f32 %v1458, 1.0
      %v1460 = vmul.f32 %v1459, %v1217
      %v1461 = vand.u32 2147483647, %v1217
      %vm1462 = vcmp.lt.f32.partialorder %v1461, 0.0004427343
      %v1463 = vsel %vm1462, %v1460, %v1457
      %v1464 = vadd.f32 %v1219, 1.0
      %v1465 = vlog2.pop %v1464
      %v1466 = vmul.f32 %v1465, 0.6931472
      %v1467 = vmul.f32 -0.5, %v1219
      %v1468 = vadd.f32 %v1467, 1.0
      %v1469 = vmul.f32 %v1468, %v1219
      %v1470 = vand.u32 2147483647, %v1219
      %vm1471 = vcmp.lt.f32.partialorder %v1470, 0.0004427343
      %v1472 = vsel %vm1471, %v1469, %v1466
      %v1473 = vadd.f32 %v1221, 1.0
      %v1474 = vlog2.pop %v1473
      %v1475 = vmul.f32 %v1474, 0.6931472
      %v1476 = vmul.f32 -0.5, %v1221
      %v1477 = vadd.f32 %v1476, 1.0
      %v1478 = vmul.f32 %v1477, %v1221
      %v1479 = vand.u32 2147483647, %v1221
      %vm1480 = vcmp.lt.f32.partialorder %v1479, 0.0004427343
      %v1481 = vsel %vm1480, %v1478, %v1475
      %v1482 = vadd.f32 %v1223, 1.0
      %v1483 = vlog2.pop %v1482
      %v1484 = vmul.f32 %v1483, 0.6931472
      %v1485 = vmul.f32 -0.5, %v1223
      %v1486 = vadd.f32 %v1485, 1.0
      %v1487 = vmul.f32 %v1486, %v1223
      %v1488 = vand.u32 2147483647, %v1223
      %vm1489 = vcmp.lt.f32.partialorder %v1488, 0.0004427343
      %v1490 = vsel %vm1489, %v1487, %v1484
      %v1491 = vadd.f32 %v1225, 1.0
      %v1492 = vlog2.pop %v1491
      %v1493 = vmul.f32 %v1492, 0.6931472
      %v1494 = vmul.f32 -0.5, %v1225
      %v1495 = vadd.f32 %v1494, 1.0
      %v1496 = vmul.f32 %v1495, %v1225
      %v1497 = vand.u32 2147483647, %v1225
      %vm1498 = vcmp.lt.f32.partialorder %v1497, 0.0004427343
      %v1499 = vsel %vm1498, %v1496, %v1493
      %v1500 = vadd.f32 %v1227, 1.0
      %v1501 = vlog2.pop %v1500
      %v1502 = vmul.f32 %v1501, 0.6931472
      %v1503 = vmul.f32 -0.5, %v1227
      %v1504 = vadd.f32 %v1503, 1.0
      %v1505 = vmul.f32 %v1504, %v1227
      %v1506 = vand.u32 2147483647, %v1227
      %vm1507 = vcmp.lt.f32.partialorder %v1506, 0.0004427343
      %v1508 = vsel %vm1507, %v1505, %v1502
      %v1509 = vadd.f32 %v1229, 1.0
      %v1510 = vlog2.pop %v1509
      %v1511 = vmul.f32 %v1510, 0.6931472
      %v1512 = vmul.f32 -0.5, %v1229
      %v1513 = vadd.f32 %v1512, 1.0
      %v1514 = vmul.f32 %v1513, %v1229
      %v1515 = vand.u32 2147483647, %v1229
      %vm1516 = vcmp.lt.f32.partialorder %v1515, 0.0004427343
      %v1517 = vsel %vm1516, %v1514, %v1511
      %v1518 = vadd.f32 %v1070, %v1238
      %v1519 = vadd.f32 %v1071, %v1247
      %v1520 = vadd.f32 %v1072, %v1256
      %v1521 = vadd.f32 %v1073, %v1265
      %v1522 = vadd.f32 %v1074, %v1274
      %v1523 = vadd.f32 %v1075, %v1283
      %v1524 = vadd.f32 %v1076, %v1292
      %v1525 = vadd.f32 %v1077, %v1301
      %v1526 = vadd.f32 %v1078, %v1310
      %v1527 = vadd.f32 %v1079, %v1319
      %v1528 = vadd.f32 %v1080, %v1328
      %v1529 = vadd.f32 %v1081, %v1337
      %v1530 = vadd.f32 %v1082, %v1346
      %v1531 = vadd.f32 %v1083, %v1355
      %v1532 = vadd.f32 %v1084, %v1364
      %v1533 = vadd.f32 %v1085, %v1373
      %v1534 = vadd.f32 %v1086, %v1382
      %v1535 = vadd.f32 %v1087, %v1391
      %v1536 = vadd.f32 %v1088, %v1400
      %v1537 = vadd.f32 %v1089, %v1409
      %v1538 = vadd.f32 %v1090, %v1418
      %v1539 = vadd.f32 %v1091, %v1427
      %v1540 = vadd.f32 %v1092, %v1436
      %v1541 = vadd.f32 %v1093, %v1445
      %v1542 = vadd.f32 %v1094, %v1454
      %v1543 = vadd.f32 %v1095, %v1463
      %v1544 = vadd.f32 %v1096, %v1472
      %v1545 = vadd.f32 %v1097, %v1481
      %v1546 = vadd.f32 %v1098, %v1490
      %v1547 = vadd.f32 %v1099, %v1499
      %v1548 = vadd.f32 %v1100, %v1508
      %v1549 = vadd.f32 %v1101, %v1517
      %v1550 = vtanh.pop %v1518
      %v1551 = vtanh.pop %v1519
      %v1552 = vtanh.pop %v1520
      %v1553 = vtanh.pop %v1521
      %v1554 = vtanh.pop %v1522
      %v1555 = vtanh.pop %v1523
      %v1556 = vtanh.pop %v1524
      %v1557 = vtanh.pop %v1525
      %v1558 = vtanh.pop %v1526
      %v1559 = vtanh.pop %v1527
      %v1560 = vtanh.pop %v1528
      %v1561 = vtanh.pop %v1529
      %v1562 = vtanh.pop %v1530
      %v1563 = vtanh.pop %v1531
      %v1564 = vtanh.pop %v1532
      %v1565 = vtanh.pop %v1533
      %v1566 = vtanh.pop %v1534
      %v1567 = vtanh.pop %v1535
      %v1568 = vtanh.pop %v1536
      %v1569 = vtanh.pop %v1537
      %v1570 = vtanh.pop %v1538
      %v1571 = vtanh.pop %v1539
      %v1572 = vtanh.pop %v1540
      %v1573 = vtanh.pop %v1541
      %v1574 = vtanh.pop %v1542
      %v1575 = vtanh.pop %v1543
      %v1576 = vtanh.pop %v1544
      %v1577 = vtanh.pop %v1545
      %v1578 = vtanh.pop %v1546
      %v1579 = vtanh.pop %v1547
      %v1580 = vtanh.pop %v1548
      %v1581 = vtanh.pop %v1549
      %v1582 = vmul.f32 %v944, %v1550
      %v1583 = vmul.f32 %v947, %v1551
      %v1584 = vmul.f32 %v952, %v1552
      %v1585 = vmul.f32 %v955, %v1553
      %v1586 = vmul.f32 %v960, %v1554
      %v1587 = vmul.f32 %v963, %v1555
      %v1588 = vmul.f32 %v968, %v1556
      %v1589 = vmul.f32 %v971, %v1557
      %v1590 = vmul.f32 %v976, %v1558
      %v1591 = vmul.f32 %v979, %v1559
      %v1592 = vmul.f32 %v984, %v1560
      %v1593 = vmul.f32 %v987, %v1561
      %v1594 = vmul.f32 %v992, %v1562
      %v1595 = vmul.f32 %v995, %v1563
      %v1596 = vmul.f32 %v1000, %v1564
      %v1597 = vmul.f32 %v1003, %v1565
      %v1598 = vmul.f32 %v1008, %v1566
      %v1599 = vmul.f32 %v1011, %v1567
      %v1600 = vmul.f32 %v1016, %v1568
      %v1601 = vmul.f32 %v1019, %v1569
      %v1602 = vmul.f32 %v1024, %v1570
      %v1603 = vmul.f32 %v1027, %v1571
      %v1604 = vmul.f32 %v1032, %v1572
      %v1605 = vmul.f32 %v1035, %v1573
      %v1606 = vmul.f32 %v1040, %v1574
      %v1607 = vmul.f32 %v1043, %v1575
      %v1608 = vmul.f32 %v1048, %v1576
      %v1609 = vmul.f32 %v1051, %v1577
      %v1610 = vmul.f32 %v1056, %v1578
      %v1611 = vmul.f32 %v1059, %v1579
      %v1612 = vmul.f32 %v1064, %v1580
      %v1613 = vmul.f32 %v1067, %v1581
      %v1614 = vpack.c.bf16 %v1583, %v1582
      %v1615 = vpack.c.bf16 %v1585, %v1584
      %v1616 = vpack.c.bf16 %v1587, %v1586
      %v1617 = vpack.c.bf16 %v1589, %v1588
      %v1618 = vpack.c.bf16 %v1591, %v1590
      %v1619 = vpack.c.bf16 %v1593, %v1592
      %v1620 = vpack.c.bf16 %v1595, %v1594
      %v1621 = vpack.c.bf16 %v1597, %v1596
      %v1622 = vpack.c.bf16 %v1599, %v1598
      %v1623 = vpack.c.bf16 %v1601, %v1600
      %v1624 = vpack.c.bf16 %v1603, %v1602
      %v1625 = vpack.c.bf16 %v1605, %v1604
      %v1626 = vpack.c.bf16 %v1607, %v1606
      %v1627 = vpack.c.bf16 %v1609, %v1608
      %v1628 = vpack.c.bf16 %v1611, %v1610
      %v1629 = vpack.c.bf16 %v1613, %v1612
      %v1646 = vunpack.c.l.b16 %v1614
      %v1647 = vunpack.c.h.b16 %v1614
      %v1648 = vunpack.c.l.b16 %v1615
      %v1649 = vunpack.c.h.b16 %v1615
      %v1650 = vunpack.c.l.b16 %v1616
      %v1651 = vunpack.c.h.b16 %v1616
      %v1652 = vunpack.c.l.b16 %v1617
      %v1653 = vunpack.c.h.b16 %v1617
      %v1654 = vunpack.c.l.b16 %v1618
      %v1655 = vunpack.c.h.b16 %v1618
      %v1656 = vunpack.c.l.b16 %v1619
      %v1657 = vunpack.c.h.b16 %v1619
      %v1658 = vunpack.c.l.b16 %v1620
      %v1659 = vunpack.c.h.b16 %v1620
      %v1660 = vunpack.c.l.b16 %v1621
      %v1661 = vunpack.c.h.b16 %v1621
      %v1662 = vunpack.c.l.b16 %v1622
      %v1663 = vunpack.c.h.b16 %v1622
      %v1664 = vunpack.c.l.b16 %v1623
      %v1665 = vunpack.c.h.b16 %v1623
      %v1666 = vunpack.c.l.b16 %v1624
      %v1667 = vunpack.c.h.b16 %v1624
      %v1668 = vunpack.c.l.b16 %v1625
      %v1669 = vunpack.c.h.b16 %v1625
      %v1670 = vunpack.c.l.b16 %v1626
      %v1671 = vunpack.c.h.b16 %v1626
      %v1672 = vunpack.c.l.b16 %v1627
      %v1673 = vunpack.c.h.b16 %v1627
      %v1674 = vunpack.c.l.b16 %v1628
      %v1675 = vunpack.c.h.b16 %v1628
      %v1676 = vunpack.c.l.b16 %v1629
      %v1677 = vunpack.c.h.b16 %v1629
      %v1678 = vpack.c.b16 %v1646, %v1646
      %v1679 = vpack.c.b16 %v1647, %v1647
      %v1680 = vpack.c.b16 %v1648, %v1648
      %v1681 = vpack.c.b16 %v1649, %v1649
      %v1682 = vpack.c.b16 %v1650, %v1650
      %v1683 = vpack.c.b16 %v1651, %v1651
      %v1684 = vpack.c.b16 %v1652, %v1652
      %v1685 = vpack.c.b16 %v1653, %v1653
      %v1686 = vpack.c.b16 %v1654, %v1654
      %v1687 = vpack.c.b16 %v1655, %v1655
      %v1688 = vpack.c.b16 %v1656, %v1656
      %v1689 = vpack.c.b16 %v1657, %v1657
      %v1690 = vpack.c.b16 %v1658, %v1658
      %v1691 = vpack.c.b16 %v1659, %v1659
      %v1692 = vpack.c.b16 %v1660, %v1660
      %v1693 = vpack.c.b16 %v1661, %v1661
      %v1694 = vpack.c.b16 %v1662, %v1662
      %v1695 = vpack.c.b16 %v1663, %v1663
      %v1696 = vpack.c.b16 %v1664, %v1664
      %v1697 = vpack.c.b16 %v1665, %v1665
      %v1698 = vpack.c.b16 %v1666, %v1666
      %v1699 = vpack.c.b16 %v1667, %v1667
      %v1700 = vpack.c.b16 %v1668, %v1668
      %v1701 = vpack.c.b16 %v1669, %v1669
      %v1702 = vpack.c.b16 %v1670, %v1670
      %v1703 = vpack.c.b16 %v1671, %v1671
      %v1704 = vpack.c.b16 %v1672, %v1672
      %v1705 = vpack.c.b16 %v1673, %v1673
      %v1706 = vpack.c.b16 %v1674, %v1674
      %v1707 = vpack.c.b16 %v1675, %v1675
      %v1708 = vpack.c.b16 %v1676, %v1676
      %v1709 = vpack.c.b16 %v1677, %v1677
      %1742 = vst [vmem:[%s226] sm:$0xf] %v1678
      %1743 = vst [vmem:[%s226 + $0x4] sm:$0xf] %v1679
      %1744 = vst [vmem:[%s226 + $0x8] sm:$0xf] %v1680
      %1745 = vst [vmem:[%s226 + $0xc] sm:$0xf] %v1681
      %1746 = vst [vmem:[%s226 + $0x10] sm:$0xf] %v1682
      %1747 = vst [vmem:[%s226 + $0x14] sm:$0xf] %v1683
      %1748 = vst [vmem:[%s226 + $0x18] sm:$0xf] %v1684
      %1749 = vst [vmem:[%s226 + $0x1c] sm:$0xf] %v1685
      %1750 = vst [vmem:[%s226 + $0x20] sm:$0xf] %v1686
      %1751 = vst [vmem:[%s226 + $0x24] sm:$0xf] %v1687
      %1752 = vst [vmem:[%s226 + $0x28] sm:$0xf] %v1688
      %1753 = vst [vmem:[%s226 + $0x2c] sm:$0xf] %v1689
      %1754 = vst [vmem:[%s226 + $0x30] sm:$0xf] %v1690
      %1755 = vst [vmem:[%s226 + $0x34] sm:$0xf] %v1691
      %1756 = vst [vmem:[%s226 + $0x38] sm:$0xf] %v1692
      %1757 = vst [vmem:[%s226 + $0x3c] sm:$0xf] %v1693
      %1758 = vst [vmem:[%s226 + $0x40] sm:$0xf] %v1694
      %1759 = vst [vmem:[%s226 + $0x44] sm:$0xf] %v1695
      %1760 = vst [vmem:[%s226 + $0x48] sm:$0xf] %v1696
      %1761 = vst [vmem:[%s226 + $0x4c] sm:$0xf] %v1697
      %1762 = vst [vmem:[%s226 + $0x50] sm:$0xf] %v1698
      %1763 = vst [vmem:[%s226 + $0x54] sm:$0xf] %v1699
      %1764 = vst [vmem:[%s226 + $0x58] sm:$0xf] %v1700
      %1765 = vst [vmem:[%s226 + $0x5c] sm:$0xf] %v1701
      %1766 = vst [vmem:[%s226 + $0x60] sm:$0xf] %v1702
      %1767 = vst [vmem:[%s226 + $0x64] sm:$0xf] %v1703
      %1768 = vst [vmem:[%s226 + $0x68] sm:$0xf] %v1704
      %1769 = vst [vmem:[%s226 + $0x6c] sm:$0xf] %v1705
      %1770 = vst [vmem:[%s226 + $0x70] sm:$0xf] %v1706
      %1771 = vst [vmem:[%s226 + $0x74] sm:$0xf] %v1707
      %1772 = vst [vmem:[%s226 + $0x78] sm:$0xf] %v1708
      %1773 = vst [vmem:[%s226 + $0x7c] sm:$0xf] %v1709
      %s1774 = smul.u32 32, %s18
      %p1775 = scmp.lt.s32.totalorder %s1774, 63
      %s1776 = scalar_select %p1775, %s1774, 63
      %p1777 = scmp.lt.s32.totalorder %s19, 0
      %s1778 = scalar_select %p1777, %s19, 0
      %s1779 = sadd.s32 %s1778, %s1776
      %s1780 = smul.addr %s1779, 4
      %s1781 = scalar_lea.vmem %s3, %s1780
      // Predicated region
      $region33: #{_lambda_.5} parent=31 // pred_check
        %p1782 = pneg %p124
      $region34: #{_lambda_.5} parent=31 // pred_check_branch
        %1784 = sbr.rel (%p1782) target = $region36
      $region35: #{_lambda_.5} parent=31 // pred_region
        %s1785 = smul.u32 32, %s18
      $region36: #{_lambda_.5} parent=31 // pred_fallthru
        _
    $region32: #{_lambda_.5} parent=5 // pred_fallthru
      _
    %p1786 = scmp.le.s32.totalorder 2, %s9
    // Predicated region
    $region37: #{_lambda_.5} parent=5 // pred_check
      %p1787 = pneg %p1786
    $region38: #{_lambda_.5} parent=5 // pred_check_branch
      %1789 = sbr.rel (%p1787) target = $region40
    $region39: #{_lambda_.5} parent=5 // pred_region
      %s1790 = ssub.s32 %s9, 2
      // Predicated region
      $region41: #{_lambda_.5} parent=39 // pred_check
        %p1791 = pneg %p130
      $region42: #{_lambda_.5} parent=39 // pred_check_branch
        %1793 = sbr.rel (%p1791) target = $region44
      $region43: #{_lambda_.5} parent=39 // pred_region
        %s1794 = smul.u32 32, %s20
        %p1795 = scmp.lt.s32.totalorder %s1794, 63
        %s1796 = scalar_select %p1795, %s1794, 63
        %p1797 = scmp.lt.s32.totalorder %s21, 0
        %s1798 = scalar_select %p1797, %s21, 0
        %s1799 = sadd.s32 %s1798, %s1796
        %s1800 = smul.addr %s1799, 4
        %s1801 = scalar_lea.vmem %s3, %s1800
      $region44: #{_lambda_.5} parent=39 // pred_fallthru
        _
    $region40: #{_lambda_.5} parent=5 // pred_fallthru
      _
  $region6: #{_lambda_.5} parent=0 // loop_footer
    %s13 = sadd.s32 1, %s9
  $region7: #{_lambda_.5} parent=0 // loop_footer_branch
    %8 = sbr.rel target = $region3
  $region8: #{_lambda_.5} parent=0 // loop_exit
    _

// kernel: _lambda_.6
$region0: #{_lambda_.6}
  #allocation0 [shape = 'u32[]', space=smem, size = 0x4, offset = 0x4, fixed_abs, tag = 'smem constant byte address 0x4 - core index']
  #allocation1 [shape = 'u32[144,128]{1,0:T(1,128)}', space=vmem, size = 0x12000, scoped, tag = 'internal scratch']
  %s0 = inlined_call_operand.vmem [shape: bf16[512,128], index: 0, kind: input, shape index: {}]
  %s1 = inlined_call_operand.vmem [shape: bf16[128,128], index: 1, kind: input, shape index: {}]
  %s2 = inlined_call_operand.vmem [shape: f32[1,128], index: 2, kind: input, shape index: {}]
  %s3 = inlined_call_operand.vmem [shape: bf16[512,128], index: 3, kind: output, shape index: {}]
  %s4 = sld [smem:[#allocation0]]
  $region45: #{_lambda_.6} parent=0
    _
  %s6 = ssub.s32 1, %s4
  %s7 = scalar_select 0, %s6, %s4
  loop: start=0, step=1, limit=4
  $region2: #{_lambda_.6} parent=0 // loop_pre_header
    _
  $region3: #{_lambda_.6} parent=0 // loop_header
    %s9 = sphi 0, %s13
    %p10 = scmp.ge.s32.totalorder %s9, 4
    %s16 = sphi 0, %s28
    %s17 = sphi 0, %s24
    %s18 = sphi 0, %s16
    %s19 = sphi 0, %s17
    %s20 = sphi 0, %s18
    %s21 = sphi 0, %s19
    %s31 = sphi 0, %s33
    %s34 = sphi 0, %s31
    %s35 = sphi 0, %s34
    %s51 = sphi 0, %s35
    %s57 = sphi 0, %s59
    %s60 = sphi 0, %s57
    %s61 = sphi 0, %s60
    %s77 = sphi 0, %s61
    %s83 = sphi 0, %s85
    %s86 = sphi 0, %s83
    %s87 = sphi 0, %s86
    %s103 = sphi 0, %s87
    %s111 = sphi 0, %s113
    %s114 = sphi 0, %s111
    %s115 = sphi 0, %s114
    %s131 = sphi 0, %s115
  $region4: #{_lambda_.6} parent=0 // loop_header_branch
    %12 = sbr.rel (%p10) target = $region8
  $region5: #{_lambda_.6} parent=0 // loop_body
    %s14 = ssub.s32 %s9, 1
    %s15 = ssub.s32 %s9, 2
    %s22 = sadd.s32 1, %s17
    %p23 = scmp.ge.s32.totalorder %s22, 1
    %s24 = scalar_select %p23, 0, %s22
    %s25 = sadd.s32 1, %s16
    %s26 = scalar_select %p23, %s25, %s16
    %p27 = scmp.ge.s32.totalorder %s26, 2
    %s28 = scalar_select %p27, 0, %s26
    %s29 = ssub.s32 %s16, %s28
    %p30 = scmp.eq.s32.totalorder %s29, 0
    %s32 = sadd.s32 %s31, 1
    %s33 = scalar_select %p30, %s31, %s32
    %p36 = pneg %p30
    %p37 = scmp.eq.s32.totalorder %s9, 1
    %p38 = por %p36, %p37
    %p39 = scmp.ne.s32.totalorder %s31, %s34
    %p40 = scmp.eq.s32.totalorder %s9, 0
    %p41 = por %p39, %p40
    %p42 = scmp.ne.s32.totalorder %s31, %s34
    %p43 = scmp.eq.s32.totalorder %s14, 1
    %p44 = por %p42, %p43
    %p45 = scmp.ne.s32.totalorder %s34, %s35
    %p46 = scmp.eq.s32.totalorder %s14, 0
    %p47 = por %p45, %p46
    %p48 = scmp.ne.s32.totalorder %s34, %s35
    %p49 = scmp.eq.s32.totalorder %s15, 1
    %p50 = por %p48, %p49
    %p52 = scmp.ne.s32.totalorder %s35, %s51
    %p53 = scmp.eq.s32.totalorder %s15, 0
    %p54 = por %p52, %p53
    %s55 = ssub.s32 %s17, %s24
    %p56 = scmp.eq.s32.totalorder %s55, 0
    %s58 = sadd.s32 %s57, 1
    %s59 = scalar_select %p56, %s57, %s58
    %p62 = pneg %p56
    %p63 = scmp.eq.s32.totalorder %s9, 1
    %p64 = por %p62, %p63
    %p65 = scmp.ne.s32.totalorder %s57, %s60
    %p66 = scmp.eq.s32.totalorder %s9, 0
    %p67 = por %p65, %p66
    %p68 = scmp.ne.s32.totalorder %s57, %s60
    %p69 = scmp.eq.s32.totalorder %s14, 1
    %p70 = por %p68, %p69
    %p71 = scmp.ne.s32.totalorder %s60, %s61
    %p72 = scmp.eq.s32.totalorder %s14, 0
    %p73 = por %p71, %p72
    %p74 = scmp.ne.s32.totalorder %s60, %s61
    %p75 = scmp.eq.s32.totalorder %s15, 1
    %p76 = por %p74, %p75
    %p78 = scmp.ne.s32.totalorder %s61, %s77
    %p79 = scmp.eq.s32.totalorder %s15, 0
    %p80 = por %p78, %p79
    %s81 = ssub.s32 %s17, %s24
    %p82 = scmp.eq.s32.totalorder %s81, 0
    %s84 = sadd.s32 %s83, 1
    %s85 = scalar_select %p82, %s83, %s84
    %p88 = pneg %p82
    %p89 = scmp.eq.s32.totalorder %s9, 1
    %p90 = por %p88, %p89
    %p91 = scmp.ne.s32.totalorder %s83, %s86
    %p92 = scmp.eq.s32.totalorder %s9, 0
    %p93 = por %p91, %p92
    %p94 = scmp.ne.s32.totalorder %s83, %s86
    %p95 = scmp.eq.s32.totalorder %s14, 1
    %p96 = por %p94, %p95
    %p97 = scmp.ne.s32.totalorder %s86, %s87
    %p98 = scmp.eq.s32.totalorder %s14, 0
    %p99 = por %p97, %p98
    %p100 = scmp.ne.s32.totalorder %s86, %s87
    %p101 = scmp.eq.s32.totalorder %s15, 1
    %p102 = por %p100, %p101
    %p104 = scmp.ne.s32.totalorder %s87, %s103
    %p105 = scmp.eq.s32.totalorder %s15, 0
    %p106 = por %p104, %p105
    %s107 = ssub.s32 %s16, %s28
    %s108 = ssub.s32 %s17, %s24
    %s109 = sor.u32 %s107, %s108
    %p110 = scmp.eq.s32.totalorder %s109, 0
    %s112 = sadd.s32 %s111, 1
    %s113 = scalar_select %p110, %s111, %s112
    %p116 = pneg %p110
    %p117 = scmp.eq.s32.totalorder %s9, 1
    %p118 = por %p116, %p117
    %p119 = scmp.ne.s32.totalorder %s111, %s114
    %p120 = scmp.eq.s32.totalorder %s9, 0
    %p121 = por %p119, %p120
    %p122 = scmp.ne.s32.totalorder %s111, %s114
    %p123 = scmp.eq.s32.totalorder %s14, 1
    %p124 = por %p122, %p123
    %p125 = scmp.ne.s32.totalorder %s114, %s115
    %p126 = scmp.eq.s32.totalorder %s14, 0
    %p127 = por %p125, %p126
    %p128 = scmp.ne.s32.totalorder %s114, %s115
    %p129 = scmp.eq.s32.totalorder %s15, 1
    %p130 = por %p128, %p129
    %p132 = scmp.ne.s32.totalorder %s115, %s131
    %p133 = scmp.eq.s32.totalorder %s15, 0
    %p134 = por %p132, %p133
    %p135 = scmp.le.s32.totalorder 1, %s9
    %p136 = scmp.lt.s32.totalorder %s9, 3
    %p137 = pnand %p135, %p136
    %p138 = pneg %p137
    // Predicated region
    $region9: #{_lambda_.6} parent=5 // pred_check
      _
    $region10: #{_lambda_.6} parent=5 // pred_check_branch
      %140 = sbr.rel (%p137) target = $region12
    $region11: #{_lambda_.6} parent=5 // pred_region
      %s141 = ssub.s32 %s9, 1
      // Predicated region
      $region13: #{_lambda_.6} parent=11 // pred_check
        %p142 = pneg %p73
      $region14: #{_lambda_.6} parent=11 // pred_check_branch
        %144 = sbr.rel (%p142) target = $region16
      $region15: #{_lambda_.6} parent=11 // pred_region
        %p145 = scmp.lt.s32.totalorder %s19, 0
        %s146 = scalar_select %p145, %s19, 0
        %s147 = smul.addr %s146, 4
        %s148 = scalar_lea.vmem %s1, %s147
      $region16: #{_lambda_.6} parent=11 // pred_fallthru
        _
      // Predicated region
      $region17: #{_lambda_.6} parent=11 // pred_check
        %p149 = pneg %p99
      $region18: #{_lambda_.6} parent=11 // pred_check_branch
        %151 = sbr.rel (%p149) target = $region20
      $region19: #{_lambda_.6} parent=11 // pred_region
        %p152 = scmp.lt.s32.totalorder %s19, 0
        %s153 = scalar_select %p152, %s19, 0
        %s154 = scalar_lea.vmem %s2, %s153
      $region20: #{_lambda_.6} parent=11 // pred_fallthru
        _
    $region12: #{_lambda_.6} parent=5 // pred_fallthru
      _
    %p155 = scmp.lt.s32.totalorder %s9, 2
    // Predicated region
    $region21: #{_lambda_.6} parent=5 // pred_check
      %p156 = pneg %p155
    $region22: #{_lambda_.6} parent=5 // pred_check_branch
      %158 = sbr.rel (%p156) target = $region24
    $region23: #{_lambda_.6} parent=5 // pred_region
      // Predicated region
      $region25: #{_lambda_.6} parent=23 // pred_check
        %p159 = pneg %p41
      $region26: #{_lambda_.6} parent=23 // pred_check_branch
        %161 = sbr.rel (%p159) target = $region28
      $region27: #{_lambda_.6} parent=23 // pred_region
        %s162 = smul.u32 32, %s16
        %p163 = scmp.lt.s32.totalorder %s162, 63
        %s164 = scalar_select %p163, %s162, 63
        %s165 = smul.addr %s164, 4
        %s166 = scalar_lea.vmem %s0, %s165
        %s167 = smul.u32 32, %s16
      $region28: #{_lambda_.6} parent=23 // pred_fallthru
        _
    $region24: #{_lambda_.6} parent=5 // pred_fallthru
      _
    %p168 = scmp.le.s32.totalorder 1, %s9
    %p169 = scmp.lt.s32.totalorder %s9, 3
    %p170 = pnand %p168, %p169
    %p171 = pneg %p170
    // Predicated region
    $region29: #{_lambda_.6} parent=5 // pred_check
      _
    $region30: #{_lambda_.6} parent=5 // pred_check_branch
      %173 = sbr.rel (%p170) target = $region32
    $region31: #{_lambda_.6} parent=5 // pred_region
      %s174 = ssub.s32 %s9, 1
      %s175 = smul.u32 32, %s18
      %p176 = scmp.lt.s32.totalorder %s175, 63
      %s177 = scalar_select %p176, %s175, 63
      %s178 = smul.addr %s177, 4
      %s179 = scalar_lea.vmem %s0, %s178
      %p180 = pneg %p47
      %p181 = pneg %p44
      %p182 = scmp.lt.s32.totalorder %s19, 0
      %s183 = scalar_select %p182, %s19, 0
      %s184 = smul.addr %s183, 4
      %s185 = scalar_lea.vmem %s1, %s184
      %p186 = pneg %p73
      %p187 = pneg %p70
      %p188 = scmp.lt.s32.totalorder %s19, 0
      %s189 = scalar_select %p188, %s19, 0
      %s190 = scalar_lea.vmem %s2, %s189
      %p191 = pneg %p99
      %p192 = pneg %p96
      %p193 = pneg %p127
      %p194 = pneg %p124
      %s195 = smul.u32 32, %s18
      %p196 = scmp.lt.s32.totalorder %s195, 63
      %s197 = scalar_select %p196, %s195, 63
      %p198 = scmp.lt.s32.totalorder %s19, 0
      %s199 = scalar_select %p198, %s19, 0
      %s200 = sadd.s32 %s199, %s197
      %s201 = smul.addr %s200, 4
      %s202 = scalar_lea.vmem %s3, %s201
      %s203 = smul.u32 32, %s18
      %p204 = scmp.lt.s32.totalorder %s203, 63
      %s205 = scalar_select %p204, %s203, 63
      %s206 = smul.addr %s205, 4
      %s207 = scalar_lea.vmem %s0, %s206
      %s208 = smul.u32 32, %s18
      %p209 = scmp.lt.s32.totalorder %s19, 0
      %s210 = scalar_select %p209, %s19, 0
      %s211 = smul.addr %s210, 4
      %s212 = scalar_lea.vmem %s1, %s211
      %p213 = scmp.lt.s32.totalorder %s19, 0
      %s214 = scalar_select %p213, %s19, 0
      %s215 = scalar_lea.vmem %s2, %s214
      %s216 = smul.u32 32, %s18
      %p217 = scmp.lt.s32.totalorder %s216, 63
      %s218 = scalar_select %p217, %s216, 63
      %p219 = scmp.lt.s32.totalorder %s19, 0
      %s220 = scalar_select %p219, %s19, 0
      %s221 = sadd.s32 %s220, %s218
      %s222 = smul.addr %s221, 4
      %s223 = scalar_lea.vmem %s3, %s222
      %s224 = smul.u32 32, %s18
      %v226 = vld [vmem:[%s207] sm:$0xf]
      %v227 = vld [vmem:[%s207 + $0x4] sm:$0xf]
      %v228 = vld [vmem:[%s207 + $0x8] sm:$0xf]
      %v229 = vld [vmem:[%s207 + $0xc] sm:$0xf]
      %v230 = vld [vmem:[%s207 + $0x10] sm:$0xf]
      %v231 = vld [vmem:[%s207 + $0x14] sm:$0xf]
      %v232 = vld [vmem:[%s207 + $0x18] sm:$0xf]
      %v233 = vld [vmem:[%s207 + $0x1c] sm:$0xf]
      %v234 = vld [vmem:[%s207 + $0x20] sm:$0xf]
      %v235 = vld [vmem:[%s207 + $0x24] sm:$0xf]
      %v236 = vld [vmem:[%s207 + $0x28] sm:$0xf]
      %v237 = vld [vmem:[%s207 + $0x2c] sm:$0xf]
      %v238 = vld [vmem:[%s207 + $0x30] sm:$0xf]
      %v239 = vld [vmem:[%s207 + $0x34] sm:$0xf]
      %v240 = vld [vmem:[%s207 + $0x38] sm:$0xf]
      %v241 = vld [vmem:[%s207 + $0x3c] sm:$0xf]
      %v242 = vld [vmem:[%s207 + $0x40] sm:$0xf]
      %v243 = vld [vmem:[%s207 + $0x44] sm:$0xf]
      %v244 = vld [vmem:[%s207 + $0x48] sm:$0xf]
      %v245 = vld [vmem:[%s207 + $0x4c] sm:$0xf]
      %v246 = vld [vmem:[%s207 + $0x50] sm:$0xf]
      %v247 = vld [vmem:[%s207 + $0x54] sm:$0xf]
      %v248 = vld [vmem:[%s207 + $0x58] sm:$0xf]
      %v249 = vld [vmem:[%s207 + $0x5c] sm:$0xf]
      %v250 = vld [vmem:[%s207 + $0x60] sm:$0xf]
      %v251 = vld [vmem:[%s207 + $0x64] sm:$0xf]
      %v252 = vld [vmem:[%s207 + $0x68] sm:$0xf]
      %v253 = vld [vmem:[%s207 + $0x6c] sm:$0xf]
      %v254 = vld [vmem:[%s207 + $0x70] sm:$0xf]
      %v255 = vld [vmem:[%s207 + $0x74] sm:$0xf]
      %v256 = vld [vmem:[%s207 + $0x78] sm:$0xf]
      %v257 = vld [vmem:[%s207 + $0x7c] sm:$0xf]
      %v258 = vld [vmem:[%s212] sm:$0xf]
      %v259 = vld [vmem:[%s212 + $0x4] sm:$0xf]
      %v260 = vld [vmem:[%s212 + $0x8] sm:$0xf]
      %v261 = vld [vmem:[%s212 + $0xc] sm:$0xf]
      %v262 = vld [vmem:[%s212 + $0x10] sm:$0xf]
      %v263 = vld [vmem:[%s212 + $0x14] sm:$0xf]
      %v264 = vld [vmem:[%s212 + $0x18] sm:$0xf]
      %v265 = vld [vmem:[%s212 + $0x1c] sm:$0xf]
      %v266 = vld [vmem:[%s212 + $0x20] sm:$0xf]
      %v267 = vld [vmem:[%s212 + $0x24] sm:$0xf]
      %v268 = vld [vmem:[%s212 + $0x28] sm:$0xf]
      %v269 = vld [vmem:[%s212 + $0x2c] sm:$0xf]
      %v270 = vld [vmem:[%s212 + $0x30] sm:$0xf]
      %v271 = vld [vmem:[%s212 + $0x34] sm:$0xf]
      %v272 = vld [vmem:[%s212 + $0x38] sm:$0xf]
      %v273 = vld [vmem:[%s212 + $0x3c] sm:$0xf]
      %v274 = vld [vmem:[%s215] sm:$0x1]
      %v276 = vlaneseq
      %v277 = vshrl.u32 %v276, 7
      %v278 = vsub.s32 0, %v277
      %v279 = vrot.slane %v274, %v278
      %v313 = vunpack.c.l.b16 %v226
      %v314 = vunpack.c.l.b16 %v227
      %v315 = vunpack.c.l.b16 %v228
      %v316 = vunpack.c.l.b16 %v229
      %v317 = vunpack.c.l.b16 %v230
      %v318 = vunpack.c.l.b16 %v231
      %v319 = vunpack.c.l.b16 %v232
      %v320 = vunpack.c.l.b16 %v233
      %v321 = vunpack.c.l.b16 %v234
      %v322 = vunpack.c.l.b16 %v235
      %v323 = vunpack.c.l.b16 %v236
      %v324 = vunpack.c.l.b16 %v237
      %v325 = vunpack.c.l.b16 %v238
      %v326 = vunpack.c.l.b16 %v239
      %v327 = vunpack.c.l.b16 %v240
      %v328 = vunpack.c.l.b16 %v241
      %v329 = vunpack.c.l.b16 %v242
      %v330 = vunpack.c.l.b16 %v243
      %v331 = vunpack.c.l.b16 %v244
      %v332 = vunpack.c.l.b16 %v245
      %v333 = vunpack.c.l.b16 %v246
      %v334 = vunpack.c.l.b16 %v247
      %v335 = vunpack.c.l.b16 %v248
      %v336 = vunpack.c.l.b16 %v249
      %v337 = vunpack.c.l.b16 %v250
      %v338 = vunpack.c.l.b16 %v251
      %v339 = vunpack.c.l.b16 %v252
      %v340 = vunpack.c.l.b16 %v253
      %v341 = vunpack.c.l.b16 %v254
      %v342 = vunpack.c.l.b16 %v255
      %v343 = vunpack.c.l.b16 %v256
      %v344 = vunpack.c.l.b16 %v257
      %v345 = vpack.c.b16 %v314, %v313
      %v346 = vpack.c.b16 %v316, %v315
      %v347 = vpack.c.b16 %v318, %v317
      %v348 = vpack.c.b16 %v320, %v319
      %v349 = vpack.c.b16 %v322, %v321
      %v350 = vpack.c.b16 %v324, %v323
      %v351 = vpack.c.b16 %v326, %v325
      %v352 = vpack.c.b16 %v328, %v327
      %v353 = vpack.c.b16 %v330, %v329
      %v354 = vpack.c.b16 %v332, %v331
      %v355 = vpack.c.b16 %v334, %v333
      %v356 = vpack.c.b16 %v336, %v335
      %v357 = vpack.c.b16 %v338, %v337
      %v358 = vpack.c.b16 %v340, %v339
      %v359 = vpack.c.b16 %v342, %v341
      %v360 = vpack.c.b16 %v344, %v343
      %v393 = vunpack.c.l.b16 %v258
      %v394 = vunpack.c.l.b16 %v259
      %v395 = vunpack.c.l.b16 %v260
      %v396 = vunpack.c.l.b16 %v261
      %v397 = vunpack.c.l.b16 %v262
      %v398 = vunpack.c.l.b16 %v263
      %v399 = vunpack.c.l.b16 %v264
      %v400 = vunpack.c.l.b16 %v265
      %v401 = vunpack.c.l.b16 %v266
      %v402 = vunpack.c.l.b16 %v267
      %v403 = vunpack.c.l.b16 %v268
      %v404 = vunpack.c.l.b16 %v269
      %v405 = vunpack.c.l.b16 %v270
      %v406 = vunpack.c.l.b16 %v271
      %v407 = vunpack.c.l.b16 %v272
      %v408 = vunpack.c.l.b16 %v273
      %v409 = vpack.c.b16 %v394, %v393
      %v410 = vpack.c.b16 %v396, %v395
      %v411 = vpack.c.b16 %v398, %v397
      %v412 = vpack.c.b16 %v400, %v399
      %v413 = vpack.c.b16 %v402, %v401
      %v414 = vpack.c.b16 %v404, %v403
      %v415 = vpack.c.b16 %v406, %v405
      %v416 = vpack.c.b16 %v408, %v407
      %425 = vmatprep.subr.bf16.mxu0 0
      %426 = vmatpush1.bf16.msra.mxu0 %v416
      %427 = vmatprep.subr.bf16.mxu0 0
      %428 = vmatpush1.bf16.msra.mxu0 %v415
      %429 = vmatprep.subr.bf16.mxu0 0
      %430 = vmatpush1.bf16.msra.mxu0 %v414
      %431 = vmatprep.subr.bf16.mxu0 0
      %432 = vmatpush1.bf16.msra.mxu0 %v413
      %433 = vmatprep.subr.bf16.mxu0 0
      %434 = vmatpush1.bf16.msra.mxu0 %v412
      %435 = vmatprep.subr.bf16.mxu0 0
      %436 = vmatpush1.bf16.msra.mxu0 %v411
      %437 = vmatprep.subr.bf16.mxu0 0
      %438 = vmatpush1.bf16.msra.mxu0 %v410
      %439 = vmatprep.subr.bf16.mxu0 0
      %440 = vmatpush1.bf16.msra.mxu0 %v409
      %441 = vmatprep.subr.bf16.mxu0 0
      %442 = vmatpush2.bf16.msra.mxu0 0
      %443 = vmatprep.subr.bf16.mxu0 0
      %444 = vmatpush2.bf16.msra.mxu0 0
      %445 = vmatprep.subr.bf16.mxu0 0
      %446 = vmatpush2.bf16.msra.mxu0 0
      %447 = vmatprep.subr.bf16.mxu0 0
      %448 = vmatpush2.bf16.msra.mxu0 0
      %449 = vmatprep.subr.bf16.mxu0 0
      %450 = vmatpush2.bf16.msra.mxu0 0
      %451 = vmatprep.subr.bf16.mxu0 0
      %452 = vmatpush2.bf16.msra.mxu0 0
      %453 = vmatprep.subr.bf16.mxu0 0
      %454 = vmatpush2.bf16.msra.mxu0 0
      %455 = vmatprep.subr.bf16.mxu0 0
      %456 = vmatpush2.bf16.msra.mxu0 0
      %457 = vmatprep.mubr.bf16.mxu0 0
      %458 = vmatmul.mubr.bf16.gmra.mxu0 %v345
      %v459 = vpop.f32.mrf.mxu0
      %v460 = vadd.f32 %v279, %v459
      %v461 = vpop.f32.mrf.mxu0
      %v462 = vpop.f32.mrf.mxu0
      %v463 = vadd.f32 %v279, %v462
      %v464 = vpop.f32.mrf.mxu0
      %465 = vmatprep.mubr.bf16.mxu0 0
      %466 = vmatmul.mubr.bf16.gmra.mxu0 %v346
      %v467 = vpop.f32.mrf.mxu0
      %v468 = vadd.f32 %v279, %v467
      %v469 = vpop.f32.mrf.mxu0
      %v470 = vpop.f32.mrf.mxu0
      %v471 = vadd.f32 %v279, %v470
      %v472 = vpop.f32.mrf.mxu0
      %473 = vmatprep.mubr.bf16.mxu0 0
      %474 = vmatmul.mubr.bf16.gmra.mxu0 %v347
      %v475 = vpop.f32.mrf.mxu0
      %v476 = vadd.f32 %v279, %v475
      %v477 = vpop.f32.mrf.mxu0
      %v478 = vpop.f32.mrf.mxu0
      %v479 = vadd.f32 %v279, %v478
      %v480 = vpop.f32.mrf.mxu0
      %481 = vmatprep.mubr.bf16.mxu0 0
      %482 = vmatmul.mubr.bf16.gmra.mxu0 %v348
      %v483 = vpop.f32.mrf.mxu0
      %v484 = vadd.f32 %v279, %v483
      %v485 = vpop.f32.mrf.mxu0
      %v486 = vpop.f32.mrf.mxu0
      %v487 = vadd.f32 %v279, %v486
      %v488 = vpop.f32.mrf.mxu0
      %489 = vmatprep.mubr.bf16.mxu0 0
      %490 = vmatmul.mubr.bf16.gmra.mxu0 %v349
      %v491 = vpop.f32.mrf.mxu0
      %v492 = vadd.f32 %v279, %v491
      %v493 = vpop.f32.mrf.mxu0
      %v494 = vpop.f32.mrf.mxu0
      %v495 = vadd.f32 %v279, %v494
      %v496 = vpop.f32.mrf.mxu0
      %497 = vmatprep.mubr.bf16.mxu0 0
      %498 = vmatmul.mubr.bf16.gmra.mxu0 %v350
      %v499 = vpop.f32.mrf.mxu0
      %v500 = vadd.f32 %v279, %v499
      %v501 = vpop.f32.mrf.mxu0
      %v502 = vpop.f32.mrf.mxu0
      %v503 = vadd.f32 %v279, %v502
      %v504 = vpop.f32.mrf.mxu0
      %505 = vmatprep.mubr.bf16.mxu0 0
      %506 = vmatmul.mubr.bf16.gmra.mxu0 %v351
      %v507 = vpop.f32.mrf.mxu0
      %v508 = vadd.f32 %v279, %v507
      %v509 = vpop.f32.mrf.mxu0
      %v510 = vpop.f32.mrf.mxu0
      %v511 = vadd.f32 %v279, %v510
      %v512 = vpop.f32.mrf.mxu0
      %513 = vmatprep.mubr.bf16.mxu0 0
      %514 = vmatmul.mubr.bf16.gmra.mxu0 %v352
      %v515 = vpop.f32.mrf.mxu0
      %v516 = vadd.f32 %v279, %v515
      %v517 = vpop.f32.mrf.mxu0
      %v518 = vpop.f32.mrf.mxu0
      %v519 = vadd.f32 %v279, %v518
      %v520 = vpop.f32.mrf.mxu0
      %521 = vmatprep.mubr.bf16.mxu0 0
      %522 = vmatmul.mubr.bf16.gmra.mxu0 %v353
      %v523 = vpop.f32.mrf.mxu0
      %v524 = vadd.f32 %v279, %v523
      %v525 = vpop.f32.mrf.mxu0
      %v526 = vpop.f32.mrf.mxu0
      %v527 = vadd.f32 %v279, %v526
      %v528 = vpop.f32.mrf.mxu0
      %529 = vmatprep.mubr.bf16.mxu0 0
      %530 = vmatmul.mubr.bf16.gmra.mxu0 %v354
      %v531 = vpop.f32.mrf.mxu0
      %v532 = vadd.f32 %v279, %v531
      %v533 = vpop.f32.mrf.mxu0
      %v534 = vpop.f32.mrf.mxu0
      %v535 = vadd.f32 %v279, %v534
      %v536 = vpop.f32.mrf.mxu0
      %537 = vmatprep.mubr.bf16.mxu0 0
      %538 = vmatmul.mubr.bf16.gmra.mxu0 %v355
      %v539 = vpop.f32.mrf.mxu0
      %v540 = vadd.f32 %v279, %v539
      %v541 = vpop.f32.mrf.mxu0
      %v542 = vpop.f32.mrf.mxu0
      %v543 = vadd.f32 %v279, %v542
      %v544 = vpop.f32.mrf.mxu0
      %545 = vmatprep.mubr.bf16.mxu0 0
      %546 = vmatmul.mubr.bf16.gmra.mxu0 %v356
      %v547 = vpop.f32.mrf.mxu0
      %v548 = vadd.f32 %v279, %v547
      %v549 = vpop.f32.mrf.mxu0
      %v550 = vpop.f32.mrf.mxu0
      %v551 = vadd.f32 %v279, %v550
      %v552 = vpop.f32.mrf.mxu0
      %553 = vmatprep.mubr.bf16.mxu0 0
      %554 = vmatmul.mubr.bf16.gmra.mxu0 %v357
      %v555 = vpop.f32.mrf.mxu0
      %v556 = vadd.f32 %v279, %v555
      %v557 = vpop.f32.mrf.mxu0
      %v558 = vpop.f32.mrf.mxu0
      %v559 = vadd.f32 %v279, %v558
      %v560 = vpop.f32.mrf.mxu0
      %561 = vmatprep.mubr.bf16.mxu0 0
      %562 = vmatmul.mubr.bf16.gmra.mxu0 %v358
      %v563 = vpop.f32.mrf.mxu0
      %v564 = vadd.f32 %v279, %v563
      %v565 = vpop.f32.mrf.mxu0
      %v566 = vpop.f32.mrf.mxu0
      %v567 = vadd.f32 %v279, %v566
      %v568 = vpop.f32.mrf.mxu0
      %569 = vmatprep.mubr.bf16.mxu0 0
      %570 = vmatmul.mubr.bf16.gmra.mxu0 %v359
      %v571 = vpop.f32.mrf.mxu0
      %v572 = vadd.f32 %v279, %v571
      %v573 = vpop.f32.mrf.mxu0
      %v574 = vpop.f32.mrf.mxu0
      %v575 = vadd.f32 %v279, %v574
      %v576 = vpop.f32.mrf.mxu0
      %577 = vmatprep.mubr.bf16.mxu0 0
      %578 = vmatmul.mubr.bf16.gmra.mxu0 %v360
      %v579 = vpop.f32.mrf.mxu0
      %v580 = vadd.f32 %v279, %v579
      %v581 = vpop.f32.mrf.mxu0
      %v582 = vpop.f32.mrf.mxu0
      %v583 = vadd.f32 %v279, %v582
      %v584 = vpop.f32.mrf.mxu0
      %585 = vdwg.mxu0
      %v586 = vmax.f32 %v460, 0.0
      %v587 = vmax.f32 %v463, 0.0
      %v588 = vmax.f32 %v468, 0.0
      %v589 = vmax.f32 %v471, 0.0
      %v590 = vmax.f32 %v476, 0.0
      %v591 = vmax.f32 %v479, 0.0
      %v592 = vmax.f32 %v484, 0.0
      %v593 = vmax.f32 %v487, 0.0
      %v594 = vmax.f32 %v492, 0.0
      %v595 = vmax.f32 %v495, 0.0
      %v596 = vmax.f32 %v500, 0.0
      %v597 = vmax.f32 %v503, 0.0
      %v598 = vmax.f32 %v508, 0.0
      %v599 = vmax.f32 %v511, 0.0
      %v600 = vmax.f32 %v516, 0.0
      %v601 = vmax.f32 %v519, 0.0
      %v602 = vmax.f32 %v524, 0.0
      %v603 = vmax.f32 %v527, 0.0
      %v604 = vmax.f32 %v532, 0.0
      %v605 = vmax.f32 %v535, 0.0
      %v606 = vmax.f32 %v540, 0.0
      %v607 = vmax.f32 %v543, 0.0
      %v608 = vmax.f32 %v548, 0.0
      %v609 = vmax.f32 %v551, 0.0
      %v610 = vmax.f32 %v556, 0.0
      %v611 = vmax.f32 %v559, 0.0
      %v612 = vmax.f32 %v564, 0.0
      %v613 = vmax.f32 %v567, 0.0
      %v614 = vmax.f32 %v572, 0.0
      %v615 = vmax.f32 %v575, 0.0
      %v616 = vmax.f32 %v580, 0.0
      %v617 = vmax.f32 %v583, 0.0
      %v618 = vand.u32 2147483647, %v460
      %v619 = vand.u32 2147483647, %v463
      %v620 = vand.u32 2147483647, %v468
      %v621 = vand.u32 2147483647, %v471
      %v622 = vand.u32 2147483647, %v476
      %v623 = vand.u32 2147483647, %v479
      %v624 = vand.u32 2147483647, %v484
      %v625 = vand.u32 2147483647, %v487
      %v626 = vand.u32 2147483647, %v492
      %v627 = vand.u32 2147483647, %v495
      %v628 = vand.u32 2147483647, %v500
      %v629 = vand.u32 2147483647, %v503
      %v630 = vand.u32 2147483647, %v508
      %v631 = vand.u32 2147483647, %v511
      %v632 = vand.u32 2147483647, %v516
      %v633 = vand.u32 2147483647, %v519
      %v634 = vand.u32 2147483647, %v524
      %v635 = vand.u32 2147483647, %v527
      %v636 = vand.u32 2147483647, %v532
      %v637 = vand.u32 2147483647, %v535
      %v638 = vand.u32 2147483647, %v540
      %v639 = vand.u32 2147483647, %v543
      %v640 = vand.u32 2147483647, %v548
      %v641 = vand.u32 2147483647, %v551
      %v642 = vand.u32 2147483647, %v556
      %v643 = vand.u32 2147483647, %v559
      %v644 = vand.u32 2147483647, %v564
      %v645 = vand.u32 2147483647, %v567
      %v646 = vand.u32 2147483647, %v572
      %v647 = vand.u32 2147483647, %v575
      %v648 = vand.u32 2147483647, %v580
      %v649 = vand.u32 2147483647, %v583
      %v650 = vsub.f32 0.0, %v618
      %v651 = vsub.f32 0.0, %v619
      %v652 = vsub.f32 0.0, %v620
      %v653 = vsub.f32 0.0, %v621
      %v654 = vsub.f32 0.0, %v622
      %v655 = vsub.f32 0.0, %v623
      %v656 = vsub.f32 0.0, %v624
      %v657 = vsub.f32 0.0, %v625
      %v658 = vsub.f32 0.0, %v626
      %v659 = vsub.f32 0.0, %v627
      %v660 = vsub.f32 0.0, %v628
      %v661 = vsub.f32 0.0, %v629
      %v662 = vsub.f32 0.0, %v630
      %v663 = vsub.f32 0.0, %v631
      %v664 = vsub.f32 0.0, %v632
      %v665 = vsub.f32 0.0, %v633
      %v666 = vsub.f32 0.0, %v634
      %v667 = vsub.f32 0.0, %v635
      %v668 = vsub.f32 0.0, %v636
      %v669 = vsub.f32 0.0, %v637
      %v670 = vsub.f32 0.0, %v638
      %v671 = vsub.f32 0.0, %v639
      %v672 = vsub.f32 0.0, %v640
      %v673 = vsub.f32 0.0, %v641
      %v674 = vsub.f32 0.0, %v642
      %v675 = vsub.f32 0.0, %v643
      %v676 = vsub.f32 0.0, %v644
      %v677 = vsub.f32 0.0, %v645
      %v678 = vsub.f32 0.0, %v646
      %v679 = vsub.f32 0.0, %v647
      %v680 = vsub.f32 0.0, %v648
      %v681 = vsub.f32 0.0, %v649
      %v682 = vmul.f32 %v650, 1.442695
      %v683 = vpow.pop %v682
      %v684 = vmul.f32 %v651, 1.442695
      %v685 = vpow.pop %v684
      %v686 = vmul.f32 %v652, 1.442695
      %v687 = vpow.pop %v686
      %v688 = vmul.f32 %v653, 1.442695
      %v689 = vpow.pop %v688
      %v690 = vmul.f32 %v654, 1.442695
      %v691 = vpow.pop %v690
      %v692 = vmul.f32 %v655, 1.442695
      %v693 = vpow.pop %v692
      %v694 = vmul.f32 %v656, 1.442695
      %v695 = vpow.pop %v694
      %v696 = vmul.f32 %v657, 1.442695
      %v697 = vpow.pop %v696
      %v698 = vmul.f32 %v658, 1.442695
      %v699 = vpow.pop %v698
      %v700 = vmul.f32 %v659, 1.442695
      %v701 = vpow.pop %v700
      %v702 = vmul.f32 %v660, 1.442695
      %v703 = vpow.pop %v702
      %v704 = vmul.f32 %v661, 1.442695
      %v705 = vpow.pop %v704
      %v706 = vmul.f32 %v662, 1.442695
      %v707 = vpow.pop %v706
      %v708 = vmul.f32 %v663, 1.442695
      %v709 = vpow.pop %v708
      %v710 = vmul.f32 %v664, 1.442695
      %v711 = vpow.pop %v710
      %v712 = vmul.f32 %v665, 1.442695
      %v713 = vpow.pop %v712
      %v714 = vmul.f32 %v666, 1.442695
      %v715 = vpow.pop %v714
      %v716 = vmul.f32 %v667, 1.442695
      %v717 = vpow.pop %v716
      %v718 = vmul.f32 %v668, 1.442695
      %v719 = vpow.pop %v718
      %v720 = vmul.f32 %v669, 1.442695
      %v721 = vpow.pop %v720
      %v722 = vmul.f32 %v670, 1.442695
      %v723 = vpow.pop %v722
      %v724 = vmul.f32 %v671, 1.442695
      %v725 = vpow.pop %v724
      %v726 = vmul.f32 %v672, 1.442695
      %v727 = vpow.pop %v726
      %v728 = vmul.f32 %v673, 1.442695
      %v729 = vpow.pop %v728
      %v730 = vmul.f32 %v674, 1.442695
      %v731 = vpow.pop %v730
      %v732 = vmul.f32 %v675, 1.442695
      %v733 = vpow.pop %v732
      %v734 = vmul.f32 %v676, 1.442695
      %v735 = vpow.pop %v734
      %v736 = vmul.f32 %v677, 1.442695
      %v737 = vpow.pop %v736
      %v738 = vmul.f32 %v678, 1.442695
      %v739 = vpow.pop %v738
      %v740 = vmul.f32 %v679, 1.442695
      %v741 = vpow.pop %v740
      %v742 = vmul.f32 %v680, 1.442695
      %v743 = vpow.pop %v742
      %v744 = vmul.f32 %v681, 1.442695
      %v745 = vpow.pop %v744
      %v746 = vadd.f32 %v683, 1.0
      %v747 = vlog2.pop %v746
      %v748 = vmul.f32 %v747, 0.6931472
      %v749 = vmul.f32 -0.5, %v683
      %v750 = vadd.f32 %v749, 1.0
      %v751 = vmul.f32 %v750, %v683
      %v752 = vand.u32 2147483647, %v683
      %vm753 = vcmp.lt.f32.partialorder %v752, 0.0004427343
      %v754 = vsel %vm753, %v751, %v748
      %v755 = vadd.f32 %v685, 1.0
      %v756 = vlog2.pop %v755
      %v757 = vmul.f32 %v756, 0.6931472
      %v758 = vmul.f32 -0.5, %v685
      %v759 = vadd.f32 %v758, 1.0
      %v760 = vmul.f32 %v759, %v685
      %v761 = vand.u32 2147483647, %v685
      %vm762 = vcmp.lt.f32.partialorder %v761, 0.0004427343
      %v763 = vsel %vm762, %v760, %v757
      %v764 = vadd.f32 %v687, 1.0
      %v765 = vlog2.pop %v764
      %v766 = vmul.f32 %v765, 0.6931472
      %v767 = vmul.f32 -0.5, %v687
      %v768 = vadd.f32 %v767, 1.0
      %v769 = vmul.f32 %v768, %v687
      %v770 = vand.u32 2147483647, %v687
      %vm771 = vcmp.lt.f32.partialorder %v770, 0.0004427343
      %v772 = vsel %vm771, %v769, %v766
      %v773 = vadd.f32 %v689, 1.0
      %v774 = vlog2.pop %v773
      %v775 = vmul.f32 %v774, 0.6931472
      %v776 = vmul.f32 -0.5, %v689
      %v777 = vadd.f32 %v776, 1.0
      %v778 = vmul.f32 %v777, %v689
      %v779 = vand.u32 2147483647, %v689
      %vm780 = vcmp.lt.f32.partialorder %v779, 0.0004427343
      %v781 = vsel %vm780, %v778, %v775
      %v782 = vadd.f32 %v691, 1.0
      %v783 = vlog2.pop %v782
      %v784 = vmul.f32 %v783, 0.6931472
      %v785 = vmul.f32 -0.5, %v691
      %v786 = vadd.f32 %v785, 1.0
      %v787 = vmul.f32 %v786, %v691
      %v788 = vand.u32 2147483647, %v691
      %vm789 = vcmp.lt.f32.partialorder %v788, 0.0004427343
      %v790 = vsel %vm789, %v787, %v784
      %v791 = vadd.f32 %v693, 1.0
      %v792 = vlog2.pop %v791
      %v793 = vmul.f32 %v792, 0.6931472
      %v794 = vmul.f32 -0.5, %v693
      %v795 = vadd.f32 %v794, 1.0
      %v796 = vmul.f32 %v795, %v693
      %v797 = vand.u32 2147483647, %v693
      %vm798 = vcmp.lt.f32.partialorder %v797, 0.0004427343
      %v799 = vsel %vm798, %v796, %v793
      %v800 = vadd.f32 %v695, 1.0
      %v801 = vlog2.pop %v800
      %v802 = vmul.f32 %v801, 0.6931472
      %v803 = vmul.f32 -0.5, %v695
      %v804 = vadd.f32 %v803, 1.0
      %v805 = vmul.f32 %v804, %v695
      %v806 = vand.u32 2147483647, %v695
      %vm807 = vcmp.lt.f32.partialorder %v806, 0.0004427343
      %v808 = vsel %vm807, %v805, %v802
      %v809 = vadd.f32 %v697, 1.0
      %v810 = vlog2.pop %v809
      %v811 = vmul.f32 %v810, 0.6931472
      %v812 = vmul.f32 -0.5, %v697
      %v813 = vadd.f32 %v812, 1.0
      %v814 = vmul.f32 %v813, %v697
      %v815 = vand.u32 2147483647, %v697
      %vm816 = vcmp.lt.f32.partialorder %v815, 0.0004427343
      %v817 = vsel %vm816, %v814, %v811
      %v818 = vadd.f32 %v699, 1.0
      %v819 = vlog2.pop %v818
      %v820 = vmul.f32 %v819, 0.6931472
      %v821 = vmul.f32 -0.5, %v699
      %v822 = vadd.f32 %v821, 1.0
      %v823 = vmul.f32 %v822, %v699
      %v824 = vand.u32 2147483647, %v699
      %vm825 = vcmp.lt.f32.partialorder %v824, 0.0004427343
      %v826 = vsel %vm825, %v823, %v820
      %v827 = vadd.f32 %v701, 1.0
      %v828 = vlog2.pop %v827
      %v829 = vmul.f32 %v828, 0.6931472
      %v830 = vmul.f32 -0.5, %v701
      %v831 = vadd.f32 %v830, 1.0
      %v832 = vmul.f32 %v831, %v701
      %v833 = vand.u32 2147483647, %v701
      %vm834 = vcmp.lt.f32.partialorder %v833, 0.0004427343
      %v835 = vsel %vm834, %v832, %v829
      %v836 = vadd.f32 %v703, 1.0
      %v837 = vlog2.pop %v836
      %v838 = vmul.f32 %v837, 0.6931472
      %v839 = vmul.f32 -0.5, %v703
      %v840 = vadd.f32 %v839, 1.0
      %v841 = vmul.f32 %v840, %v703
      %v842 = vand.u32 2147483647, %v703
      %vm843 = vcmp.lt.f32.partialorder %v842, 0.0004427343
      %v844 = vsel %vm843, %v841, %v838
      %v845 = vadd.f32 %v705, 1.0
      %v846 = vlog2.pop %v845
      %v847 = vmul.f32 %v846, 0.6931472
      %v848 = vmul.f32 -0.5, %v705
      %v849 = vadd.f32 %v848, 1.0
      %v850 = vmul.f32 %v849, %v705
      %v851 = vand.u32 2147483647, %v705
      %vm852 = vcmp.lt.f32.partialorder %v851, 0.0004427343
      %v853 = vsel %vm852, %v850, %v847
      %v854 = vadd.f32 %v707, 1.0
      %v855 = vlog2.pop %v854
      %v856 = vmul.f32 %v855, 0.6931472
      %v857 = vmul.f32 -0.5, %v707
      %v858 = vadd.f32 %v857, 1.0
      %v859 = vmul.f32 %v858, %v707
      %v860 = vand.u32 2147483647, %v707
      %vm861 = vcmp.lt.f32.partialorder %v860, 0.0004427343
      %v862 = vsel %vm861, %v859, %v856
      %v863 = vadd.f32 %v709, 1.0
      %v864 = vlog2.pop %v863
      %v865 = vmul.f32 %v864, 0.6931472
      %v866 = vmul.f32 -0.5, %v709
      %v867 = vadd.f32 %v866, 1.0
      %v868 = vmul.f32 %v867, %v709
      %v869 = vand.u32 2147483647, %v709
      %vm870 = vcmp.lt.f32.partialorder %v869, 0.0004427343
      %v871 = vsel %vm870, %v868, %v865
      %v872 = vadd.f32 %v711, 1.0
      %v873 = vlog2.pop %v872
      %v874 = vmul.f32 %v873, 0.6931472
      %v875 = vmul.f32 -0.5, %v711
      %v876 = vadd.f32 %v875, 1.0
      %v877 = vmul.f32 %v876, %v711
      %v878 = vand.u32 2147483647, %v711
      %vm879 = vcmp.lt.f32.partialorder %v878, 0.0004427343
      %v880 = vsel %vm879, %v877, %v874
      %v881 = vadd.f32 %v713, 1.0
      %v882 = vlog2.pop %v881
      %v883 = vmul.f32 %v882, 0.6931472
      %v884 = vmul.f32 -0.5, %v713
      %v885 = vadd.f32 %v884, 1.0
      %v886 = vmul.f32 %v885, %v713
      %v887 = vand.u32 2147483647, %v713
      %vm888 = vcmp.lt.f32.partialorder %v887, 0.0004427343
      %v889 = vsel %vm888, %v886, %v883
      %v890 = vadd.f32 %v715, 1.0
      %v891 = vlog2.pop %v890
      %v892 = vmul.f32 %v891, 0.6931472
      %v893 = vmul.f32 -0.5, %v715
      %v894 = vadd.f32 %v893, 1.0
      %v895 = vmul.f32 %v894, %v715
      %v896 = vand.u32 2147483647, %v715
      %vm897 = vcmp.lt.f32.partialorder %v896, 0.0004427343
      %v898 = vsel %vm897, %v895, %v892
      %v899 = vadd.f32 %v717, 1.0
      %v900 = vlog2.pop %v899
      %v901 = vmul.f32 %v900, 0.6931472
      %v902 = vmul.f32 -0.5, %v717
      %v903 = vadd.f32 %v902, 1.0
      %v904 = vmul.f32 %v903, %v717
      %v905 = vand.u32 2147483647, %v717
      %vm906 = vcmp.lt.f32.partialorder %v905, 0.0004427343
      %v907 = vsel %vm906, %v904, %v901
      %v908 = vadd.f32 %v719, 1.0
      %v909 = vlog2.pop %v908
      %v910 = vmul.f32 %v909, 0.6931472
      %v911 = vmul.f32 -0.5, %v719
      %v912 = vadd.f32 %v911, 1.0
      %v913 = vmul.f32 %v912, %v719
      %v914 = vand.u32 2147483647, %v719
      %vm915 = vcmp.lt.f32.partialorder %v914, 0.0004427343
      %v916 = vsel %vm915, %v913, %v910
      %v917 = vadd.f32 %v721, 1.0
      %v918 = vlog2.pop %v917
      %v919 = vmul.f32 %v918, 0.6931472
      %v920 = vmul.f32 -0.5, %v721
      %v921 = vadd.f32 %v920, 1.0
      %v922 = vmul.f32 %v921, %v721
      %v923 = vand.u32 2147483647, %v721
      %vm924 = vcmp.lt.f32.partialorder %v923, 0.0004427343
      %v925 = vsel %vm924, %v922, %v919
      %v926 = vadd.f32 %v723, 1.0
      %v927 = vlog2.pop %v926
      %v928 = vmul.f32 %v927, 0.6931472
      %v929 = vmul.f32 -0.5, %v723
      %v930 = vadd.f32 %v929, 1.0
      %v931 = vmul.f32 %v930, %v723
      %v932 = vand.u32 2147483647, %v723
      %vm933 = vcmp.lt.f32.partialorder %v932, 0.0004427343
      %v934 = vsel %vm933, %v931, %v928
      %v935 = vadd.f32 %v725, 1.0
      %v936 = vlog2.pop %v935
      %v937 = vmul.f32 %v936, 0.6931472
      %v938 = vmul.f32 -0.5, %v725
      %v939 = vadd.f32 %v938, 1.0
      %v940 = vmul.f32 %v939, %v725
      %v941 = vand.u32 2147483647, %v725
      %vm942 = vcmp.lt.f32.partialorder %v941, 0.0004427343
      %v943 = vsel %vm942, %v940, %v937
      %v944 = vadd.f32 %v727, 1.0
      %v945 = vlog2.pop %v944
      %v946 = vmul.f32 %v945, 0.6931472
      %v947 = vmul.f32 -0.5, %v727
      %v948 = vadd.f32 %v947, 1.0
      %v949 = vmul.f32 %v948, %v727
      %v950 = vand.u32 2147483647, %v727
      %vm951 = vcmp.lt.f32.partialorder %v950, 0.0004427343
      %v952 = vsel %vm951, %v949, %v946
      %v953 = vadd.f32 %v729, 1.0
      %v954 = vlog2.pop %v953
      %v955 = vmul.f32 %v954, 0.6931472
      %v956 = vmul.f32 -0.5, %v729
      %v957 = vadd.f32 %v956, 1.0
      %v958 = vmul.f32 %v957, %v729
      %v959 = vand.u32 2147483647, %v729
      %vm960 = vcmp.lt.f32.partialorder %v959, 0.0004427343
      %v961 = vsel %vm960, %v958, %v955
      %v962 = vadd.f32 %v731, 1.0
      %v963 = vlog2.pop %v962
      %v964 = vmul.f32 %v963, 0.6931472
      %v965 = vmul.f32 -0.5, %v731
      %v966 = vadd.f32 %v965, 1.0
      %v967 = vmul.f32 %v966, %v731
      %v968 = vand.u32 2147483647, %v731
      %vm969 = vcmp.lt.f32.partialorder %v968, 0.0004427343
      %v970 = vsel %vm969, %v967, %v964
      %v971 = vadd.f32 %v733, 1.0
      %v972 = vlog2.pop %v971
      %v973 = vmul.f32 %v972, 0.6931472
      %v974 = vmul.f32 -0.5, %v733
      %v975 = vadd.f32 %v974, 1.0
      %v976 = vmul.f32 %v975, %v733
      %v977 = vand.u32 2147483647, %v733
      %vm978 = vcmp.lt.f32.partialorder %v977, 0.0004427343
      %v979 = vsel %vm978, %v976, %v973
      %v980 = vadd.f32 %v735, 1.0
      %v981 = vlog2.pop %v980
      %v982 = vmul.f32 %v981, 0.6931472
      %v983 = vmul.f32 -0.5, %v735
      %v984 = vadd.f32 %v983, 1.0
      %v985 = vmul.f32 %v984, %v735
      %v986 = vand.u32 2147483647, %v735
      %vm987 = vcmp.lt.f32.partialorder %v986, 0.0004427343
      %v988 = vsel %vm987, %v985, %v982
      %v989 = vadd.f32 %v737, 1.0
      %v990 = vlog2.pop %v989
      %v991 = vmul.f32 %v990, 0.6931472
      %v992 = vmul.f32 -0.5, %v737
      %v993 = vadd.f32 %v992, 1.0
      %v994 = vmul.f32 %v993, %v737
      %v995 = vand.u32 2147483647, %v737
      %vm996 = vcmp.lt.f32.partialorder %v995, 0.0004427343
      %v997 = vsel %vm996, %v994, %v991
      %v998 = vadd.f32 %v739, 1.0
      %v999 = vlog2.pop %v998
      %v1000 = vmul.f32 %v999, 0.6931472
      %v1001 = vmul.f32 -0.5, %v739
      %v1002 = vadd.f32 %v1001, 1.0
      %v1003 = vmul.f32 %v1002, %v739
      %v1004 = vand.u32 2147483647, %v739
      %vm1005 = vcmp.lt.f32.partialorder %v1004, 0.0004427343
      %v1006 = vsel %vm1005, %v1003, %v1000
      %v1007 = vadd.f32 %v741, 1.0
      %v1008 = vlog2.pop %v1007
      %v1009 = vmul.f32 %v1008, 0.6931472
      %v1010 = vmul.f32 -0.5, %v741
      %v1011 = vadd.f32 %v1010, 1.0
      %v1012 = vmul.f32 %v1011, %v741
      %v1013 = vand.u32 2147483647, %v741
      %vm1014 = vcmp.lt.f32.partialorder %v1013, 0.0004427343
      %v1015 = vsel %vm1014, %v1012, %v1009
      %v1016 = vadd.f32 %v743, 1.0
      %v1017 = vlog2.pop %v1016
      %v1018 = vmul.f32 %v1017, 0.6931472
      %v1019 = vmul.f32 -0.5, %v743
      %v1020 = vadd.f32 %v1019, 1.0
      %v1021 = vmul.f32 %v1020, %v743
      %v1022 = vand.u32 2147483647, %v743
      %vm1023 = vcmp.lt.f32.partialorder %v1022, 0.0004427343
      %v1024 = vsel %vm1023, %v1021, %v1018
      %v1025 = vadd.f32 %v745, 1.0
      %v1026 = vlog2.pop %v1025
      %v1027 = vmul.f32 %v1026, 0.6931472
      %v1028 = vmul.f32 -0.5, %v745
      %v1029 = vadd.f32 %v1028, 1.0
      %v1030 = vmul.f32 %v1029, %v745
      %v1031 = vand.u32 2147483647, %v745
      %vm1032 = vcmp.lt.f32.partialorder %v1031, 0.0004427343
      %v1033 = vsel %vm1032, %v1030, %v1027
      %v1034 = vadd.f32 %v586, %v754
      %v1035 = vadd.f32 %v587, %v763
      %v1036 = vadd.f32 %v588, %v772
      %v1037 = vadd.f32 %v589, %v781
      %v1038 = vadd.f32 %v590, %v790
      %v1039 = vadd.f32 %v591, %v799
      %v1040 = vadd.f32 %v592, %v808
      %v1041 = vadd.f32 %v593, %v817
      %v1042 = vadd.f32 %v594, %v826
      %v1043 = vadd.f32 %v595, %v835
      %v1044 = vadd.f32 %v596, %v844
      %v1045 = vadd.f32 %v597, %v853
      %v1046 = vadd.f32 %v598, %v862
      %v1047 = vadd.f32 %v599, %v871
      %v1048 = vadd.f32 %v600, %v880
      %v1049 = vadd.f32 %v601, %v889
      %v1050 = vadd.f32 %v602, %v898
      %v1051 = vadd.f32 %v603, %v907
      %v1052 = vadd.f32 %v604, %v916
      %v1053 = vadd.f32 %v605, %v925
      %v1054 = vadd.f32 %v606, %v934
      %v1055 = vadd.f32 %v607, %v943
      %v1056 = vadd.f32 %v608, %v952
      %v1057 = vadd.f32 %v609, %v961
      %v1058 = vadd.f32 %v610, %v970
      %v1059 = vadd.f32 %v611, %v979
      %v1060 = vadd.f32 %v612, %v988
      %v1061 = vadd.f32 %v613, %v997
      %v1062 = vadd.f32 %v614, %v1006
      %v1063 = vadd.f32 %v615, %v1015
      %v1064 = vadd.f32 %v616, %v1024
      %v1065 = vadd.f32 %v617, %v1033
      %v1066 = vtanh.pop %v1034
      %v1067 = vtanh.pop %v1035
      %v1068 = vtanh.pop %v1036
      %v1069 = vtanh.pop %v1037
      %v1070 = vtanh.pop %v1038
      %v1071 = vtanh.pop %v1039
      %v1072 = vtanh.pop %v1040
      %v1073 = vtanh.pop %v1041
      %v1074 = vtanh.pop %v1042
      %v1075 = vtanh.pop %v1043
      %v1076 = vtanh.pop %v1044
      %v1077 = vtanh.pop %v1045
      %v1078 = vtanh.pop %v1046
      %v1079 = vtanh.pop %v1047
      %v1080 = vtanh.pop %v1048
      %v1081 = vtanh.pop %v1049
      %v1082 = vtanh.pop %v1050
      %v1083 = vtanh.pop %v1051
      %v1084 = vtanh.pop %v1052
      %v1085 = vtanh.pop %v1053
      %v1086 = vtanh.pop %v1054
      %v1087 = vtanh.pop %v1055
      %v1088 = vtanh.pop %v1056
      %v1089 = vtanh.pop %v1057
      %v1090 = vtanh.pop %v1058
      %v1091 = vtanh.pop %v1059
      %v1092 = vtanh.pop %v1060
      %v1093 = vtanh.pop %v1061
      %v1094 = vtanh.pop %v1062
      %v1095 = vtanh.pop %v1063
      %v1096 = vtanh.pop %v1064
      %v1097 = vtanh.pop %v1065
      %v1098 = vmul.f32 %v460, %v1066
      %v1099 = vmul.f32 %v463, %v1067
      %v1100 = vmul.f32 %v468, %v1068
      %v1101 = vmul.f32 %v471, %v1069
      %v1102 = vmul.f32 %v476, %v1070
      %v1103 = vmul.f32 %v479, %v1071
      %v1104 = vmul.f32 %v484, %v1072
      %v1105 = vmul.f32 %v487, %v1073
      %v1106 = vmul.f32 %v492, %v1074
      %v1107 = vmul.f32 %v495, %v1075
      %v1108 = vmul.f32 %v500, %v1076
      %v1109 = vmul.f32 %v503, %v1077
      %v1110 = vmul.f32 %v508, %v1078
      %v1111 = vmul.f32 %v511, %v1079
      %v1112 = vmul.f32 %v516, %v1080
      %v1113 = vmul.f32 %v519, %v1081
      %v1114 = vmul.f32 %v524, %v1082
      %v1115 = vmul.f32 %v527, %v1083
      %v1116 = vmul.f32 %v532, %v1084
      %v1117 = vmul.f32 %v535, %v1085
      %v1118 = vmul.f32 %v540, %v1086
      %v1119 = vmul.f32 %v543, %v1087
      %v1120 = vmul.f32 %v548, %v1088
      %v1121 = vmul.f32 %v551, %v1089
      %v1122 = vmul.f32 %v556, %v1090
      %v1123 = vmul.f32 %v559, %v1091
      %v1124 = vmul.f32 %v564, %v1092
      %v1125 = vmul.f32 %v567, %v1093
      %v1126 = vmul.f32 %v572, %v1094
      %v1127 = vmul.f32 %v575, %v1095
      %v1128 = vmul.f32 %v580, %v1096
      %v1129 = vmul.f32 %v583, %v1097
      %v1130 = vpack.c.bf16 %v1099, %v1098
      %v1131 = vpack.c.bf16 %v1101, %v1100
      %v1132 = vpack.c.bf16 %v1103, %v1102
      %v1133 = vpack.c.bf16 %v1105, %v1104
      %v1134 = vpack.c.bf16 %v1107, %v1106
      %v1135 = vpack.c.bf16 %v1109, %v1108
      %v1136 = vpack.c.bf16 %v1111, %v1110
      %v1137 = vpack.c.bf16 %v1113, %v1112
      %v1138 = vpack.c.bf16 %v1115, %v1114
      %v1139 = vpack.c.bf16 %v1117, %v1116
      %v1140 = vpack.c.bf16 %v1119, %v1118
      %v1141 = vpack.c.bf16 %v1121, %v1120
      %v1142 = vpack.c.bf16 %v1123, %v1122
      %v1143 = vpack.c.bf16 %v1125, %v1124
      %v1144 = vpack.c.bf16 %v1127, %v1126
      %v1145 = vpack.c.bf16 %v1129, %v1128
      %v1162 = vunpack.c.l.b16 %v1130
      %v1163 = vunpack.c.h.b16 %v1130
      %v1164 = vunpack.c.l.b16 %v1131
      %v1165 = vunpack.c.h.b16 %v1131
      %v1166 = vunpack.c.l.b16 %v1132
      %v1167 = vunpack.c.h.b16 %v1132
      %v1168 = vunpack.c.l.b16 %v1133
      %v1169 = vunpack.c.h.b16 %v1133
      %v1170 = vunpack.c.l.b16 %v1134
      %v1171 = vunpack.c.h.b16 %v1134
      %v1172 = vunpack.c.l.b16 %v1135
      %v1173 = vunpack.c.h.b16 %v1135
      %v1174 = vunpack.c.l.b16 %v1136
      %v1175 = vunpack.c.h.b16 %v1136
      %v1176 = vunpack.c.l.b16 %v1137
      %v1177 = vunpack.c.h.b16 %v1137
      %v1178 = vunpack.c.l.b16 %v1138
      %v1179 = vunpack.c.h.b16 %v1138
      %v1180 = vunpack.c.l.b16 %v1139
      %v1181 = vunpack.c.h.b16 %v1139
      %v1182 = vunpack.c.l.b16 %v1140
      %v1183 = vunpack.c.h.b16 %v1140
      %v1184 = vunpack.c.l.b16 %v1141
      %v1185 = vunpack.c.h.b16 %v1141
      %v1186 = vunpack.c.l.b16 %v1142
      %v1187 = vunpack.c.h.b16 %v1142
      %v1188 = vunpack.c.l.b16 %v1143
      %v1189 = vunpack.c.h.b16 %v1143
      %v1190 = vunpack.c.l.b16 %v1144
      %v1191 = vunpack.c.h.b16 %v1144
      %v1192 = vunpack.c.l.b16 %v1145
      %v1193 = vunpack.c.h.b16 %v1145
      %v1194 = vpack.c.b16 %v1162, %v1162
      %v1195 = vpack.c.b16 %v1163, %v1163
      %v1196 = vpack.c.b16 %v1164, %v1164
      %v1197 = vpack.c.b16 %v1165, %v1165
      %v1198 = vpack.c.b16 %v1166, %v1166
      %v1199 = vpack.c.b16 %v1167, %v1167
      %v1200 = vpack.c.b16 %v1168, %v1168
      %v1201 = vpack.c.b16 %v1169, %v1169
      %v1202 = vpack.c.b16 %v1170, %v1170
      %v1203 = vpack.c.b16 %v1171, %v1171
      %v1204 = vpack.c.b16 %v1172, %v1172
      %v1205 = vpack.c.b16 %v1173, %v1173
      %v1206 = vpack.c.b16 %v1174, %v1174
      %v1207 = vpack.c.b16 %v1175, %v1175
      %v1208 = vpack.c.b16 %v1176, %v1176
      %v1209 = vpack.c.b16 %v1177, %v1177
      %v1210 = vpack.c.b16 %v1178, %v1178
      %v1211 = vpack.c.b16 %v1179, %v1179
      %v1212 = vpack.c.b16 %v1180, %v1180
      %v1213 = vpack.c.b16 %v1181, %v1181
      %v1214 = vpack.c.b16 %v1182, %v1182
      %v1215 = vpack.c.b16 %v1183, %v1183
      %v1216 = vpack.c.b16 %v1184, %v1184
      %v1217 = vpack.c.b16 %v1185, %v1185
      %v1218 = vpack.c.b16 %v1186, %v1186
      %v1219 = vpack.c.b16 %v1187, %v1187
      %v1220 = vpack.c.b16 %v1188, %v1188
      %v1221 = vpack.c.b16 %v1189, %v1189
      %v1222 = vpack.c.b16 %v1190, %v1190
      %v1223 = vpack.c.b16 %v1191, %v1191
      %v1224 = vpack.c.b16 %v1192, %v1192
      %v1225 = vpack.c.b16 %v1193, %v1193
      %1258 = vst [vmem:[%s223] sm:$0xf] %v1194
      %1259 = vst [vmem:[%s223 + $0x4] sm:$0xf] %v1195
      %1260 = vst [vmem:[%s223 + $0x8] sm:$0xf] %v1196
      %1261 = vst [vmem:[%s223 + $0xc] sm:$0xf] %v1197
      %1262 = vst [vmem:[%s223 + $0x10] sm:$0xf] %v1198
      %1263 = vst [vmem:[%s223 + $0x14] sm:$0xf] %v1199
      %1264 = vst [vmem:[%s223 + $0x18] sm:$0xf] %v1200
      %1265 = vst [vmem:[%s223 + $0x1c] sm:$0xf] %v1201
      %1266 = vst [vmem:[%s223 + $0x20] sm:$0xf] %v1202
      %1267 = vst [vmem:[%s223 + $0x24] sm:$0xf] %v1203
      %1268 = vst [vmem:[%s223 + $0x28] sm:$0xf] %v1204
      %1269 = vst [vmem:[%s223 + $0x2c] sm:$0xf] %v1205
      %1270 = vst [vmem:[%s223 + $0x30] sm:$0xf] %v1206
      %1271 = vst [vmem:[%s223 + $0x34] sm:$0xf] %v1207
      %1272 = vst [vmem:[%s223 + $0x38] sm:$0xf] %v1208
      %1273 = vst [vmem:[%s223 + $0x3c] sm:$0xf] %v1209
      %1274 = vst [vmem:[%s223 + $0x40] sm:$0xf] %v1210
      %1275 = vst [vmem:[%s223 + $0x44] sm:$0xf] %v1211
      %1276 = vst [vmem:[%s223 + $0x48] sm:$0xf] %v1212
      %1277 = vst [vmem:[%s223 + $0x4c] sm:$0xf] %v1213
      %1278 = vst [vmem:[%s223 + $0x50] sm:$0xf] %v1214
      %1279 = vst [vmem:[%s223 + $0x54] sm:$0xf] %v1215
      %1280 = vst [vmem:[%s223 + $0x58] sm:$0xf] %v1216
      %1281 = vst [vmem:[%s223 + $0x5c] sm:$0xf] %v1217
      %1282 = vst [vmem:[%s223 + $0x60] sm:$0xf] %v1218
      %1283 = vst [vmem:[%s223 + $0x64] sm:$0xf] %v1219
      %1284 = vst [vmem:[%s223 + $0x68] sm:$0xf] %v1220
      %1285 = vst [vmem:[%s223 + $0x6c] sm:$0xf] %v1221
      %1286 = vst [vmem:[%s223 + $0x70] sm:$0xf] %v1222
      %1287 = vst [vmem:[%s223 + $0x74] sm:$0xf] %v1223
      %1288 = vst [vmem:[%s223 + $0x78] sm:$0xf] %v1224
      %1289 = vst [vmem:[%s223 + $0x7c] sm:$0xf] %v1225
      %s1290 = smul.u32 32, %s18
      %p1291 = scmp.lt.s32.totalorder %s1290, 63
      %s1292 = scalar_select %p1291, %s1290, 63
      %p1293 = scmp.lt.s32.totalorder %s19, 0
      %s1294 = scalar_select %p1293, %s19, 0
      %s1295 = sadd.s32 %s1294, %s1292
      %s1296 = smul.addr %s1295, 4
      %s1297 = scalar_lea.vmem %s3, %s1296
      // Predicated region
      $region33: #{_lambda_.6} parent=31 // pred_check
        %p1298 = pneg %p124
      $region34: #{_lambda_.6} parent=31 // pred_check_branch
        %1300 = sbr.rel (%p1298) target = $region36
      $region35: #{_lambda_.6} parent=31 // pred_region
        %s1301 = smul.u32 32, %s18
      $region36: #{_lambda_.6} parent=31 // pred_fallthru
        _
    $region32: #{_lambda_.6} parent=5 // pred_fallthru
      _
    %p1302 = scmp.le.s32.totalorder 2, %s9
    // Predicated region
    $region37: #{_lambda_.6} parent=5 // pred_check
      %p1303 = pneg %p1302
    $region38: #{_lambda_.6} parent=5 // pred_check_branch
      %1305 = sbr.rel (%p1303) target = $region40
    $region39: #{_lambda_.6} parent=5 // pred_region
      %s1306 = ssub.s32 %s9, 2
      // Predicated region
      $region41: #{_lambda_.6} parent=39 // pred_check
        %p1307 = pneg %p130
      $region42: #{_lambda_.6} parent=39 // pred_check_branch
        %1309 = sbr.rel (%p1307) target = $region44
      $region43: #{_lambda_.6} parent=39 // pred_region
        %s1310 = smul.u32 32, %s20
        %p1311 = scmp.lt.s32.totalorder %s1310, 63
        %s1312 = scalar_select %p1311, %s1310, 63
        %p1313 = scmp.lt.s32.totalorder %s21, 0
        %s1314 = scalar_select %p1313, %s21, 0
        %s1315 = sadd.s32 %s1314, %s1312
        %s1316 = smul.addr %s1315, 4
        %s1317 = scalar_lea.vmem %s3, %s1316
      $region44: #{_lambda_.6} parent=39 // pred_fallthru
        _
    $region40: #{_lambda_.6} parent=5 // pred_fallthru
      _
  $region6: #{_lambda_.6} parent=0 // loop_footer
    %s13 = sadd.s32 1, %s9
  $region7: #{_lambda_.6} parent=0 // loop_footer_branch
    %8 = sbr.rel target = $region3
  $region8: #{_lambda_.6} parent=0 // loop_exit
    _

// kernel: _lambda_.8
$region0: #{_lambda_.8}
  #allocation0 [shape = 'u32[]', space=smem, size = 0x4, offset = 0x4, fixed_abs, tag = 'smem constant byte address 0x4 - core index']
  #allocation1 [shape = 'u32[144,128]{1,0:T(1,128)}', space=vmem, size = 0x12000, scoped, tag = 'internal scratch']
  %s0 = inlined_call_operand.vmem [shape: bf16[512,384], index: 0, kind: input, shape index: {}]
  %s1 = inlined_call_operand.vmem [shape: bf16[384,128], index: 1, kind: input, shape index: {}]
  %s2 = inlined_call_operand.vmem [shape: f32[1,128], index: 2, kind: input, shape index: {}]
  %s3 = inlined_call_operand.vmem [shape: bf16[512,128], index: 3, kind: input, shape index: {}]
  %s4 = inlined_call_operand.vmem [shape: bf16[512,128], index: 4, kind: output, shape index: {}]
  %s5 = sld [smem:[#allocation0]]
  $region49: #{_lambda_.8} parent=0
    _
  %s7 = ssub.s32 1, %s5
  %s8 = scalar_select 0, %s7, %s5
  loop: start=0, step=1, limit=4
  $region2: #{_lambda_.8} parent=0 // loop_pre_header
    _
  $region3: #{_lambda_.8} parent=0 // loop_header
    %s10 = sphi 0, %s14
    %p11 = scmp.ge.s32.totalorder %s10, 4
    %s17 = sphi 0, %s29
    %s18 = sphi 0, %s25
    %s19 = sphi 0, %s17
    %s20 = sphi 0, %s18
    %s21 = sphi 0, %s19
    %s22 = sphi 0, %s20
    %s32 = sphi 0, %s34
    %s35 = sphi 0, %s32
    %s36 = sphi 0, %s35
    %s52 = sphi 0, %s36
    %s58 = sphi 0, %s60
    %s61 = sphi 0, %s58
    %s62 = sphi 0, %s61
    %s78 = sphi 0, %s62
    %s84 = sphi 0, %s86
    %s87 = sphi 0, %s84
    %s88 = sphi 0, %s87
    %s104 = sphi 0, %s88
    %s112 = sphi 0, %s114
    %s115 = sphi 0, %s112
    %s116 = sphi 0, %s115
    %s132 = sphi 0, %s116
    %s140 = sphi 0, %s142
    %s143 = sphi 0, %s140
    %s144 = sphi 0, %s143
    %s160 = sphi 0, %s144
  $region4: #{_lambda_.8} parent=0 // loop_header_branch
    %13 = sbr.rel (%p11) target = $region8
  $region5: #{_lambda_.8} parent=0 // loop_body
    %s15 = ssub.s32 %s10, 1
    %s16 = ssub.s32 %s10, 2
    %s23 = sadd.s32 1, %s18
    %p24 = scmp.ge.s32.totalorder %s23, 1
    %s25 = scalar_select %p24, 0, %s23
    %s26 = sadd.s32 1, %s17
    %s27 = scalar_select %p24, %s26, %s17
    %p28 = scmp.ge.s32.totalorder %s27, 2
    %s29 = scalar_select %p28, 0, %s27
    %s30 = ssub.s32 %s17, %s29
    %p31 = scmp.eq.s32.totalorder %s30, 0
    %s33 = sadd.s32 %s32, 1
    %s34 = scalar_select %p31, %s32, %s33
    %p37 = pneg %p31
    %p38 = scmp.eq.s32.totalorder %s10, 1
    %p39 = por %p37, %p38
    %p40 = scmp.ne.s32.totalorder %s32, %s35
    %p41 = scmp.eq.s32.totalorder %s10, 0
    %p42 = por %p40, %p41
    %p43 = scmp.ne.s32.totalorder %s32, %s35
    %p44 = scmp.eq.s32.totalorder %s15, 1
    %p45 = por %p43, %p44
    %p46 = scmp.ne.s32.totalorder %s35, %s36
    %p47 = scmp.eq.s32.totalorder %s15, 0
    %p48 = por %p46, %p47
    %p49 = scmp.ne.s32.totalorder %s35, %s36
    %p50 = scmp.eq.s32.totalorder %s16, 1
    %p51 = por %p49, %p50
    %p53 = scmp.ne.s32.totalorder %s36, %s52
    %p54 = scmp.eq.s32.totalorder %s16, 0
    %p55 = por %p53, %p54
    %s56 = ssub.s32 %s18, %s25
    %p57 = scmp.eq.s32.totalorder %s56, 0
    %s59 = sadd.s32 %s58, 1
    %s60 = scalar_select %p57, %s58, %s59
    %p63 = pneg %p57
    %p64 = scmp.eq.s32.totalorder %s10, 1
    %p65 = por %p63, %p64
    %p66 = scmp.ne.s32.totalorder %s58, %s61
    %p67 = scmp.eq.s32.totalorder %s10, 0
    %p68 = por %p66, %p67
    %p69 = scmp.ne.s32.totalorder %s58, %s61
    %p70 = scmp.eq.s32.totalorder %s15, 1
    %p71 = por %p69, %p70
    %p72 = scmp.ne.s32.totalorder %s61, %s62
    %p73 = scmp.eq.s32.totalorder %s15, 0
    %p74 = por %p72, %p73
    %p75 = scmp.ne.s32.totalorder %s61, %s62
    %p76 = scmp.eq.s32.totalorder %s16, 1
    %p77 = por %p75, %p76
    %p79 = scmp.ne.s32.totalorder %s62, %s78
    %p80 = scmp.eq.s32.totalorder %s16, 0
    %p81 = por %p79, %p80
    %s82 = ssub.s32 %s18, %s25
    %p83 = scmp.eq.s32.totalorder %s82, 0
    %s85 = sadd.s32 %s84, 1
    %s86 = scalar_select %p83, %s84, %s85
    %p89 = pneg %p83
    %p90 = scmp.eq.s32.totalorder %s10, 1
    %p91 = por %p89, %p90
    %p92 = scmp.ne.s32.totalorder %s84, %s87
    %p93 = scmp.eq.s32.totalorder %s10, 0
    %p94 = por %p92, %p93
    %p95 = scmp.ne.s32.totalorder %s84, %s87
    %p96 = scmp.eq.s32.totalorder %s15, 1
    %p97 = por %p95, %p96
    %p98 = scmp.ne.s32.totalorder %s87, %s88
    %p99 = scmp.eq.s32.totalorder %s15, 0
    %p100 = por %p98, %p99
    %p101 = scmp.ne.s32.totalorder %s87, %s88
    %p102 = scmp.eq.s32.totalorder %s16, 1
    %p103 = por %p101, %p102
    %p105 = scmp.ne.s32.totalorder %s88, %s104
    %p106 = scmp.eq.s32.totalorder %s16, 0
    %p107 = por %p105, %p106
    %s108 = ssub.s32 %s17, %s29
    %s109 = ssub.s32 %s18, %s25
    %s110 = sor.u32 %s108, %s109
    %p111 = scmp.eq.s32.totalorder %s110, 0
    %s113 = sadd.s32 %s112, 1
    %s114 = scalar_select %p111, %s112, %s113
    %p117 = pneg %p111
    %p118 = scmp.eq.s32.totalorder %s10, 1
    %p119 = por %p117, %p118
    %p120 = scmp.ne.s32.totalorder %s112, %s115
    %p121 = scmp.eq.s32.totalorder %s10, 0
    %p122 = por %p120, %p121
    %p123 = scmp.ne.s32.totalorder %s112, %s115
    %p124 = scmp.eq.s32.totalorder %s15, 1
    %p125 = por %p123, %p124
    %p126 = scmp.ne.s32.totalorder %s115, %s116
    %p127 = scmp.eq.s32.totalorder %s15, 0
    %p128 = por %p126, %p127
    %p129 = scmp.ne.s32.totalorder %s115, %s116
    %p130 = scmp.eq.s32.totalorder %s16, 1
    %p131 = por %p129, %p130
    %p133 = scmp.ne.s32.totalorder %s116, %s132
    %p134 = scmp.eq.s32.totalorder %s16, 0
    %p135 = por %p133, %p134
    %s136 = ssub.s32 %s17, %s29
    %s137 = ssub.s32 %s18, %s25
    %s138 = sor.u32 %s136, %s137
    %p139 = scmp.eq.s32.totalorder %s138, 0
    %s141 = sadd.s32 %s140, 1
    %s142 = scalar_select %p139, %s140, %s141
    %p145 = pneg %p139
    %p146 = scmp.eq.s32.totalorder %s10, 1
    %p147 = por %p145, %p146
    %p148 = scmp.ne.s32.totalorder %s140, %s143
    %p149 = scmp.eq.s32.totalorder %s10, 0
    %p150 = por %p148, %p149
    %p151 = scmp.ne.s32.totalorder %s140, %s143
    %p152 = scmp.eq.s32.totalorder %s15, 1
    %p153 = por %p151, %p152
    %p154 = scmp.ne.s32.totalorder %s143, %s144
    %p155 = scmp.eq.s32.totalorder %s15, 0
    %p156 = por %p154, %p155
    %p157 = scmp.ne.s32.totalorder %s143, %s144
    %p158 = scmp.eq.s32.totalorder %s16, 1
    %p159 = por %p157, %p158
    %p161 = scmp.ne.s32.totalorder %s144, %s160
    %p162 = scmp.eq.s32.totalorder %s16, 0
    %p163 = por %p161, %p162
    %p164 = scmp.le.s32.totalorder 1, %s10
    %p165 = scmp.lt.s32.totalorder %s10, 3
    %p166 = pnand %p164, %p165
    %p167 = pneg %p166
    // Predicated region
    $region9: #{_lambda_.8} parent=5 // pred_check
      _
    $region10: #{_lambda_.8} parent=5 // pred_check_branch
      %169 = sbr.rel (%p166) target = $region12
    $region11: #{_lambda_.8} parent=5 // pred_region
      %s170 = ssub.s32 %s10, 1
      // Predicated region
      $region13: #{_lambda_.8} parent=11 // pred_check
        %p171 = pneg %p74
      $region14: #{_lambda_.8} parent=11 // pred_check_branch
        %173 = sbr.rel (%p171) target = $region16
      $region15: #{_lambda_.8} parent=11 // pred_region
        %p174 = scmp.lt.s32.totalorder %s20, 0
        %s175 = scalar_select %p174, %s20, 0
        %s176 = smul.addr %s175, 4
        %s177 = scalar_lea.vmem %s1, %s176
      $region16: #{_lambda_.8} parent=11 // pred_fallthru
        _
      // Predicated region
      $region17: #{_lambda_.8} parent=11 // pred_check
        %p178 = pneg %p100
      $region18: #{_lambda_.8} parent=11 // pred_check_branch
        %180 = sbr.rel (%p178) target = $region20
      $region19: #{_lambda_.8} parent=11 // pred_region
        %p181 = scmp.lt.s32.totalorder %s20, 0
        %s182 = scalar_select %p181, %s20, 0
        %s183 = scalar_lea.vmem %s2, %s182
      $region20: #{_lambda_.8} parent=11 // pred_fallthru
        _
    $region12: #{_lambda_.8} parent=5 // pred_fallthru
      _
    %p184 = scmp.lt.s32.totalorder %s10, 2
    // Predicated region
    $region21: #{_lambda_.8} parent=5 // pred_check
      %p185 = pneg %p184
    $region22: #{_lambda_.8} parent=5 // pred_check_branch
      %187 = sbr.rel (%p185) target = $region24
    $region23: #{_lambda_.8} parent=5 // pred_region
      // Predicated region
      $region25: #{_lambda_.8} parent=23 // pred_check
        %p188 = pneg %p42
      $region26: #{_lambda_.8} parent=23 // pred_check_branch
        %190 = sbr.rel (%p188) target = $region28
      $region27: #{_lambda_.8} parent=23 // pred_region
        %s191 = smul.u32 32, %s17
        %p192 = scmp.lt.s32.totalorder %s191, 63
        %s193 = scalar_select %p192, %s191, 63
        %s194 = smul.addr %s193, 3
        %s195 = smul.addr %s194, 4
        %s196 = scalar_lea.vmem %s0, %s195
        %s197 = smul.u32 32, %s17
      $region28: #{_lambda_.8} parent=23 // pred_fallthru
        _
      // Predicated region
      $region29: #{_lambda_.8} parent=23 // pred_check
        %p198 = pneg %p122
      $region30: #{_lambda_.8} parent=23 // pred_check_branch
        %200 = sbr.rel (%p198) target = $region32
      $region31: #{_lambda_.8} parent=23 // pred_region
        %s201 = smul.u32 32, %s17
        %p202 = scmp.lt.s32.totalorder %s201, 63
        %s203 = scalar_select %p202, %s201, 63
        %p204 = scmp.lt.s32.totalorder %s18, 0
        %s205 = scalar_select %p204, %s18, 0
        %s206 = sadd.s32 %s205, %s203
        %s207 = smul.addr %s206, 4
        %s208 = scalar_lea.vmem %s3, %s207
        %s209 = smul.u32 32, %s17
      $region32: #{_lambda_.8} parent=23 // pred_fallthru
        _
    $region24: #{_lambda_.8} parent=5 // pred_fallthru
      _
    %p210 = scmp.le.s32.totalorder 1, %s10
    %p211 = scmp.lt.s32.totalorder %s10, 3
    %p212 = pnand %p210, %p211
    %p213 = pneg %p212
    // Predicated region
    $region33: #{_lambda_.8} parent=5 // pred_check
      _
    $region34: #{_lambda_.8} parent=5 // pred_check_branch
      %215 = sbr.rel (%p212) target = $region36
    $region35: #{_lambda_.8} parent=5 // pred_region
      %s216 = ssub.s32 %s10, 1
      %s217 = smul.u32 32, %s19
      %p218 = scmp.lt.s32.totalorder %s217, 63
      %s219 = scalar_select %p218, %s217, 63
      %s220 = smul.addr %s219, 3
      %s221 = smul.addr %s220, 4
      %s222 = scalar_lea.vmem %s0, %s221
      %p223 = pneg %p48
      %p224 = pneg %p45
      %p225 = scmp.lt.s32.totalorder %s20, 0
      %s226 = scalar_select %p225, %s20, 0
      %s227 = smul.addr %s226, 4
      %s228 = scalar_lea.vmem %s1, %s227
      %p229 = pneg %p74
      %p230 = pneg %p71
      %p231 = scmp.lt.s32.totalorder %s20, 0
      %s232 = scalar_select %p231, %s20, 0
      %s233 = scalar_lea.vmem %s2, %s232
      %p234 = pneg %p100
      %p235 = pneg %p97
      %s236 = smul.u32 32, %s19
      %p237 = scmp.lt.s32.totalorder %s236, 63
      %s238 = scalar_select %p237, %s236, 63
      %p239 = scmp.lt.s32.totalorder %s20, 0
      %s240 = scalar_select %p239, %s20, 0
      %s241 = sadd.s32 %s240, %s238
      %s242 = smul.addr %s241, 4
      %s243 = scalar_lea.vmem %s3, %s242
      %p244 = pneg %p128
      %p245 = pneg %p125
      %p246 = pneg %p156
      %p247 = pneg %p153
      %s248 = smul.u32 32, %s19
      %p249 = scmp.lt.s32.totalorder %s248, 63
      %s250 = scalar_select %p249, %s248, 63
      %p251 = scmp.lt.s32.totalorder %s20, 0
      %s252 = scalar_select %p251, %s20, 0
      %s253 = sadd.s32 %s252, %s250
      %s254 = smul.addr %s253, 4
      %s255 = scalar_lea.vmem %s4, %s254
      %s256 = smul.u32 32, %s19
      %p257 = scmp.lt.s32.totalorder %s256, 63
      %s258 = scalar_select %p257, %s256, 63
      %s259 = smul.addr %s258, 3
      %s260 = smul.addr %s259, 4
      %s261 = scalar_lea.vmem %s0, %s260
      %s262 = smul.u32 32, %s19
      %p263 = scmp.lt.s32.totalorder %s20, 0
      %s264 = scalar_select %p263, %s20, 0
      %s265 = smul.addr %s264, 4
      %s266 = scalar_lea.vmem %s1, %s265
      %p267 = scmp.lt.s32.totalorder %s20, 0
      %s268 = scalar_select %p267, %s20, 0
      %s269 = scalar_lea.vmem %s2, %s268
      %s270 = smul.u32 32, %s19
      %p271 = scmp.lt.s32.totalorder %s270, 63
      %s272 = scalar_select %p271, %s270, 63
      %p273 = scmp.lt.s32.totalorder %s20, 0
      %s274 = scalar_select %p273, %s20, 0
      %s275 = sadd.s32 %s274, %s272
      %s276 = smul.addr %s275, 4
      %s277 = scalar_lea.vmem %s3, %s276
      %s278 = smul.u32 32, %s19
      %s279 = smul.u32 32, %s19
      %p280 = scmp.lt.s32.totalorder %s279, 63
      %s281 = scalar_select %p280, %s279, 63
      %p282 = scmp.lt.s32.totalorder %s20, 0
      %s283 = scalar_select %p282, %s20, 0
      %s284 = sadd.s32 %s283, %s281
      %s285 = smul.addr %s284, 4
      %s286 = scalar_lea.vmem %s4, %s285
      %s287 = smul.u32 32, %s19
      %v289 = vld [vmem:[%s261] sm:$0xff]
      %v290 = vld [vmem:[%s261 + $0x8] sm:$0xf]
      %v291 = vld [vmem:[%s261 + $0xc] sm:$0xff]
      %v292 = vld [vmem:[%s261 + $0x14] sm:$0xf]
      %v293 = vld [vmem:[%s261 + $0x18] sm:$0xff]
      %v294 = vld [vmem:[%s261 + $0x20] sm:$0xf]
      %v295 = vld [vmem:[%s261 + $0x24] sm:$0xff]
      %v296 = vld [vmem:[%s261 + $0x2c] sm:$0xf]
      %v297 = vld [vmem:[%s261 + $0x30] sm:$0xff]
      %v298 = vld [vmem:[%s261 + $0x38] sm:$0xf]
      %v299 = vld [vmem:[%s261 + $0x3c] sm:$0xff]
      %v300 = vld [vmem:[%s261 + $0x44] sm:$0xf]
      %v301 = vld [vmem:[%s261 + $0x48] sm:$0xff]
      %v302 = vld [vmem:[%s261 + $0x50] sm:$0xf]
      %v303 = vld [vmem:[%s261 + $0x54] sm:$0xff]
      %v304 = vld [vmem:[%s261 + $0x5c] sm:$0xf]
      %v305 = vld [vmem:[%s261 + $0x60] sm:$0xff]
      %v306 = vld [vmem:[%s261 + $0x68] sm:$0xf]
      %v307 = vld [vmem:[%s261 + $0x6c] sm:$0xff]
      %v308 = vld [vmem:[%s261 + $0x74] sm:$0xf]
      %v309 = vld [vmem:[%s261 + $0x78] sm:$0xff]
      %v310 = vld [vmem:[%s261 + $0x80] sm:$0xf]
      %v311 = vld [vmem:[%s261 + $0x84] sm:$0xff]
      %v312 = vld [vmem:[%s261 + $0x8c] sm:$0xf]
      %v313 = vld [vmem:[%s261 + $0x90] sm:$0xff]
      %v314 = vld [vmem:[%s261 + $0x98] sm:$0xf]
      %v315 = vld [vmem:[%s261 + $0x9c] sm:$0xff]
      %v316 = vld [vmem:[%s261 + $0xa4] sm:$0xf]
      %v317 = vld [vmem:[%s261 + $0xa8] sm:$0xff]
      %v318 = vld [vmem:[%s261 + $0xb0] sm:$0xf]
      %v319 = vld [vmem:[%s261 + $0xb4] sm:$0xff]
      %v320 = vld [vmem:[%s261 + $0xbc] sm:$0xf]
      %v321 = vld [vmem:[%s261 + $0xc0] sm:$0xff]
      %v322 = vld [vmem:[%s261 + $0xc8] sm:$0xf]
      %v323 = vld [vmem:[%s261 + $0xcc] sm:$0xff]
      %v324 = vld [vmem:[%s261 + $0xd4] sm:$0xf]
      %v325 = vld [vmem:[%s261 + $0xd8] sm:$0xff]
      %v326 = vld [vmem:[%s261 + $0xe0] sm:$0xf]
      %v327 = vld [vmem:[%s261 + $0xe4] sm:$0xff]
      %v328 = vld [vmem:[%s261 + $0xec] sm:$0xf]
      %v329 = vld [vmem:[%s261 + $0xf0] sm:$0xff]
      %v330 = vld [vmem:[%s261 + $0xf8] sm:$0xf]
      %v331 = vld [vmem:[%s261 + $0xfc] sm:$0xff]
      %v332 = vld [vmem:[%s261 + $0x104] sm:$0xf]
      %v333 = vld [vmem:[%s261 + $0x108] sm:$0xff]
      %v334 = vld [vmem:[%s261 + $0x110] sm:$0xf]
      %v335 = vld [vmem:[%s261 + $0x114] sm:$0xff]
      %v336 = vld [vmem:[%s261 + $0x11c] sm:$0xf]
      %v337 = vld [vmem:[%s261 + $0x120] sm:$0xff]
      %v338 = vld [vmem:[%s261 + $0x128] sm:$0xf]
      %v339 = vld [vmem:[%s261 + $0x12c] sm:$0xff]
      %v340 = vld [vmem:[%s261 + $0x134] sm:$0xf]
      %v341 = vld [vmem:[%s261 + $0x138] sm:$0xff]
      %v342 = vld [vmem:[%s261 + $0x140] sm:$0xf]
      %v343 = vld [vmem:[%s261 + $0x144] sm:$0xff]
      %v344 = vld [vmem:[%s261 + $0x14c] sm:$0xf]
      %v345 = vld [vmem:[%s261 + $0x150] sm:$0xff]
      %v346 = vld [vmem:[%s261 + $0x158] sm:$0xf]
      %v347 = vld [vmem:[%s261 + $0x15c] sm:$0xff]
      %v348 = vld [vmem:[%s261 + $0x164] sm:$0xf]
      %v349 = vld [vmem:[%s261 + $0x168] sm:$0xff]
      %v350 = vld [vmem:[%s261 + $0x170] sm:$0xf]
      %v351 = vld [vmem:[%s261 + $0x174] sm:$0xff]
      %v352 = vld [vmem:[%s261 + $0x17c] sm:$0xf]
      %v353 = vld [vmem:[%s266] sm:$0xf]
      %v354 = vld [vmem:[%s266 + $0x4] sm:$0xf]
      %v355 = vld [vmem:[%s266 + $0x8] sm:$0xf]
      %v356 = vld [vmem:[%s266 + $0xc] sm:$0xf]
      %v357 = vld [vmem:[%s266 + $0x10] sm:$0xf]
      %v358 = vld [vmem:[%s266 + $0x14] sm:$0xf]
      %v359 = vld [vmem:[%s266 + $0x18] sm:$0xf]
      %v360 = vld [vmem:[%s266 + $0x1c] sm:$0xf]
      %v361 = vld [vmem:[%s266 + $0x20] sm:$0xf]
      %v362 = vld [vmem:[%s266 + $0x24] sm:$0xf]
      %v363 = vld [vmem:[%s266 + $0x28] sm:$0xf]
      %v364 = vld [vmem:[%s266 + $0x2c] sm:$0xf]
      %v365 = vld [vmem:[%s266 + $0x30] sm:$0xf]
      %v366 = vld [vmem:[%s266 + $0x34] sm:$0xf]
      %v367 = vld [vmem:[%s266 + $0x38] sm:$0xf]
      %v368 = vld [vmem:[%s266 + $0x3c] sm:$0xf]
      %v369 = vld [vmem:[%s266 + $0x40] sm:$0xf]
      %v370 = vld [vmem:[%s266 + $0x44] sm:$0xf]
      %v371 = vld [vmem:[%s266 + $0x48] sm:$0xf]
      %v372 = vld [vmem:[%s266 + $0x4c] sm:$0xf]
      %v373 = vld [vmem:[%s266 + $0x50] sm:$0xf]
      %v374 = vld [vmem:[%s266 + $0x54] sm:$0xf]
      %v375 = vld [vmem:[%s266 + $0x58] sm:$0xf]
      %v376 = vld [vmem:[%s266 + $0x5c] sm:$0xf]
      %v377 = vld [vmem:[%s266 + $0x60] sm:$0xf]
      %v378 = vld [vmem:[%s266 + $0x64] sm:$0xf]
      %v379 = vld [vmem:[%s266 + $0x68] sm:$0xf]
      %v380 = vld [vmem:[%s266 + $0x6c] sm:$0xf]
      %v381 = vld [vmem:[%s266 + $0x70] sm:$0xf]
      %v382 = vld [vmem:[%s266 + $0x74] sm:$0xf]
      %v383 = vld [vmem:[%s266 + $0x78] sm:$0xf]
      %v384 = vld [vmem:[%s266 + $0x7c] sm:$0xf]
      %v385 = vld [vmem:[%s266 + $0x80] sm:$0xf]
      %v386 = vld [vmem:[%s266 + $0x84] sm:$0xf]
      %v387 = vld [vmem:[%s266 + $0x88] sm:$0xf]
      %v388 = vld [vmem:[%s266 + $0x8c] sm:$0xf]
      %v389 = vld [vmem:[%s266 + $0x90] sm:$0xf]
      %v390 = vld [vmem:[%s266 + $0x94] sm:$0xf]
      %v391 = vld [vmem:[%s266 + $0x98] sm:$0xf]
      %v392 = vld [vmem:[%s266 + $0x9c] sm:$0xf]
      %v393 = vld [vmem:[%s266 + $0xa0] sm:$0xf]
      %v394 = vld [vmem:[%s266 + $0xa4] sm:$0xf]
      %v395 = vld [vmem:[%s266 + $0xa8] sm:$0xf]
      %v396 = vld [vmem:[%s266 + $0xac] sm:$0xf]
      %v397 = vld [vmem:[%s266 + $0xb0] sm:$0xf]
      %v398 = vld [vmem:[%s266 + $0xb4] sm:$0xf]
      %v399 = vld [vmem:[%s266 + $0xb8] sm:$0xf]
      %v400 = vld [vmem:[%s266 + $0xbc] sm:$0xf]
      %v401 = vld [vmem:[%s269] sm:$0x1]
      %v403 = vlaneseq
      %v404 = vshrl.u32 %v403, 7
      %v405 = vsub.s32 0, %v404
      %v406 = vrot.slane %v401, %v405
      %v472 = vunpack.c.l.b16 %v289
      %v473 = vunpack.c.h.b16 %v289
      %v474 = vunpack.c.l.b16 %v290
      %v475 = vunpack.c.l.b16 %v291
      %v476 = vunpack.c.h.b16 %v291
      %v477 = vunpack.c.l.b16 %v292
      %v478 = vunpack.c.l.b16 %v293
      %v479 = vunpack.c.h.b16 %v293
      %v480 = vunpack.c.l.b16 %v294
      %v481 = vunpack.c.l.b16 %v295
      %v482 = vunpack.c.h.b16 %v295
      %v483 = vunpack.c.l.b16 %v296
      %v484 = vunpack.c.l.b16 %v297
      %v485 = vunpack.c.h.b16 %v297
      %v486 = vunpack.c.l.b16 %v298
      %v487 = vunpack.c.l.b16 %v299
      %v488 = vunpack.c.h.b16 %v299
      %v489 = vunpack.c.l.b16 %v300
      %v490 = vunpack.c.l.b16 %v301
      %v491 = vunpack.c.h.b16 %v301
      %v492 = vunpack.c.l.b16 %v302
      %v493 = vunpack.c.l.b16 %v303
      %v494 = vunpack.c.h.b16 %v303
      %v495 = vunpack.c.l.b16 %v304
      %v496 = vunpack.c.l.b16 %v305
      %v497 = vunpack.c.h.b16 %v305
      %v498 = vunpack.c.l.b16 %v306
      %v499 = vunpack.c.l.b16 %v307
      %v500 = vunpack.c.h.b16 %v307
      %v501 = vunpack.c.l.b16 %v308
      %v502 = vunpack.c.l.b16 %v309
      %v503 = vunpack.c.h.b16 %v309
      %v504 = vunpack.c.l.b16 %v310
      %v505 = vunpack.c.l.b16 %v311
      %v506 = vunpack.c.h.b16 %v311
      %v507 = vunpack.c.l.b16 %v312
      %v508 = vunpack.c.l.b16 %v313
      %v509 = vunpack.c.h.b16 %v313
      %v510 = vunpack.c.l.b16 %v314
      %v511 = vunpack.c.l.b16 %v315
      %v512 = vunpack.c.h.b16 %v315
      %v513 = vunpack.c.l.b16 %v316
      %v514 = vunpack.c.l.b16 %v317
      %v515 = vunpack.c.h.b16 %v317
      %v516 = vunpack.c.l.b16 %v318
      %v517 = vunpack.c.l.b16 %v319
      %v518 = vunpack.c.h.b16 %v319
      %v519 = vunpack.c.l.b16 %v320
      %v520 = vunpack.c.l.b16 %v321
      %v521 = vunpack.c.h.b16 %v321
      %v522 = vunpack.c.l.b16 %v322
      %v523 = vunpack.c.l.b16 %v323
      %v524 = vunpack.c.h.b16 %v323
      %v525 = vunpack.c.l.b16 %v324
      %v526 = vunpack.c.l.b16 %v325
      %v527 = vunpack.c.h.b16 %v325
      %v528 = vunpack.c.l.b16 %v326
      %v529 = vunpack.c.l.b16 %v327
      %v530 = vunpack.c.h.b16 %v327
      %v531 = vunpack.c.l.b16 %v328
      %v532 = vunpack.c.l.b16 %v329
      %v533 = vunpack.c.h.b16 %v329
      %v534 = vunpack.c.l.b16 %v330
      %v535 = vunpack.c.l.b16 %v331
      %v536 = vunpack.c.h.b16 %v331
      %v537 = vunpack.c.l.b16 %v332
      %v538 = vunpack.c.l.b16 %v333
      %v539 = vunpack.c.h.b16 %v333
      %v540 = vunpack.c.l.b16 %v334
      %v541 = vunpack.c.l.b16 %v335
      %v542 = vunpack.c.h.b16 %v335
      %v543 = vunpack.c.l.b16 %v336
      %v544 = vunpack.c.l.b16 %v337
      %v545 = vunpack.c.h.b16 %v337
      %v546 = vunpack.c.l.b16 %v338
      %v547 = vunpack.c.l.b16 %v339
      %v548 = vunpack.c.h.b16 %v339
      %v549 = vunpack.c.l.b16 %v340
      %v550 = vunpack.c.l.b16 %v341
      %v551 = vunpack.c.h.b16 %v341
      %v552 = vunpack.c.l.b16 %v342
      %v553 = vunpack.c.l.b16 %v343
      %v554 = vunpack.c.h.b16 %v343
      %v555 = vunpack.c.l.b16 %v344
      %v556 = vunpack.c.l.b16 %v345
      %v557 = vunpack.c.h.b16 %v345
      %v558 = vunpack.c.l.b16 %v346
      %v559 = vunpack.c.l.b16 %v347
      %v560 = vunpack.c.h.b16 %v347
      %v561 = vunpack.c.l.b16 %v348
      %v562 = vunpack.c.l.b16 %v349
      %v563 = vunpack.c.h.b16 %v349
      %v564 = vunpack.c.l.b16 %v350
      %v565 = vunpack.c.l.b16 %v351
      %v566 = vunpack.c.h.b16 %v351
      %v567 = vunpack.c.l.b16 %v352
      %v568 = vpack.c.b16 %v475, %v472
      %v569 = vpack.c.b16 %v476, %v473
      %v570 = vpack.c.b16 %v477, %v474
      %v571 = vpack.c.b16 %v481, %v478
      %v572 = vpack.c.b16 %v482, %v479
      %v573 = vpack.c.b16 %v483, %v480
      %v574 = vpack.c.b16 %v487, %v484
      %v575 = vpack.c.b16 %v488, %v485
      %v576 = vpack.c.b16 %v489, %v486
      %v577 = vpack.c.b16 %v493, %v490
      %v578 = vpack.c.b16 %v494, %v491
      %v579 = vpack.c.b16 %v495, %v492
      %v580 = vpack.c.b16 %v499, %v496
      %v581 = vpack.c.b16 %v500, %v497
      %v582 = vpack.c.b16 %v501, %v498
      %v583 = vpack.c.b16 %v505, %v502
      %v584 = vpack.c.b16 %v506, %v503
      %v585 = vpack.c.b16 %v507, %v504
      %v586 = vpack.c.b16 %v511, %v508
      %v587 = vpack.c.b16 %v512, %v509
      %v588 = vpack.c.b16 %v513, %v510
      %v589 = vpack.c.b16 %v517, %v514
      %v590 = vpack.c.b16 %v518, %v515
      %v591 = vpack.c.b16 %v519, %v516
      %v592 = vpack.c.b16 %v523, %v520
      %v593 = vpack.c.b16 %v524, %v521
      %v594 = vpack.c.b16 %v525, %v522
      %v595 = vpack.c.b16 %v529, %v526
      %v596 = vpack.c.b16 %v530, %v527
      %v597 = vpack.c.b16 %v531, %v528
      %v598 = vpack.c.b16 %v535, %v532
      %v599 = vpack.c.b16 %v536, %v533
      %v600 = vpack.c.b16 %v537, %v534
      %v601 = vpack.c.b16 %v541, %v538
      %v602 = vpack.c.b16 %v542, %v539
      %v603 = vpack.c.b16 %v543, %v540
      %v604 = vpack.c.b16 %v547, %v544
      %v605 = vpack.c.b16 %v548, %v545
      %v606 = vpack.c.b16 %v549, %v546
      %v607 = vpack.c.b16 %v553, %v550
      %v608 = vpack.c.b16 %v554, %v551
      %v609 = vpack.c.b16 %v555, %v552
      %v610 = vpack.c.b16 %v559, %v556
      %v611 = vpack.c.b16 %v560, %v557
      %v612 = vpack.c.b16 %v561, %v558
      %v613 = vpack.c.b16 %v565, %v562
      %v614 = vpack.c.b16 %v566, %v563
      %v615 = vpack.c.b16 %v567, %v564
      %v712 = vunpack.c.l.b16 %v353
      %v713 = vunpack.c.l.b16 %v354
      %v714 = vunpack.c.l.b16 %v355
      %v715 = vunpack.c.l.b16 %v356
      %v716 = vunpack.c.l.b16 %v357
      %v717 = vunpack.c.l.b16 %v358
      %v718 = vunpack.c.l.b16 %v359
      %v719 = vunpack.c.l.b16 %v360
      %v720 = vunpack.c.l.b16 %v361
      %v721 = vunpack.c.l.b16 %v362
      %v722 = vunpack.c.l.b16 %v363
      %v723 = vunpack.c.l.b16 %v364
      %v724 = vunpack.c.l.b16 %v365
      %v725 = vunpack.c.l.b16 %v366
      %v726 = vunpack.c.l.b16 %v367
      %v727 = vunpack.c.l.b16 %v368
      %v728 = vunpack.c.l.b16 %v369
      %v729 = vunpack.c.l.b16 %v370
      %v730 = vunpack.c.l.b16 %v371
      %v731 = vunpack.c.l.b16 %v372
      %v732 = vunpack.c.l.b16 %v373
      %v733 = vunpack.c.l.b16 %v374
      %v734 = vunpack.c.l.b16 %v375
      %v735 = vunpack.c.l.b16 %v376
      %v736 = vunpack.c.l.b16 %v377
      %v737 = vunpack.c.l.b16 %v378
      %v738 = vunpack.c.l.b16 %v379
      %v739 = vunpack.c.l.b16 %v380
      %v740 = vunpack.c.l.b16 %v381
      %v741 = vunpack.c.l.b16 %v382
      %v742 = vunpack.c.l.b16 %v383
      %v743 = vunpack.c.l.b16 %v384
      %v744 = vunpack.c.l.b16 %v385
      %v745 = vunpack.c.l.b16 %v386
      %v746 = vunpack.c.l.b16 %v387
      %v747 = vunpack.c.l.b16 %v388
      %v748 = vunpack.c.l.b16 %v389
      %v749 = vunpack.c.l.b16 %v390
      %v750 = vunpack.c.l.b16 %v391
      %v751 = vunpack.c.l.b16 %v392
      %v752 = vunpack.c.l.b16 %v393
      %v753 = vunpack.c.l.b16 %v394
      %v754 = vunpack.c.l.b16 %v395
      %v755 = vunpack.c.l.b16 %v396
      %v756 = vunpack.c.l.b16 %v397
      %v757 = vunpack.c.l.b16 %v398
      %v758 = vunpack.c.l.b16 %v399
      %v759 = vunpack.c.l.b16 %v400
      %v760 = vpack.c.b16 %v713, %v712
      %v761 = vpack.c.b16 %v715, %v714
      %v762 = vpack.c.b16 %v717, %v716
      %v763 = vpack.c.b16 %v719, %v718
      %v764 = vpack.c.b16 %v721, %v720
      %v765 = vpack.c.b16 %v723, %v722
      %v766 = vpack.c.b16 %v725, %v724
      %v767 = vpack.c.b16 %v727, %v726
      %v768 = vpack.c.b16 %v729, %v728
      %v769 = vpack.c.b16 %v731, %v730
      %v770 = vpack.c.b16 %v733, %v732
      %v771 = vpack.c.b16 %v735, %v734
      %v772 = vpack.c.b16 %v737, %v736
      %v773 = vpack.c.b16 %v739, %v738
      %v774 = vpack.c.b16 %v741, %v740
      %v775 = vpack.c.b16 %v743, %v742
      %v776 = vpack.c.b16 %v745, %v744
      %v777 = vpack.c.b16 %v747, %v746
      %v778 = vpack.c.b16 %v749, %v748
      %v779 = vpack.c.b16 %v751, %v750
      %v780 = vpack.c.b16 %v753, %v752
      %v781 = vpack.c.b16 %v755, %v754
      %v782 = vpack.c.b16 %v757, %v756
      %v783 = vpack.c.b16 %v759, %v758
      %808 = vmatprep.subr.bf16.mxu0 0
      %809 = vmatpush1.bf16.msra.mxu0 %v767
      %810 = vmatprep.subr.bf16.mxu0 0
      %811 = vmatpush1.bf16.msra.mxu0 %v766
      %812 = vmatprep.subr.bf16.mxu0 0
      %813 = vmatpush1.bf16.msra.mxu0 %v765
      %814 = vmatprep.subr.bf16.mxu0 0
      %815 = vmatpush1.bf16.msra.mxu0 %v764
      %816 = vmatprep.subr.bf16.mxu0 0
      %817 = vmatpush1.bf16.msra.mxu0 %v763
      %818 = vmatprep.subr.bf16.mxu0 0
      %819 = vmatpush1.bf16.msra.mxu0 %v762
      %820 = vmatprep.subr.bf16.mxu0 0
      %821 = vmatpush1.bf16.msra.mxu0 %v761
      %822 = vmatprep.subr.bf16.mxu0 0
      %823 = vmatpush1.bf16.msra.mxu0 %v760
      %824 = vmatprep.subr.bf16.mxu0 0
      %825 = vmatpush2.bf16.msra.mxu0 %v775
      %826 = vmatprep.subr.bf16.mxu0 0
      %827 = vmatpush2.bf16.msra.mxu0 %v774
      %828 = vmatprep.subr.bf16.mxu0 0
      %829 = vmatpush2.bf16.msra.mxu0 %v773
      %830 = vmatprep.subr.bf16.mxu0 0
      %831 = vmatpush2.bf16.msra.mxu0 %v772
      %832 = vmatprep.subr.bf16.mxu0 0
      %833 = vmatpush2.bf16.msra.mxu0 %v771
      %834 = vmatprep.subr.bf16.mxu0 0
      %835 = vmatpush2.bf16.msra.mxu0 %v770
      %836 = vmatprep.subr.bf16.mxu0 0
      %837 = vmatpush2.bf16.msra.mxu0 %v769
      %838 = vmatprep.subr.bf16.mxu0 0
      %839 = vmatpush2.bf16.msra.mxu0 %v768
      %840 = vmatprep.mubr.bf16.mxu0 %v569
      %841 = vmatmul.mubr.bf16.gmra.mxu0 %v568
      %v842 = vpop.f32.mrf.mxu0
      %v843 = vadd.f32 %v406, %v842
      %v844 = vpop.f32.mrf.mxu0
      %v845 = vpop.f32.mrf.mxu0
      %v846 = vadd.f32 %v406, %v845
      %v847 = vpop.f32.mrf.mxu0
      %848 = vmatprep.mubr.bf16.mxu0 %v572
      %849 = vmatmul.mubr.bf16.gmra.mxu0 %v571
      %v850 = vpop.f32.mrf.mxu0
      %v851 = vadd.f32 %v406, %v850
      %v852 = vpop.f32.mrf.mxu0
      %v853 = vpop.f32.mrf.mxu0
      %v854 = vadd.f32 %v406, %v853
      %v855 = vpop.f32.mrf.mxu0
      %856 = vmatprep.mubr.bf16.mxu0 %v575
      %857 = vmatmul.mubr.bf16.gmra.mxu0 %v574
      %v858 = vpop.f32.mrf.mxu0
      %v859 = vadd.f32 %v406, %v858
      %v860 = vpop.f32.mrf.mxu0
      %v861 = vpop.f32.mrf.mxu0
      %v862 = vadd.f32 %v406, %v861
      %v863 = vpop.f32.mrf.mxu0
      %864 = vmatprep.mubr.bf16.mxu0 %v578
      %865 = vmatmul.mubr.bf16.gmra.mxu0 %v577
      %v866 = vpop.f32.mrf.mxu0
      %v867 = vadd.f32 %v406, %v866
      %v868 = vpop.f32.mrf.mxu0
      %v869 = vpop.f32.mrf.mxu0
      %v870 = vadd.f32 %v406, %v869
      %v871 = vpop.f32.mrf.mxu0
      %872 = vmatprep.mubr.bf16.mxu0 %v581
      %873 = vmatmul.mubr.bf16.gmra.mxu0 %v580
      %v874 = vpop.f32.mrf.mxu0
      %v875 = vadd.f32 %v406, %v874
      %v876 = vpop.f32.mrf.mxu0
      %v877 = vpop.f32.mrf.mxu0
      %v878 = vadd.f32 %v406, %v877
      %v879 = vpop.f32.mrf.mxu0
      %880 = vmatprep.mubr.bf16.mxu0 %v584
      %881 = vmatmul.mubr.bf16.gmra.mxu0 %v583
      %v882 = vpop.f32.mrf.mxu0
      %v883 = vadd.f32 %v406, %v882
      %v884 = vpop.f32.mrf.mxu0
      %v885 = vpop.f32.mrf.mxu0
      %v886 = vadd.f32 %v406, %v885
      %v887 = vpop.f32.mrf.mxu0
      %888 = vmatprep.mubr.bf16.mxu0 %v587
      %889 = vmatmul.mubr.bf16.gmra.mxu0 %v586
      %v890 = vpop.f32.mrf.mxu0
      %v891 = vadd.f32 %v406, %v890
      %v892 = vpop.f32.mrf.mxu0
      %v893 = vpop.f32.mrf.mxu0
      %v894 = vadd.f32 %v406, %v893
      %v895 = vpop.f32.mrf.mxu0
      %896 = vmatprep.mubr.bf16.mxu0 %v590
      %897 = vmatmul.mubr.bf16.gmra.mxu0 %v589
      %v898 = vpop.f32.mrf.mxu0
      %v899 = vadd.f32 %v406, %v898
      %v900 = vpop.f32.mrf.mxu0
      %v901 = vpop.f32.mrf.mxu0
      %v902 = vadd.f32 %v406, %v901
      %v903 = vpop.f32.mrf.mxu0
      %904 = vmatprep.mubr.bf16.mxu0 %v593
      %905 = vmatmul.mubr.bf16.gmra.mxu0 %v592
      %v906 = vpop.f32.mrf.mxu0
      %v907 = vadd.f32 %v406, %v906
      %v908 = vpop.f32.mrf.mxu0
      %v909 = vpop.f32.mrf.mxu0
      %v910 = vadd.f32 %v406, %v909
      %v911 = vpop.f32.mrf.mxu0
      %912 = vmatprep.mubr.bf16.mxu0 %v596
      %913 = vmatmul.mubr.bf16.gmra.mxu0 %v595
      %v914 = vpop.f32.mrf.mxu0
      %v915 = vadd.f32 %v406, %v914
      %v916 = vpop.f32.mrf.mxu0
      %v917 = vpop.f32.mrf.mxu0
      %v918 = vadd.f32 %v406, %v917
      %v919 = vpop.f32.mrf.mxu0
      %920 = vmatprep.mubr.bf16.mxu0 %v599
      %921 = vmatmul.mubr.bf16.gmra.mxu0 %v598
      %v922 = vpop.f32.mrf.mxu0
      %v923 = vadd.f32 %v406, %v922
      %v924 = vpop.f32.mrf.mxu0
      %v925 = vpop.f32.mrf.mxu0
      %v926 = vadd.f32 %v406, %v925
      %v927 = vpop.f32.mrf.mxu0
      %928 = vmatprep.mubr.bf16.mxu0 %v602
      %929 = vmatmul.mubr.bf16.gmra.mxu0 %v601
      %v930 = vpop.f32.mrf.mxu0
      %v931 = vadd.f32 %v406, %v930
      %v932 = vpop.f32.mrf.mxu0
      %v933 = vpop.f32.mrf.mxu0
      %v934 = vadd.f32 %v406, %v933
      %v935 = vpop.f32.mrf.mxu0
      %936 = vmatprep.mubr.bf16.mxu0 %v605
      %937 = vmatmul.mubr.bf16.gmra.mxu0 %v604
      %v938 = vpop.f32.mrf.mxu0
      %v939 = vadd.f32 %v406, %v938
      %v940 = vpop.f32.mrf.mxu0
      %v941 = vpop.f32.mrf.mxu0
      %v942 = vadd.f32 %v406, %v941
      %v943 = vpop.f32.mrf.mxu0
      %944 = vmatprep.mubr.bf16.mxu0 %v608
      %945 = vmatmul.mubr.bf16.gmra.mxu0 %v607
      %v946 = vpop.f32.mrf.mxu0
      %v947 = vadd.f32 %v406, %v946
      %v948 = vpop.f32.mrf.mxu0
      %v949 = vpop.f32.mrf.mxu0
      %v950 = vadd.f32 %v406, %v949
      %v951 = vpop.f32.mrf.mxu0
      %952 = vmatprep.mubr.bf16.mxu0 %v611
      %953 = vmatmul.mubr.bf16.gmra.mxu0 %v610
      %v954 = vpop.f32.mrf.mxu0
      %v955 = vadd.f32 %v406, %v954
      %v956 = vpop.f32.mrf.mxu0
      %v957 = vpop.f32.mrf.mxu0
      %v958 = vadd.f32 %v406, %v957
      %v959 = vpop.f32.mrf.mxu0
      %960 = vmatprep.mubr.bf16.mxu0 %v614
      %961 = vmatmul.mubr.bf16.gmra.mxu0 %v613
      %v962 = vpop.f32.mrf.mxu0
      %v963 = vadd.f32 %v406, %v962
      %v964 = vpop.f32.mrf.mxu0
      %v965 = vpop.f32.mrf.mxu0
      %v966 = vadd.f32 %v406, %v965
      %v967 = vpop.f32.mrf.mxu0
      %968 = vdwg.mxu0
      %969 = vmatprep.subr.bf16.mxu0 0
      %970 = vmatpush1.bf16.msra.mxu0 %v783
      %971 = vmatprep.subr.bf16.mxu0 0
      %972 = vmatpush1.bf16.msra.mxu0 %v782
      %973 = vmatprep.subr.bf16.mxu0 0
      %974 = vmatpush1.bf16.msra.mxu0 %v781
      %975 = vmatprep.subr.bf16.mxu0 0
      %976 = vmatpush1.bf16.msra.mxu0 %v780
      %977 = vmatprep.subr.bf16.mxu0 0
      %978 = vmatpush1.bf16.msra.mxu0 %v779
      %979 = vmatprep.subr.bf16.mxu0 0
      %980 = vmatpush1.bf16.msra.mxu0 %v778
      %981 = vmatprep.subr.bf16.mxu0 0
      %982 = vmatpush1.bf16.msra.mxu0 %v777
      %983 = vmatprep.subr.bf16.mxu0 0
      %984 = vmatpush1.bf16.msra.mxu0 %v776
      %985 = vmatprep.subr.bf16.mxu0 0
      %986 = vmatpush2.bf16.msra.mxu0 0
      %987 = vmatprep.subr.bf16.mxu0 0
      %988 = vmatpush2.bf16.msra.mxu0 0
      %989 = vmatprep.subr.bf16.mxu0 0
      %990 = vmatpush2.bf16.msra.mxu0 0
      %991 = vmatprep.subr.bf16.mxu0 0
      %992 = vmatpush2.bf16.msra.mxu0 0
      %993 = vmatprep.subr.bf16.mxu0 0
      %994 = vmatpush2.bf16.msra.mxu0 0
      %995 = vmatprep.subr.bf16.mxu0 0
      %996 = vmatpush2.bf16.msra.mxu0 0
      %997 = vmatprep.subr.bf16.mxu0 0
      %998 = vmatpush2.bf16.msra.mxu0 0
      %999 = vmatprep.subr.bf16.mxu0 0
      %1000 = vmatpush2.bf16.msra.mxu0 0
      %1001 = vmatprep.mubr.bf16.mxu0 0
      %1002 = vmatmul.mubr.bf16.gmra.mxu0 %v570
      %v1003 = vpop.f32.mrf.mxu0
      %v1004 = vadd.f32 %v843, %v1003
      %v1005 = vpop.f32.mrf.mxu0
      %v1006 = vpop.f32.mrf.mxu0
      %v1007 = vadd.f32 %v846, %v1006
      %v1008 = vpop.f32.mrf.mxu0
      %1009 = vmatprep.mubr.bf16.mxu0 0
      %1010 = vmatmul.mubr.bf16.gmra.mxu0 %v573
      %v1011 = vpop.f32.mrf.mxu0
      %v1012 = vadd.f32 %v851, %v1011
      %v1013 = vpop.f32.mrf.mxu0
      %v1014 = vpop.f32.mrf.mxu0
      %v1015 = vadd.f32 %v854, %v1014
      %v1016 = vpop.f32.mrf.mxu0
      %1017 = vmatprep.mubr.bf16.mxu0 0
      %1018 = vmatmul.mubr.bf16.gmra.mxu0 %v576
      %v1019 = vpop.f32.mrf.mxu0
      %v1020 = vadd.f32 %v859, %v1019
      %v1021 = vpop.f32.mrf.mxu0
      %v1022 = vpop.f32.mrf.mxu0
      %v1023 = vadd.f32 %v862, %v1022
      %v1024 = vpop.f32.mrf.mxu0
      %1025 = vmatprep.mubr.bf16.mxu0 0
      %1026 = vmatmul.mubr.bf16.gmra.mxu0 %v579
      %v1027 = vpop.f32.mrf.mxu0
      %v1028 = vadd.f32 %v867, %v1027
      %v1029 = vpop.f32.mrf.mxu0
      %v1030 = vpop.f32.mrf.mxu0
      %v1031 = vadd.f32 %v870, %v1030
      %v1032 = vpop.f32.mrf.mxu0
      %1033 = vmatprep.mubr.bf16.mxu0 0
      %1034 = vmatmul.mubr.bf16.gmra.mxu0 %v582
      %v1035 = vpop.f32.mrf.mxu0
      %v1036 = vadd.f32 %v875, %v1035
      %v1037 = vpop.f32.mrf.mxu0
      %v1038 = vpop.f32.mrf.mxu0
      %v1039 = vadd.f32 %v878, %v1038
      %v1040 = vpop.f32.mrf.mxu0
      %1041 = vmatprep.mubr.bf16.mxu0 0
      %1042 = vmatmul.mubr.bf16.gmra.mxu0 %v585
      %v1043 = vpop.f32.mrf.mxu0
      %v1044 = vadd.f32 %v883, %v1043
      %v1045 = vpop.f32.mrf.mxu0
      %v1046 = vpop.f32.mrf.mxu0
      %v1047 = vadd.f32 %v886, %v1046
      %v1048 = vpop.f32.mrf.mxu0
      %1049 = vmatprep.mubr.bf16.mxu0 0
      %1050 = vmatmul.mubr.bf16.gmra.mxu0 %v588
      %v1051 = vpop.f32.mrf.mxu0
      %v1052 = vadd.f32 %v891, %v1051
      %v1053 = vpop.f32.mrf.mxu0
      %v1054 = vpop.f32.mrf.mxu0
      %v1055 = vadd.f32 %v894, %v1054
      %v1056 = vpop.f32.mrf.mxu0
      %1057 = vmatprep.mubr.bf16.mxu0 0
      %1058 = vmatmul.mubr.bf16.gmra.mxu0 %v591
      %v1059 = vpop.f32.mrf.mxu0
      %v1060 = vadd.f32 %v899, %v1059
      %v1061 = vpop.f32.mrf.mxu0
      %v1062 = vpop.f32.mrf.mxu0
      %v1063 = vadd.f32 %v902, %v1062
      %v1064 = vpop.f32.mrf.mxu0
      %1065 = vmatprep.mubr.bf16.mxu0 0
      %1066 = vmatmul.mubr.bf16.gmra.mxu0 %v594
      %v1067 = vpop.f32.mrf.mxu0
      %v1068 = vadd.f32 %v907, %v1067
      %v1069 = vpop.f32.mrf.mxu0
      %v1070 = vpop.f32.mrf.mxu0
      %v1071 = vadd.f32 %v910, %v1070
      %v1072 = vpop.f32.mrf.mxu0
      %1073 = vmatprep.mubr.bf16.mxu0 0
      %1074 = vmatmul.mubr.bf16.gmra.mxu0 %v597
      %v1075 = vpop.f32.mrf.mxu0
      %v1076 = vadd.f32 %v915, %v1075
      %v1077 = vpop.f32.mrf.mxu0
      %v1078 = vpop.f32.mrf.mxu0
      %v1079 = vadd.f32 %v918, %v1078
      %v1080 = vpop.f32.mrf.mxu0
      %1081 = vmatprep.mubr.bf16.mxu0 0
      %1082 = vmatmul.mubr.bf16.gmra.mxu0 %v600
      %v1083 = vpop.f32.mrf.mxu0
      %v1084 = vadd.f32 %v923, %v1083
      %v1085 = vpop.f32.mrf.mxu0
      %v1086 = vpop.f32.mrf.mxu0
      %v1087 = vadd.f32 %v926, %v1086
      %v1088 = vpop.f32.mrf.mxu0
      %1089 = vmatprep.mubr.bf16.mxu0 0
      %1090 = vmatmul.mubr.bf16.gmra.mxu0 %v603
      %v1091 = vpop.f32.mrf.mxu0
      %v1092 = vadd.f32 %v931, %v1091
      %v1093 = vpop.f32.mrf.mxu0
      %v1094 = vpop.f32.mrf.mxu0
      %v1095 = vadd.f32 %v934, %v1094
      %v1096 = vpop.f32.mrf.mxu0
      %1097 = vmatprep.mubr.bf16.mxu0 0
      %1098 = vmatmul.mubr.bf16.gmra.mxu0 %v606
      %v1099 = vpop.f32.mrf.mxu0
      %v1100 = vadd.f32 %v939, %v1099
      %v1101 = vpop.f32.mrf.mxu0
      %v1102 = vpop.f32.mrf.mxu0
      %v1103 = vadd.f32 %v942, %v1102
      %v1104 = vpop.f32.mrf.mxu0
      %1105 = vmatprep.mubr.bf16.mxu0 0
      %1106 = vmatmul.mubr.bf16.gmra.mxu0 %v609
      %v1107 = vpop.f32.mrf.mxu0
      %v1108 = vadd.f32 %v947, %v1107
      %v1109 = vpop.f32.mrf.mxu0
      %v1110 = vpop.f32.mrf.mxu0
      %v1111 = vadd.f32 %v950, %v1110
      %v1112 = vpop.f32.mrf.mxu0
      %1113 = vmatprep.mubr.bf16.mxu0 0
      %1114 = vmatmul.mubr.bf16.gmra.mxu0 %v612
      %v1115 = vpop.f32.mrf.mxu0
      %v1116 = vadd.f32 %v955, %v1115
      %v1117 = vpop.f32.mrf.mxu0
      %v1118 = vpop.f32.mrf.mxu0
      %v1119 = vadd.f32 %v958, %v1118
      %v1120 = vpop.f32.mrf.mxu0
      %1121 = vmatprep.mubr.bf16.mxu0 0
      %1122 = vmatmul.mubr.bf16.gmra.mxu0 %v615
      %v1123 = vpop.f32.mrf.mxu0
      %v1124 = vadd.f32 %v963, %v1123
      %v1125 = vpop.f32.mrf.mxu0
      %v1126 = vpop.f32.mrf.mxu0
      %v1127 = vadd.f32 %v966, %v1126
      %v1128 = vpop.f32.mrf.mxu0
      %1129 = vdwg.mxu0
      %v1130 = vld [vmem:[%s277] sm:$0xf]
      %v1131 = vld [vmem:[%s277 + $0x4] sm:$0xf]
      %v1132 = vld [vmem:[%s277 + $0x8] sm:$0xf]
      %v1133 = vld [vmem:[%s277 + $0xc] sm:$0xf]
      %v1134 = vld [vmem:[%s277 + $0x10] sm:$0xf]
      %v1135 = vld [vmem:[%s277 + $0x14] sm:$0xf]
      %v1136 = vld [vmem:[%s277 + $0x18] sm:$0xf]
      %v1137 = vld [vmem:[%s277 + $0x1c] sm:$0xf]
      %v1138 = vld [vmem:[%s277 + $0x20] sm:$0xf]
      %v1139 = vld [vmem:[%s277 + $0x24] sm:$0xf]
      %v1140 = vld [vmem:[%s277 + $0x28] sm:$0xf]
      %v1141 = vld [vmem:[%s277 + $0x2c] sm:$0xf]
      %v1142 = vld [vmem:[%s277 + $0x30] sm:$0xf]
      %v1143 = vld [vmem:[%s277 + $0x34] sm:$0xf]
      %v1144 = vld [vmem:[%s277 + $0x38] sm:$0xf]
      %v1145 = vld [vmem:[%s277 + $0x3c] sm:$0xf]
      %v1146 = vld [vmem:[%s277 + $0x40] sm:$0xf]
      %v1147 = vld [vmem:[%s277 + $0x44] sm:$0xf]
      %v1148 = vld [vmem:[%s277 + $0x48] sm:$0xf]
      %v1149 = vld [vmem:[%s277 + $0x4c] sm:$0xf]
      %v1150 = vld [vmem:[%s277 + $0x50] sm:$0xf]
      %v1151 = vld [vmem:[%s277 + $0x54] sm:$0xf]
      %v1152 = vld [vmem:[%s277 + $0x58] sm:$0xf]
      %v1153 = vld [vmem:[%s277 + $0x5c] sm:$0xf]
      %v1154 = vld [vmem:[%s277 + $0x60] sm:$0xf]
      %v1155 = vld [vmem:[%s277 + $0x64] sm:$0xf]
      %v1156 = vld [vmem:[%s277 + $0x68] sm:$0xf]
      %v1157 = vld [vmem:[%s277 + $0x6c] sm:$0xf]
      %v1158 = vld [vmem:[%s277 + $0x70] sm:$0xf]
      %v1159 = vld [vmem:[%s277 + $0x74] sm:$0xf]
      %v1160 = vld [vmem:[%s277 + $0x78] sm:$0xf]
      %v1161 = vld [vmem:[%s277 + $0x7c] sm:$0xf]
      %v1162 = vunpack.c.l.bf16 %v1130
      %v1163 = vunpack.c.l.bf16 %v1131
      %v1164 = vunpack.c.l.bf16 %v1132
      %v1165 = vunpack.c.l.bf16 %v1133
      %v1166 = vunpack.c.l.bf16 %v1134
      %v1167 = vunpack.c.l.bf16 %v1135
      %v1168 = vunpack.c.l.bf16 %v1136
      %v1169 = vunpack.c.l.bf16 %v1137
      %v1170 = vunpack.c.l.bf16 %v1138
      %v1171 = vunpack.c.l.bf16 %v1139
      %v1172 = vunpack.c.l.bf16 %v1140
      %v1173 = vunpack.c.l.bf16 %v1141
      %v1174 = vunpack.c.l.bf16 %v1142
      %v1175 = vunpack.c.l.bf16 %v1143
      %v1176 = vunpack.c.l.bf16 %v1144
      %v1177 = vunpack.c.l.bf16 %v1145
      %v1178 = vunpack.c.l.bf16 %v1146
      %v1179 = vunpack.c.l.bf16 %v1147
      %v1180 = vunpack.c.l.bf16 %v1148
      %v1181 = vunpack.c.l.bf16 %v1149
      %v1182 = vunpack.c.l.bf16 %v1150
      %v1183 = vunpack.c.l.bf16 %v1151
      %v1184 = vunpack.c.l.bf16 %v1152
      %v1185 = vunpack.c.l.bf16 %v1153
      %v1186 = vunpack.c.l.bf16 %v1154
      %v1187 = vunpack.c.l.bf16 %v1155
      %v1188 = vunpack.c.l.bf16 %v1156
      %v1189 = vunpack.c.l.bf16 %v1157
      %v1190 = vunpack.c.l.bf16 %v1158
      %v1191 = vunpack.c.l.bf16 %v1159
      %v1192 = vunpack.c.l.bf16 %v1160
      %v1193 = vunpack.c.l.bf16 %v1161
      %v1194 = vadd.f32 %v1004, %v1162
      %v1195 = vadd.f32 %v1007, %v1163
      %v1196 = vadd.f32 %v1012, %v1164
      %v1197 = vadd.f32 %v1015, %v1165
      %v1198 = vadd.f32 %v1020, %v1166
      %v1199 = vadd.f32 %v1023, %v1167
      %v1200 = vadd.f32 %v1028, %v1168
      %v1201 = vadd.f32 %v1031, %v1169
      %v1202 = vadd.f32 %v1036, %v1170
      %v1203 = vadd.f32 %v1039, %v1171
      %v1204 = vadd.f32 %v1044, %v1172
      %v1205 = vadd.f32 %v1047, %v1173
      %v1206 = vadd.f32 %v1052, %v1174
      %v1207 = vadd.f32 %v1055, %v1175
      %v1208 = vadd.f32 %v1060, %v1176
      %v1209 = vadd.f32 %v1063, %v1177
      %v1210 = vadd.f32 %v1068, %v1178
      %v1211 = vadd.f32 %v1071, %v1179
      %v1212 = vadd.f32 %v1076, %v1180
      %v1213 = vadd.f32 %v1079, %v1181
      %v1214 = vadd.f32 %v1084, %v1182
      %v1215 = vadd.f32 %v1087, %v1183
      %v1216 = vadd.f32 %v1092, %v1184
      %v1217 = vadd.f32 %v1095, %v1185
      %v1218 = vadd.f32 %v1100, %v1186
      %v1219 = vadd.f32 %v1103, %v1187
      %v1220 = vadd.f32 %v1108, %v1188
      %v1221 = vadd.f32 %v1111, %v1189
      %v1222 = vadd.f32 %v1116, %v1190
      %v1223 = vadd.f32 %v1119, %v1191
      %v1224 = vadd.f32 %v1124, %v1192
      %v1225 = vadd.f32 %v1127, %v1193
      %v1226 = vmax.f32 %v1194, 0.0
      %v1227 = vmax.f32 %v1195, 0.0
      %v1228 = vmax.f32 %v1196, 0.0
      %v1229 = vmax.f32 %v1197, 0.0
      %v1230 = vmax.f32 %v1198, 0.0
      %v1231 = vmax.f32 %v1199, 0.0
      %v1232 = vmax.f32 %v1200, 0.0
      %v1233 = vmax.f32 %v1201, 0.0
      %v1234 = vmax.f32 %v1202, 0.0
      %v1235 = vmax.f32 %v1203, 0.0
      %v1236 = vmax.f32 %v1204, 0.0
      %v1237 = vmax.f32 %v1205, 0.0
      %v1238 = vmax.f32 %v1206, 0.0
      %v1239 = vmax.f32 %v1207, 0.0
      %v1240 = vmax.f32 %v1208, 0.0
      %v1241 = vmax.f32 %v1209, 0.0
      %v1242 = vmax.f32 %v1210, 0.0
      %v1243 = vmax.f32 %v1211, 0.0
      %v1244 = vmax.f32 %v1212, 0.0
      %v1245 = vmax.f32 %v1213, 0.0
      %v1246 = vmax.f32 %v1214, 0.0
      %v1247 = vmax.f32 %v1215, 0.0
      %v1248 = vmax.f32 %v1216, 0.0
      %v1249 = vmax.f32 %v1217, 0.0
      %v1250 = vmax.f32 %v1218, 0.0
      %v1251 = vmax.f32 %v1219, 0.0
      %v1252 = vmax.f32 %v1220, 0.0
      %v1253 = vmax.f32 %v1221, 0.0
      %v1254 = vmax.f32 %v1222, 0.0
      %v1255 = vmax.f32 %v1223, 0.0
      %v1256 = vmax.f32 %v1224, 0.0
      %v1257 = vmax.f32 %v1225, 0.0
      %v1258 = vand.u32 2147483647, %v1194
      %v1259 = vand.u32 2147483647, %v1195
      %v1260 = vand.u32 2147483647, %v1196
      %v1261 = vand.u32 2147483647, %v1197
      %v1262 = vand.u32 2147483647, %v1198
      %v1263 = vand.u32 2147483647, %v1199
      %v1264 = vand.u32 2147483647, %v1200
      %v1265 = vand.u32 2147483647, %v1201
      %v1266 = vand.u32 2147483647, %v1202
      %v1267 = vand.u32 2147483647, %v1203
      %v1268 = vand.u32 2147483647, %v1204
      %v1269 = vand.u32 2147483647, %v1205
      %v1270 = vand.u32 2147483647, %v1206
      %v1271 = vand.u32 2147483647, %v1207
      %v1272 = vand.u32 2147483647, %v1208
      %v1273 = vand.u32 2147483647, %v1209
      %v1274 = vand.u32 2147483647, %v1210
      %v1275 = vand.u32 2147483647, %v1211
      %v1276 = vand.u32 2147483647, %v1212
      %v1277 = vand.u32 2147483647, %v1213
      %v1278 = vand.u32 2147483647, %v1214
      %v1279 = vand.u32 2147483647, %v1215
      %v1280 = vand.u32 2147483647, %v1216
      %v1281 = vand.u32 2147483647, %v1217
      %v1282 = vand.u32 2147483647, %v1218
      %v1283 = vand.u32 2147483647, %v1219
      %v1284 = vand.u32 2147483647, %v1220
      %v1285 = vand.u32 2147483647, %v1221
      %v1286 = vand.u32 2147483647, %v1222
      %v1287 = vand.u32 2147483647, %v1223
      %v1288 = vand.u32 2147483647, %v1224
      %v1289 = vand.u32 2147483647, %v1225
      %v1290 = vsub.f32 0.0, %v1258
      %v1291 = vsub.f32 0.0, %v1259
      %v1292 = vsub.f32 0.0, %v1260
      %v1293 = vsub.f32 0.0, %v1261
      %v1294 = vsub.f32 0.0, %v1262
      %v1295 = vsub.f32 0.0, %v1263
      %v1296 = vsub.f32 0.0, %v1264
      %v1297 = vsub.f32 0.0, %v1265
      %v1298 = vsub.f32 0.0, %v1266
      %v1299 = vsub.f32 0.0, %v1267
      %v1300 = vsub.f32 0.0, %v1268
      %v1301 = vsub.f32 0.0, %v1269
      %v1302 = vsub.f32 0.0, %v1270
      %v1303 = vsub.f32 0.0, %v1271
      %v1304 = vsub.f32 0.0, %v1272
      %v1305 = vsub.f32 0.0, %v1273
      %v1306 = vsub.f32 0.0, %v1274
      %v1307 = vsub.f32 0.0, %v1275
      %v1308 = vsub.f32 0.0, %v1276
      %v1309 = vsub.f32 0.0, %v1277
      %v1310 = vsub.f32 0.0, %v1278
      %v1311 = vsub.f32 0.0, %v1279
      %v1312 = vsub.f32 0.0, %v1280
      %v1313 = vsub.f32 0.0, %v1281
      %v1314 = vsub.f32 0.0, %v1282
      %v1315 = vsub.f32 0.0, %v1283
      %v1316 = vsub.f32 0.0, %v1284
      %v1317 = vsub.f32 0.0, %v1285
      %v1318 = vsub.f32 0.0, %v1286
      %v1319 = vsub.f32 0.0, %v1287
      %v1320 = vsub.f32 0.0, %v1288
      %v1321 = vsub.f32 0.0, %v1289
      %v1322 = vmul.f32 %v1290, 1.442695
      %v1323 = vpow.pop %v1322
      %v1324 = vmul.f32 %v1291, 1.442695
      %v1325 = vpow.pop %v1324
      %v1326 = vmul.f32 %v1292, 1.442695
      %v1327 = vpow.pop %v1326
      %v1328 = vmul.f32 %v1293, 1.442695
      %v1329 = vpow.pop %v1328
      %v1330 = vmul.f32 %v1294, 1.442695
      %v1331 = vpow.pop %v1330
      %v1332 = vmul.f32 %v1295, 1.442695
      %v1333 = vpow.pop %v1332
      %v1334 = vmul.f32 %v1296, 1.442695
      %v1335 = vpow.pop %v1334
      %v1336 = vmul.f32 %v1297, 1.442695
      %v1337 = vpow.pop %v1336
      %v1338 = vmul.f32 %v1298, 1.442695
      %v1339 = vpow.pop %v1338
      %v1340 = vmul.f32 %v1299, 1.442695
      %v1341 = vpow.pop %v1340
      %v1342 = vmul.f32 %v1300, 1.442695
      %v1343 = vpow.pop %v1342
      %v1344 = vmul.f32 %v1301, 1.442695
      %v1345 = vpow.pop %v1344
      %v1346 = vmul.f32 %v1302, 1.442695
      %v1347 = vpow.pop %v1346
      %v1348 = vmul.f32 %v1303, 1.442695
      %v1349 = vpow.pop %v1348
      %v1350 = vmul.f32 %v1304, 1.442695
      %v1351 = vpow.pop %v1350
      %v1352 = vmul.f32 %v1305, 1.442695
      %v1353 = vpow.pop %v1352
      %v1354 = vmul.f32 %v1306, 1.442695
      %v1355 = vpow.pop %v1354
      %v1356 = vmul.f32 %v1307, 1.442695
      %v1357 = vpow.pop %v1356
      %v1358 = vmul.f32 %v1308, 1.442695
      %v1359 = vpow.pop %v1358
      %v1360 = vmul.f32 %v1309, 1.442695
      %v1361 = vpow.pop %v1360
      %v1362 = vmul.f32 %v1310, 1.442695
      %v1363 = vpow.pop %v1362
      %v1364 = vmul.f32 %v1311, 1.442695
      %v1365 = vpow.pop %v1364
      %v1366 = vmul.f32 %v1312, 1.442695
      %v1367 = vpow.pop %v1366
      %v1368 = vmul.f32 %v1313, 1.442695
      %v1369 = vpow.pop %v1368
      %v1370 = vmul.f32 %v1314, 1.442695
      %v1371 = vpow.pop %v1370
      %v1372 = vmul.f32 %v1315, 1.442695
      %v1373 = vpow.pop %v1372
      %v1374 = vmul.f32 %v1316, 1.442695
      %v1375 = vpow.pop %v1374
      %v1376 = vmul.f32 %v1317, 1.442695
      %v1377 = vpow.pop %v1376
      %v1378 = vmul.f32 %v1318, 1.442695
      %v1379 = vpow.pop %v1378
      %v1380 = vmul.f32 %v1319, 1.442695
      %v1381 = vpow.pop %v1380
      %v1382 = vmul.f32 %v1320, 1.442695
      %v1383 = vpow.pop %v1382
      %v1384 = vmul.f32 %v1321, 1.442695
      %v1385 = vpow.pop %v1384
      %v1386 = vadd.f32 %v1323, 1.0
      %v1387 = vlog2.pop %v1386
      %v1388 = vmul.f32 %v1387, 0.6931472
      %v1389 = vmul.f32 -0.5, %v1323
      %v1390 = vadd.f32 %v1389, 1.0
      %v1391 = vmul.f32 %v1390, %v1323
      %v1392 = vand.u32 2147483647, %v1323
      %vm1393 = vcmp.lt.f32.partialorder %v1392, 0.0004427343
      %v1394 = vsel %vm1393, %v1391, %v1388
      %v1395 = vadd.f32 %v1325, 1.0
      %v1396 = vlog2.pop %v1395
      %v1397 = vmul.f32 %v1396, 0.6931472
      %v1398 = vmul.f32 -0.5, %v1325
      %v1399 = vadd.f32 %v1398, 1.0
      %v1400 = vmul.f32 %v1399, %v1325
      %v1401 = vand.u32 2147483647, %v1325
      %vm1402 = vcmp.lt.f32.partialorder %v1401, 0.0004427343
      %v1403 = vsel %vm1402, %v1400, %v1397
      %v1404 = vadd.f32 %v1327, 1.0
      %v1405 = vlog2.pop %v1404
      %v1406 = vmul.f32 %v1405, 0.6931472
      %v1407 = vmul.f32 -0.5, %v1327
      %v1408 = vadd.f32 %v1407, 1.0
      %v1409 = vmul.f32 %v1408, %v1327
      %v1410 = vand.u32 2147483647, %v1327
      %vm1411 = vcmp.lt.f32.partialorder %v1410, 0.0004427343
      %v1412 = vsel %vm1411, %v1409, %v1406
      %v1413 = vadd.f32 %v1329, 1.0
      %v1414 = vlog2.pop %v1413
      %v1415 = vmul.f32 %v1414, 0.6931472
      %v1416 = vmul.f32 -0.5, %v1329
      %v1417 = vadd.f32 %v1416, 1.0
      %v1418 = vmul.f32 %v1417, %v1329
      %v1419 = vand.u32 2147483647, %v1329
      %vm1420 = vcmp.lt.f32.partialorder %v1419, 0.0004427343
      %v1421 = vsel %vm1420, %v1418, %v1415
      %v1422 = vadd.f32 %v1331, 1.0
      %v1423 = vlog2.pop %v1422
      %v1424 = vmul.f32 %v1423, 0.6931472
      %v1425 = vmul.f32 -0.5, %v1331
      %v1426 = vadd.f32 %v1425, 1.0
      %v1427 = vmul.f32 %v1426, %v1331
      %v1428 = vand.u32 2147483647, %v1331
      %vm1429 = vcmp.lt.f32.partialorder %v1428, 0.0004427343
      %v1430 = vsel %vm1429, %v1427, %v1424
      %v1431 = vadd.f32 %v1333, 1.0
      %v1432 = vlog2.pop %v1431
      %v1433 = vmul.f32 %v1432, 0.6931472
      %v1434 = vmul.f32 -0.5, %v1333
      %v1435 = vadd.f32 %v1434, 1.0
      %v1436 = vmul.f32 %v1435, %v1333
      %v1437 = vand.u32 2147483647, %v1333
      %vm1438 = vcmp.lt.f32.partialorder %v1437, 0.0004427343
      %v1439 = vsel %vm1438, %v1436, %v1433
      %v1440 = vadd.f32 %v1335, 1.0
      %v1441 = vlog2.pop %v1440
      %v1442 = vmul.f32 %v1441, 0.6931472
      %v1443 = vmul.f32 -0.5, %v1335
      %v1444 = vadd.f32 %v1443, 1.0
      %v1445 = vmul.f32 %v1444, %v1335
      %v1446 = vand.u32 2147483647, %v1335
      %vm1447 = vcmp.lt.f32.partialorder %v1446, 0.0004427343
      %v1448 = vsel %vm1447, %v1445, %v1442
      %v1449 = vadd.f32 %v1337, 1.0
      %v1450 = vlog2.pop %v1449
      %v1451 = vmul.f32 %v1450, 0.6931472
      %v1452 = vmul.f32 -0.5, %v1337
      %v1453 = vadd.f32 %v1452, 1.0
      %v1454 = vmul.f32 %v1453, %v1337
      %v1455 = vand.u32 2147483647, %v1337
      %vm1456 = vcmp.lt.f32.partialorder %v1455, 0.0004427343
      %v1457 = vsel %vm1456, %v1454, %v1451
      %v1458 = vadd.f32 %v1339, 1.0
      %v1459 = vlog2.pop %v1458
      %v1460 = vmul.f32 %v1459, 0.6931472
      %v1461 = vmul.f32 -0.5, %v1339
      %v1462 = vadd.f32 %v1461, 1.0
      %v1463 = vmul.f32 %v1462, %v1339
      %v1464 = vand.u32 2147483647, %v1339
      %vm1465 = vcmp.lt.f32.partialorder %v1464, 0.0004427343
      %v1466 = vsel %vm1465, %v1463, %v1460
      %v1467 = vadd.f32 %v1341, 1.0
      %v1468 = vlog2.pop %v1467
      %v1469 = vmul.f32 %v1468, 0.6931472
      %v1470 = vmul.f32 -0.5, %v1341
      %v1471 = vadd.f32 %v1470, 1.0
      %v1472 = vmul.f32 %v1471, %v1341
      %v1473 = vand.u32 2147483647, %v1341
      %vm1474 = vcmp.lt.f32.partialorder %v1473, 0.0004427343
      %v1475 = vsel %vm1474, %v1472, %v1469
      %v1476 = vadd.f32 %v1343, 1.0
      %v1477 = vlog2.pop %v1476
      %v1478 = vmul.f32 %v1477, 0.6931472
      %v1479 = vmul.f32 -0.5, %v1343
      %v1480 = vadd.f32 %v1479, 1.0
      %v1481 = vmul.f32 %v1480, %v1343
      %v1482 = vand.u32 2147483647, %v1343
      %vm1483 = vcmp.lt.f32.partialorder %v1482, 0.0004427343
      %v1484 = vsel %vm1483, %v1481, %v1478
      %v1485 = vadd.f32 %v1345, 1.0
      %v1486 = vlog2.pop %v1485
      %v1487 = vmul.f32 %v1486, 0.6931472
      %v1488 = vmul.f32 -0.5, %v1345
      %v1489 = vadd.f32 %v1488, 1.0
      %v1490 = vmul.f32 %v1489, %v1345
      %v1491 = vand.u32 2147483647, %v1345
      %vm1492 = vcmp.lt.f32.partialorder %v1491, 0.0004427343
      %v1493 = vsel %vm1492, %v1490, %v1487
      %v1494 = vadd.f32 %v1347, 1.0
      %v1495 = vlog2.pop %v1494
      %v1496 = vmul.f32 %v1495, 0.6931472
      %v1497 = vmul.f32 -0.5, %v1347
      %v1498 = vadd.f32 %v1497, 1.0
      %v1499 = vmul.f32 %v1498, %v1347
      %v1500 = vand.u32 2147483647, %v1347
      %vm1501 = vcmp.lt.f32.partialorder %v1500, 0.0004427343
      %v1502 = vsel %vm1501, %v1499, %v1496
      %v1503 = vadd.f32 %v1349, 1.0
      %v1504 = vlog2.pop %v1503
      %v1505 = vmul.f32 %v1504, 0.6931472
      %v1506 = vmul.f32 -0.5, %v1349
      %v1507 = vadd.f32 %v1506, 1.0
      %v1508 = vmul.f32 %v1507, %v1349
      %v1509 = vand.u32 2147483647, %v1349
      %vm1510 = vcmp.lt.f32.partialorder %v1509, 0.0004427343
      %v1511 = vsel %vm1510, %v1508, %v1505
      %v1512 = vadd.f32 %v1351, 1.0
      %v1513 = vlog2.pop %v1512
      %v1514 = vmul.f32 %v1513, 0.6931472
      %v1515 = vmul.f32 -0.5, %v1351
      %v1516 = vadd.f32 %v1515, 1.0
      %v1517 = vmul.f32 %v1516, %v1351
      %v1518 = vand.u32 2147483647, %v1351
      %vm1519 = vcmp.lt.f32.partialorder %v1518, 0.0004427343
      %v1520 = vsel %vm1519, %v1517, %v1514
      %v1521 = vadd.f32 %v1353, 1.0
      %v1522 = vlog2.pop %v1521
      %v1523 = vmul.f32 %v1522, 0.6931472
      %v1524 = vmul.f32 -0.5, %v1353
      %v1525 = vadd.f32 %v1524, 1.0
      %v1526 = vmul.f32 %v1525, %v1353
      %v1527 = vand.u32 2147483647, %v1353
      %vm1528 = vcmp.lt.f32.partialorder %v1527, 0.0004427343
      %v1529 = vsel %vm1528, %v1526, %v1523
      %v1530 = vadd.f32 %v1355, 1.0
      %v1531 = vlog2.pop %v1530
      %v1532 = vmul.f32 %v1531, 0.6931472
      %v1533 = vmul.f32 -0.5, %v1355
      %v1534 = vadd.f32 %v1533, 1.0
      %v1535 = vmul.f32 %v1534, %v1355
      %v1536 = vand.u32 2147483647, %v1355
      %vm1537 = vcmp.lt.f32.partialorder %v1536, 0.0004427343
      %v1538 = vsel %vm1537, %v1535, %v1532
      %v1539 = vadd.f32 %v1357, 1.0
      %v1540 = vlog2.pop %v1539
      %v1541 = vmul.f32 %v1540, 0.6931472
      %v1542 = vmul.f32 -0.5, %v1357
      %v1543 = vadd.f32 %v1542, 1.0
      %v1544 = vmul.f32 %v1543, %v1357
      %v1545 = vand.u32 2147483647, %v1357
      %vm1546 = vcmp.lt.f32.partialorder %v1545, 0.0004427343
      %v1547 = vsel %vm1546, %v1544, %v1541
      %v1548 = vadd.f32 %v1359, 1.0
      %v1549 = vlog2.pop %v1548
      %v1550 = vmul.f32 %v1549, 0.6931472
      %v1551 = vmul.f32 -0.5, %v1359
      %v1552 = vadd.f32 %v1551, 1.0
      %v1553 = vmul.f32 %v1552, %v1359
      %v1554 = vand.u32 2147483647, %v1359
      %vm1555 = vcmp.lt.f32.partialorder %v1554, 0.0004427343
      %v1556 = vsel %vm1555, %v1553, %v1550
      %v1557 = vadd.f32 %v1361, 1.0
      %v1558 = vlog2.pop %v1557
      %v1559 = vmul.f32 %v1558, 0.6931472
      %v1560 = vmul.f32 -0.5, %v1361
      %v1561 = vadd.f32 %v1560, 1.0
      %v1562 = vmul.f32 %v1561, %v1361
      %v1563 = vand.u32 2147483647, %v1361
      %vm1564 = vcmp.lt.f32.partialorder %v1563, 0.0004427343
      %v1565 = vsel %vm1564, %v1562, %v1559
      %v1566 = vadd.f32 %v1363, 1.0
      %v1567 = vlog2.pop %v1566
      %v1568 = vmul.f32 %v1567, 0.6931472
      %v1569 = vmul.f32 -0.5, %v1363
      %v1570 = vadd.f32 %v1569, 1.0
      %v1571 = vmul.f32 %v1570, %v1363
      %v1572 = vand.u32 2147483647, %v1363
      %vm1573 = vcmp.lt.f32.partialorder %v1572, 0.0004427343
      %v1574 = vsel %vm1573, %v1571, %v1568
      %v1575 = vadd.f32 %v1365, 1.0
      %v1576 = vlog2.pop %v1575
      %v1577 = vmul.f32 %v1576, 0.6931472
      %v1578 = vmul.f32 -0.5, %v1365
      %v1579 = vadd.f32 %v1578, 1.0
      %v1580 = vmul.f32 %v1579, %v1365
      %v1581 = vand.u32 2147483647, %v1365
      %vm1582 = vcmp.lt.f32.partialorder %v1581, 0.0004427343
      %v1583 = vsel %vm1582, %v1580, %v1577
      %v1584 = vadd.f32 %v1367, 1.0
      %v1585 = vlog2.pop %v1584
      %v1586 = vmul.f32 %v1585, 0.6931472
      %v1587 = vmul.f32 -0.5, %v1367
      %v1588 = vadd.f32 %v1587, 1.0
      %v1589 = vmul.f32 %v1588, %v1367
      %v1590 = vand.u32 2147483647, %v1367
      %vm1591 = vcmp.lt.f32.partialorder %v1590, 0.0004427343
      %v1592 = vsel %vm1591, %v1589, %v1586
      %v1593 = vadd.f32 %v1369, 1.0
      %v1594 = vlog2.pop %v1593
      %v1595 = vmul.f32 %v1594, 0.6931472
      %v1596 = vmul.f32 -0.5, %v1369
      %v1597 = vadd.f32 %v1596, 1.0
      %v1598 = vmul.f32 %v1597, %v1369
      %v1599 = vand.u32 2147483647, %v1369
      %vm1600 = vcmp.lt.f32.partialorder %v1599, 0.0004427343
      %v1601 = vsel %vm1600, %v1598, %v1595
      %v1602 = vadd.f32 %v1371, 1.0
      %v1603 = vlog2.pop %v1602
      %v1604 = vmul.f32 %v1603, 0.6931472
      %v1605 = vmul.f32 -0.5, %v1371
      %v1606 = vadd.f32 %v1605, 1.0
      %v1607 = vmul.f32 %v1606, %v1371
      %v1608 = vand.u32 2147483647, %v1371
      %vm1609 = vcmp.lt.f32.partialorder %v1608, 0.0004427343
      %v1610 = vsel %vm1609, %v1607, %v1604
      %v1611 = vadd.f32 %v1373, 1.0
      %v1612 = vlog2.pop %v1611
      %v1613 = vmul.f32 %v1612, 0.6931472
      %v1614 = vmul.f32 -0.5, %v1373
      %v1615 = vadd.f32 %v1614, 1.0
      %v1616 = vmul.f32 %v1615, %v1373
      %v1617 = vand.u32 2147483647, %v1373
      %vm1618 = vcmp.lt.f32.partialorder %v1617, 0.0004427343
      %v1619 = vsel %vm1618, %v1616, %v1613
      %v1620 = vadd.f32 %v1375, 1.0
      %v1621 = vlog2.pop %v1620
      %v1622 = vmul.f32 %v1621, 0.6931472
      %v1623 = vmul.f32 -0.5, %v1375
      %v1624 = vadd.f32 %v1623, 1.0
      %v1625 = vmul.f32 %v1624, %v1375
      %v1626 = vand.u32 2147483647, %v1375
      %vm1627 = vcmp.lt.f32.partialorder %v1626, 0.0004427343
      %v1628 = vsel %vm1627, %v1625, %v1622
      %v1629 = vadd.f32 %v1377, 1.0
      %v1630 = vlog2.pop %v1629
      %v1631 = vmul.f32 %v1630, 0.6931472
      %v1632 = vmul.f32 -0.5, %v1377
      %v1633 = vadd.f32 %v1632, 1.0
      %v1634 = vmul.f32 %v1633, %v1377
      %v1635 = vand.u32 2147483647, %v1377
      %vm1636 = vcmp.lt.f32.partialorder %v1635, 0.0004427343
      %v1637 = vsel %vm1636, %v1634, %v1631
      %v1638 = vadd.f32 %v1379, 1.0
      %v1639 = vlog2.pop %v1638
      %v1640 = vmul.f32 %v1639, 0.6931472
      %v1641 = vmul.f32 -0.5, %v1379
      %v1642 = vadd.f32 %v1641, 1.0
      %v1643 = vmul.f32 %v1642, %v1379
      %v1644 = vand.u32 2147483647, %v1379
      %vm1645 = vcmp.lt.f32.partialorder %v1644, 0.0004427343
      %v1646 = vsel %vm1645, %v1643, %v1640
      %v1647 = vadd.f32 %v1381, 1.0
      %v1648 = vlog2.pop %v1647
      %v1649 = vmul.f32 %v1648, 0.6931472
      %v1650 = vmul.f32 -0.5, %v1381
      %v1651 = vadd.f32 %v1650, 1.0
      %v1652 = vmul.f32 %v1651, %v1381
      %v1653 = vand.u32 2147483647, %v1381
      %vm1654 = vcmp.lt.f32.partialorder %v1653, 0.0004427343
      %v1655 = vsel %vm1654, %v1652, %v1649
      %v1656 = vadd.f32 %v1383, 1.0
      %v1657 = vlog2.pop %v1656
      %v1658 = vmul.f32 %v1657, 0.6931472
      %v1659 = vmul.f32 -0.5, %v1383
      %v1660 = vadd.f32 %v1659, 1.0
      %v1661 = vmul.f32 %v1660, %v1383
      %v1662 = vand.u32 2147483647, %v1383
      %vm1663 = vcmp.lt.f32.partialorder %v1662, 0.0004427343
      %v1664 = vsel %vm1663, %v1661, %v1658
      %v1665 = vadd.f32 %v1385, 1.0
      %v1666 = vlog2.pop %v1665
      %v1667 = vmul.f32 %v1666, 0.6931472
      %v1668 = vmul.f32 -0.5, %v1385
      %v1669 = vadd.f32 %v1668, 1.0
      %v1670 = vmul.f32 %v1669, %v1385
      %v1671 = vand.u32 2147483647, %v1385
      %vm1672 = vcmp.lt.f32.partialorder %v1671, 0.0004427343
      %v1673 = vsel %vm1672, %v1670, %v1667
      %v1674 = vadd.f32 %v1226, %v1394
      %v1675 = vadd.f32 %v1227, %v1403
      %v1676 = vadd.f32 %v1228, %v1412
      %v1677 = vadd.f32 %v1229, %v1421
      %v1678 = vadd.f32 %v1230, %v1430
      %v1679 = vadd.f32 %v1231, %v1439
      %v1680 = vadd.f32 %v1232, %v1448
      %v1681 = vadd.f32 %v1233, %v1457
      %v1682 = vadd.f32 %v1234, %v1466
      %v1683 = vadd.f32 %v1235, %v1475
      %v1684 = vadd.f32 %v1236, %v1484
      %v1685 = vadd.f32 %v1237, %v1493
      %v1686 = vadd.f32 %v1238, %v1502
      %v1687 = vadd.f32 %v1239, %v1511
      %v1688 = vadd.f32 %v1240, %v1520
      %v1689 = vadd.f32 %v1241, %v1529
      %v1690 = vadd.f32 %v1242, %v1538
      %v1691 = vadd.f32 %v1243, %v1547
      %v1692 = vadd.f32 %v1244, %v1556
      %v1693 = vadd.f32 %v1245, %v1565
      %v1694 = vadd.f32 %v1246, %v1574
      %v1695 = vadd.f32 %v1247, %v1583
      %v1696 = vadd.f32 %v1248, %v1592
      %v1697 = vadd.f32 %v1249, %v1601
      %v1698 = vadd.f32 %v1250, %v1610
      %v1699 = vadd.f32 %v1251, %v1619
      %v1700 = vadd.f32 %v1252, %v1628
      %v1701 = vadd.f32 %v1253, %v1637
      %v1702 = vadd.f32 %v1254, %v1646
      %v1703 = vadd.f32 %v1255, %v1655
      %v1704 = vadd.f32 %v1256, %v1664
      %v1705 = vadd.f32 %v1257, %v1673
      %v1706 = vtanh.pop %v1674
      %v1707 = vtanh.pop %v1675
      %v1708 = vtanh.pop %v1676
      %v1709 = vtanh.pop %v1677
      %v1710 = vtanh.pop %v1678
      %v1711 = vtanh.pop %v1679
      %v1712 = vtanh.pop %v1680
      %v1713 = vtanh.pop %v1681
      %v1714 = vtanh.pop %v1682
      %v1715 = vtanh.pop %v1683
      %v1716 = vtanh.pop %v1684
      %v1717 = vtanh.pop %v1685
      %v1718 = vtanh.pop %v1686
      %v1719 = vtanh.pop %v1687
      %v1720 = vtanh.pop %v1688
      %v1721 = vtanh.pop %v1689
      %v1722 = vtanh.pop %v1690
      %v1723 = vtanh.pop %v1691
      %v1724 = vtanh.pop %v1692
      %v1725 = vtanh.pop %v1693
      %v1726 = vtanh.pop %v1694
      %v1727 = vtanh.pop %v1695
      %v1728 = vtanh.pop %v1696
      %v1729 = vtanh.pop %v1697
      %v1730 = vtanh.pop %v1698
      %v1731 = vtanh.pop %v1699
      %v1732 = vtanh.pop %v1700
      %v1733 = vtanh.pop %v1701
      %v1734 = vtanh.pop %v1702
      %v1735 = vtanh.pop %v1703
      %v1736 = vtanh.pop %v1704
      %v1737 = vtanh.pop %v1705
      %v1738 = vmul.f32 %v1194, %v1706
      %v1739 = vmul.f32 %v1195, %v1707
      %v1740 = vmul.f32 %v1196, %v1708
      %v1741 = vmul.f32 %v1197, %v1709
      %v1742 = vmul.f32 %v1198, %v1710
      %v1743 = vmul.f32 %v1199, %v1711
      %v1744 = vmul.f32 %v1200, %v1712
      %v1745 = vmul.f32 %v1201, %v1713
      %v1746 = vmul.f32 %v1202, %v1714
      %v1747 = vmul.f32 %v1203, %v1715
      %v1748 = vmul.f32 %v1204, %v1716
      %v1749 = vmul.f32 %v1205, %v1717
      %v1750 = vmul.f32 %v1206, %v1718
      %v1751 = vmul.f32 %v1207, %v1719
      %v1752 = vmul.f32 %v1208, %v1720
      %v1753 = vmul.f32 %v1209, %v1721
      %v1754 = vmul.f32 %v1210, %v1722
      %v1755 = vmul.f32 %v1211, %v1723
      %v1756 = vmul.f32 %v1212, %v1724
      %v1757 = vmul.f32 %v1213, %v1725
      %v1758 = vmul.f32 %v1214, %v1726
      %v1759 = vmul.f32 %v1215, %v1727
      %v1760 = vmul.f32 %v1216, %v1728
      %v1761 = vmul.f32 %v1217, %v1729
      %v1762 = vmul.f32 %v1218, %v1730
      %v1763 = vmul.f32 %v1219, %v1731
      %v1764 = vmul.f32 %v1220, %v1732
      %v1765 = vmul.f32 %v1221, %v1733
      %v1766 = vmul.f32 %v1222, %v1734
      %v1767 = vmul.f32 %v1223, %v1735
      %v1768 = vmul.f32 %v1224, %v1736
      %v1769 = vmul.f32 %v1225, %v1737
      %v1770 = vpack.c.bf16 %v1739, %v1738
      %v1771 = vpack.c.bf16 %v1741, %v1740
      %v1772 = vpack.c.bf16 %v1743, %v1742
      %v1773 = vpack.c.bf16 %v1745, %v1744
      %v1774 = vpack.c.bf16 %v1747, %v1746
      %v1775 = vpack.c.bf16 %v1749, %v1748
      %v1776 = vpack.c.bf16 %v1751, %v1750
      %v1777 = vpack.c.bf16 %v1753, %v1752
      %v1778 = vpack.c.bf16 %v1755, %v1754
      %v1779 = vpack.c.bf16 %v1757, %v1756
      %v1780 = vpack.c.bf16 %v1759, %v1758
      %v1781 = vpack.c.bf16 %v1761, %v1760
      %v1782 = vpack.c.bf16 %v1763, %v1762
      %v1783 = vpack.c.bf16 %v1765, %v1764
      %v1784 = vpack.c.bf16 %v1767, %v1766
      %v1785 = vpack.c.bf16 %v1769, %v1768
      %v1802 = vunpack.c.l.b16 %v1770
      %v1803 = vunpack.c.h.b16 %v1770
      %v1804 = vunpack.c.l.b16 %v1771
      %v1805 = vunpack.c.h.b16 %v1771
      %v1806 = vunpack.c.l.b16 %v1772
      %v1807 = vunpack.c.h.b16 %v1772
      %v1808 = vunpack.c.l.b16 %v1773
      %v1809 = vunpack.c.h.b16 %v1773
      %v1810 = vunpack.c.l.b16 %v1774
      %v1811 = vunpack.c.h.b16 %v1774
      %v1812 = vunpack.c.l.b16 %v1775
      %v1813 = vunpack.c.h.b16 %v1775
      %v1814 = vunpack.c.l.b16 %v1776
      %v1815 = vunpack.c.h.b16 %v1776
      %v1816 = vunpack.c.l.b16 %v1777
      %v1817 = vunpack.c.h.b16 %v1777
      %v1818 = vunpack.c.l.b16 %v1778
      %v1819 = vunpack.c.h.b16 %v1778
      %v1820 = vunpack.c.l.b16 %v1779
      %v1821 = vunpack.c.h.b16 %v1779
      %v1822 = vunpack.c.l.b16 %v1780
      %v1823 = vunpack.c.h.b16 %v1780
      %v1824 = vunpack.c.l.b16 %v1781
      %v1825 = vunpack.c.h.b16 %v1781
      %v1826 = vunpack.c.l.b16 %v1782
      %v1827 = vunpack.c.h.b16 %v1782
      %v1828 = vunpack.c.l.b16 %v1783
      %v1829 = vunpack.c.h.b16 %v1783
      %v1830 = vunpack.c.l.b16 %v1784
      %v1831 = vunpack.c.h.b16 %v1784
      %v1832 = vunpack.c.l.b16 %v1785
      %v1833 = vunpack.c.h.b16 %v1785
      %v1834 = vpack.c.b16 %v1802, %v1802
      %v1835 = vpack.c.b16 %v1803, %v1803
      %v1836 = vpack.c.b16 %v1804, %v1804
      %v1837 = vpack.c.b16 %v1805, %v1805
      %v1838 = vpack.c.b16 %v1806, %v1806
      %v1839 = vpack.c.b16 %v1807, %v1807
      %v1840 = vpack.c.b16 %v1808, %v1808
      %v1841 = vpack.c.b16 %v1809, %v1809
      %v1842 = vpack.c.b16 %v1810, %v1810
      %v1843 = vpack.c.b16 %v1811, %v1811
      %v1844 = vpack.c.b16 %v1812, %v1812
      %v1845 = vpack.c.b16 %v1813, %v1813
      %v1846 = vpack.c.b16 %v1814, %v1814
      %v1847 = vpack.c.b16 %v1815, %v1815
      %v1848 = vpack.c.b16 %v1816, %v1816
      %v1849 = vpack.c.b16 %v1817, %v1817
      %v1850 = vpack.c.b16 %v1818, %v1818
      %v1851 = vpack.c.b16 %v1819, %v1819
      %v1852 = vpack.c.b16 %v1820, %v1820
      %v1853 = vpack.c.b16 %v1821, %v1821
      %v1854 = vpack.c.b16 %v1822, %v1822
      %v1855 = vpack.c.b16 %v1823, %v1823
      %v1856 = vpack.c.b16 %v1824, %v1824
      %v1857 = vpack.c.b16 %v1825, %v1825
      %v1858 = vpack.c.b16 %v1826, %v1826
      %v1859 = vpack.c.b16 %v1827, %v1827
      %v1860 = vpack.c.b16 %v1828, %v1828
      %v1861 = vpack.c.b16 %v1829, %v1829
      %v1862 = vpack.c.b16 %v1830, %v1830
      %v1863 = vpack.c.b16 %v1831, %v1831
      %v1864 = vpack.c.b16 %v1832, %v1832
      %v1865 = vpack.c.b16 %v1833, %v1833
      %1898 = vst [vmem:[%s286] sm:$0xf] %v1834
      %1899 = vst [vmem:[%s286 + $0x4] sm:$0xf] %v1835
      %1900 = vst [vmem:[%s286 + $0x8] sm:$0xf] %v1836
      %1901 = vst [vmem:[%s286 + $0xc] sm:$0xf] %v1837
      %1902 = vst [vmem:[%s286 + $0x10] sm:$0xf] %v1838
      %1903 = vst [vmem:[%s286 + $0x14] sm:$0xf] %v1839
      %1904 = vst [vmem:[%s286 + $0x18] sm:$0xf] %v1840
      %1905 = vst [vmem:[%s286 + $0x1c] sm:$0xf] %v1841
      %1906 = vst [vmem:[%s286 + $0x20] sm:$0xf] %v1842
      %1907 = vst [vmem:[%s286 + $0x24] sm:$0xf] %v1843
      %1908 = vst [vmem:[%s286 + $0x28] sm:$0xf] %v1844
      %1909 = vst [vmem:[%s286 + $0x2c] sm:$0xf] %v1845
      %1910 = vst [vmem:[%s286 + $0x30] sm:$0xf] %v1846
      %1911 = vst [vmem:[%s286 + $0x34] sm:$0xf] %v1847
      %1912 = vst [vmem:[%s286 + $0x38] sm:$0xf] %v1848
      %1913 = vst [vmem:[%s286 + $0x3c] sm:$0xf] %v1849
      %1914 = vst [vmem:[%s286 + $0x40] sm:$0xf] %v1850
      %1915 = vst [vmem:[%s286 + $0x44] sm:$0xf] %v1851
      %1916 = vst [vmem:[%s286 + $0x48] sm:$0xf] %v1852
      %1917 = vst [vmem:[%s286 + $0x4c] sm:$0xf] %v1853
      %1918 = vst [vmem:[%s286 + $0x50] sm:$0xf] %v1854
      %1919 = vst [vmem:[%s286 + $0x54] sm:$0xf] %v1855
      %1920 = vst [vmem:[%s286 + $0x58] sm:$0xf] %v1856
      %1921 = vst [vmem:[%s286 + $0x5c] sm:$0xf] %v1857
      %1922 = vst [vmem:[%s286 + $0x60] sm:$0xf] %v1858
      %1923 = vst [vmem:[%s286 + $0x64] sm:$0xf] %v1859
      %1924 = vst [vmem:[%s286 + $0x68] sm:$0xf] %v1860
      %1925 = vst [vmem:[%s286 + $0x6c] sm:$0xf] %v1861
      %1926 = vst [vmem:[%s286 + $0x70] sm:$0xf] %v1862
      %1927 = vst [vmem:[%s286 + $0x74] sm:$0xf] %v1863
      %1928 = vst [vmem:[%s286 + $0x78] sm:$0xf] %v1864
      %1929 = vst [vmem:[%s286 + $0x7c] sm:$0xf] %v1865
      %s1930 = smul.u32 32, %s19
      %p1931 = scmp.lt.s32.totalorder %s1930, 63
      %s1932 = scalar_select %p1931, %s1930, 63
      %p1933 = scmp.lt.s32.totalorder %s20, 0
      %s1934 = scalar_select %p1933, %s20, 0
      %s1935 = sadd.s32 %s1934, %s1932
      %s1936 = smul.addr %s1935, 4
      %s1937 = scalar_lea.vmem %s4, %s1936
      // Predicated region
      $region37: #{_lambda_.8} parent=35 // pred_check
        %p1938 = pneg %p153
      $region38: #{_lambda_.8} parent=35 // pred_check_branch
        %1940 = sbr.rel (%p1938) target = $region40
      $region39: #{_lambda_.8} parent=35 // pred_region
        %s1941 = smul.u32 32, %s19
      $region40: #{_lambda_.8} parent=35 // pred_fallthru
        _
    $region36: #{_lambda_.8} parent=5 // pred_fallthru
      _
    %p1942 = scmp.le.s32.totalorder 2, %s10
    // Predicated region
    $region41: #{_lambda_.8} parent=5 // pred_check
      %p1943 = pneg %p1942
    $region42: #{_lambda_.8} parent=5 // pred_check_branch
      %1945 = sbr.rel (%p1943) target = $region44
    $region43: #{_lambda_.8} parent=5 // pred_region
      %s1946 = ssub.s32 %s10, 2
      // Predicated region
      $region45: #{_lambda_.8} parent=43 // pred_check
        %p1947 = pneg %p159
      $region46: #{_lambda_.8} parent=43 // pred_check_branch
        %1949 = sbr.rel (%p1947) target = $region48
      $region47: #{_lambda_.8} parent=43 // pred_region
        %s1950 = smul.u32 32, %s21
        %p1951 = scmp.lt.s32.totalorder %s1950, 63
        %s1952 = scalar_select %p1951, %s1950, 63
        %p1953 = scmp.lt.s32.totalorder %s22, 0
        %s1954 = scalar_select %p1953, %s22, 0
        %s1955 = sadd.s32 %s1954, %s1952
        %s1956 = smul.addr %s1955, 4
        %s1957 = scalar_lea.vmem %s4, %s1956
      $region48: #{_lambda_.8} parent=43 // pred_fallthru
        _
    $region44: #{_lambda_.8} parent=5 // pred_fallthru
      _
  $region6: #{_lambda_.8} parent=0 // loop_footer
    %s14 = sadd.s32 1, %s10
  $region7: #{_lambda_.8} parent=0 // loop_footer_branch
    %9 = sbr.rel target = $region3
  $region8: #{_lambda_.8} parent=0 // loop_exit
    _

// kernel: _lambda_.9
$region0: #{_lambda_.9}
  #allocation0 [shape = 'u32[]', space=smem, size = 0x4, offset = 0x4, fixed_abs, tag = 'smem constant byte address 0x4 - core index']
  #allocation1 [shape = 'u32[144,128]{1,0:T(1,128)}', space=vmem, size = 0x12000, scoped, tag = 'internal scratch']
  %s0 = inlined_call_operand.vmem [shape: bf16[512,128], index: 0, kind: input, shape index: {}]
  %s1 = inlined_call_operand.vmem [shape: bf16[128,128], index: 1, kind: input, shape index: {}]
  %s2 = inlined_call_operand.vmem [shape: bf16[512,128], index: 2, kind: input, shape index: {}]
  %s3 = inlined_call_operand.vmem [shape: bf16[128,128], index: 3, kind: input, shape index: {}]
  %s4 = inlined_call_operand.vmem [shape: f32[1,128], index: 4, kind: input, shape index: {}]
  %s5 = inlined_call_operand.vmem [shape: bf16[512,128], index: 5, kind: output, shape index: {}]
  %s6 = sld [smem:[#allocation0]]
  $region53: #{_lambda_.9} parent=0
    _
  %s8 = ssub.s32 1, %s6
  %s9 = scalar_select 0, %s8, %s6
  loop: start=0, step=1, limit=4
  $region2: #{_lambda_.9} parent=0 // loop_pre_header
    _
  $region3: #{_lambda_.9} parent=0 // loop_header
    %s11 = sphi 0, %s15
    %p12 = scmp.ge.s32.totalorder %s11, 4
    %s18 = sphi 0, %s30
    %s19 = sphi 0, %s26
    %s20 = sphi 0, %s18
    %s21 = sphi 0, %s19
    %s22 = sphi 0, %s20
    %s23 = sphi 0, %s21
    %s33 = sphi 0, %s35
    %s36 = sphi 0, %s33
    %s37 = sphi 0, %s36
    %s53 = sphi 0, %s37
    %s59 = sphi 0, %s61
    %s62 = sphi 0, %s59
    %s63 = sphi 0, %s62
    %s79 = sphi 0, %s63
    %s85 = sphi 0, %s87
    %s88 = sphi 0, %s85
    %s89 = sphi 0, %s88
    %s105 = sphi 0, %s89
    %s111 = sphi 0, %s113
    %s114 = sphi 0, %s111
    %s115 = sphi 0, %s114
    %s131 = sphi 0, %s115
    %s137 = sphi 0, %s139
    %s140 = sphi 0, %s137
    %s141 = sphi 0, %s140
    %s157 = sphi 0, %s141
    %s165 = sphi 0, %s167
    %s168 = sphi 0, %s165
    %s169 = sphi 0, %s168
    %s185 = sphi 0, %s169
  $region4: #{_lambda_.9} parent=0 // loop_header_branch
    %14 = sbr.rel (%p12) target = $region8
  $region5: #{_lambda_.9} parent=0 // loop_body
    %s16 = ssub.s32 %s11, 1
    %s17 = ssub.s32 %s11, 2
    %s24 = sadd.s32 1, %s19
    %p25 = scmp.ge.s32.totalorder %s24, 1
    %s26 = scalar_select %p25, 0, %s24
    %s27 = sadd.s32 1, %s18
    %s28 = scalar_select %p25, %s27, %s18
    %p29 = scmp.ge.s32.totalorder %s28, 2
    %s30 = scalar_select %p29, 0, %s28
    %s31 = ssub.s32 %s18, %s30
    %p32 = scmp.eq.s32.totalorder %s31, 0
    %s34 = sadd.s32 %s33, 1
    %s35 = scalar_select %p32, %s33, %s34
    %p38 = pneg %p32
    %p39 = scmp.eq.s32.totalorder %s11, 1
    %p40 = por %p38, %p39
    %p41 = scmp.ne.s32.totalorder %s33, %s36
    %p42 = scmp.eq.s32.totalorder %s11, 0
    %p43 = por %p41, %p42
    %p44 = scmp.ne.s32.totalorder %s33, %s36
    %p45 = scmp.eq.s32.totalorder %s16, 1
    %p46 = por %p44, %p45
    %p47 = scmp.ne.s32.totalorder %s36, %s37
    %p48 = scmp.eq.s32.totalorder %s16, 0
    %p49 = por %p47, %p48
    %p50 = scmp.ne.s32.totalorder %s36, %s37
    %p51 = scmp.eq.s32.totalorder %s17, 1
    %p52 = por %p50, %p51
    %p54 = scmp.ne.s32.totalorder %s37, %s53
    %p55 = scmp.eq.s32.totalorder %s17, 0
    %p56 = por %p54, %p55
    %s57 = ssub.s32 %s19, %s26
    %p58 = scmp.eq.s32.totalorder %s57, 0
    %s60 = sadd.s32 %s59, 1
    %s61 = scalar_select %p58, %s59, %s60
    %p64 = pneg %p58
    %p65 = scmp.eq.s32.totalorder %s11, 1
    %p66 = por %p64, %p65
    %p67 = scmp.ne.s32.totalorder %s59, %s62
    %p68 = scmp.eq.s32.totalorder %s11, 0
    %p69 = por %p67, %p68
    %p70 = scmp.ne.s32.totalorder %s59, %s62
    %p71 = scmp.eq.s32.totalorder %s16, 1
    %p72 = por %p70, %p71
    %p73 = scmp.ne.s32.totalorder %s62, %s63
    %p74 = scmp.eq.s32.totalorder %s16, 0
    %p75 = por %p73, %p74
    %p76 = scmp.ne.s32.totalorder %s62, %s63
    %p77 = scmp.eq.s32.totalorder %s17, 1
    %p78 = por %p76, %p77
    %p80 = scmp.ne.s32.totalorder %s63, %s79
    %p81 = scmp.eq.s32.totalorder %s17, 0
    %p82 = por %p80, %p81
    %s83 = ssub.s32 %s18, %s30
    %p84 = scmp.eq.s32.totalorder %s83, 0
    %s86 = sadd.s32 %s85, 1
    %s87 = scalar_select %p84, %s85, %s86
    %p90 = pneg %p84
    %p91 = scmp.eq.s32.totalorder %s11, 1
    %p92 = por %p90, %p91
    %p93 = scmp.ne.s32.totalorder %s85, %s88
    %p94 = scmp.eq.s32.totalorder %s11, 0
    %p95 = por %p93, %p94
    %p96 = scmp.ne.s32.totalorder %s85, %s88
    %p97 = scmp.eq.s32.totalorder %s16, 1
    %p98 = por %p96, %p97
    %p99 = scmp.ne.s32.totalorder %s88, %s89
    %p100 = scmp.eq.s32.totalorder %s16, 0
    %p101 = por %p99, %p100
    %p102 = scmp.ne.s32.totalorder %s88, %s89
    %p103 = scmp.eq.s32.totalorder %s17, 1
    %p104 = por %p102, %p103
    %p106 = scmp.ne.s32.totalorder %s89, %s105
    %p107 = scmp.eq.s32.totalorder %s17, 0
    %p108 = por %p106, %p107
    %s109 = ssub.s32 %s19, %s26
    %p110 = scmp.eq.s32.totalorder %s109, 0
    %s112 = sadd.s32 %s111, 1
    %s113 = scalar_select %p110, %s111, %s112
    %p116 = pneg %p110
    %p117 = scmp.eq.s32.totalorder %s11, 1
    %p118 = por %p116, %p117
    %p119 = scmp.ne.s32.totalorder %s111, %s114
    %p120 = scmp.eq.s32.totalorder %s11, 0
    %p121 = por %p119, %p120
    %p122 = scmp.ne.s32.totalorder %s111, %s114
    %p123 = scmp.eq.s32.totalorder %s16, 1
    %p124 = por %p122, %p123
    %p125 = scmp.ne.s32.totalorder %s114, %s115
    %p126 = scmp.eq.s32.totalorder %s16, 0
    %p127 = por %p125, %p126
    %p128 = scmp.ne.s32.totalorder %s114, %s115
    %p129 = scmp.eq.s32.totalorder %s17, 1
    %p130 = por %p128, %p129
    %p132 = scmp.ne.s32.totalorder %s115, %s131
    %p133 = scmp.eq.s32.totalorder %s17, 0
    %p134 = por %p132, %p133
    %s135 = ssub.s32 %s19, %s26
    %p136 = scmp.eq.s32.totalorder %s135, 0
    %s138 = sadd.s32 %s137, 1
    %s139 = scalar_select %p136, %s137, %s138
    %p142 = pneg %p136
    %p143 = scmp.eq.s32.totalorder %s11, 1
    %p144 = por %p142, %p143
    %p145 = scmp.ne.s32.totalorder %s137, %s140
    %p146 = scmp.eq.s32.totalorder %s11, 0
    %p147 = por %p145, %p146
    %p148 = scmp.ne.s32.totalorder %s137, %s140
    %p149 = scmp.eq.s32.totalorder %s16, 1
    %p150 = por %p148, %p149
    %p151 = scmp.ne.s32.totalorder %s140, %s141
    %p152 = scmp.eq.s32.totalorder %s16, 0
    %p153 = por %p151, %p152
    %p154 = scmp.ne.s32.totalorder %s140, %s141
    %p155 = scmp.eq.s32.totalorder %s17, 1
    %p156 = por %p154, %p155
    %p158 = scmp.ne.s32.totalorder %s141, %s157
    %p159 = scmp.eq.s32.totalorder %s17, 0
    %p160 = por %p158, %p159
    %s161 = ssub.s32 %s18, %s30
    %s162 = ssub.s32 %s19, %s26
    %s163 = sor.u32 %s161, %s162
    %p164 = scmp.eq.s32.totalorder %s163, 0
    %s166 = sadd.s32 %s165, 1
    %s167 = scalar_select %p164, %s165, %s166
    %p170 = pneg %p164
    %p171 = scmp.eq.s32.totalorder %s11, 1
    %p172 = por %p170, %p171
    %p173 = scmp.ne.s32.totalorder %s165, %s168
    %p174 = scmp.eq.s32.totalorder %s11, 0
    %p175 = por %p173, %p174
    %p176 = scmp.ne.s32.totalorder %s165, %s168
    %p177 = scmp.eq.s32.totalorder %s16, 1
    %p178 = por %p176, %p177
    %p179 = scmp.ne.s32.totalorder %s168, %s169
    %p180 = scmp.eq.s32.totalorder %s16, 0
    %p181 = por %p179, %p180
    %p182 = scmp.ne.s32.totalorder %s168, %s169
    %p183 = scmp.eq.s32.totalorder %s17, 1
    %p184 = por %p182, %p183
    %p186 = scmp.ne.s32.totalorder %s169, %s185
    %p187 = scmp.eq.s32.totalorder %s17, 0
    %p188 = por %p186, %p187
    %p189 = scmp.le.s32.totalorder 1, %s11
    %p190 = scmp.lt.s32.totalorder %s11, 3
    %p191 = pnand %p189, %p190
    %p192 = pneg %p191
    // Predicated region
    $region9: #{_lambda_.9} parent=5 // pred_check
      _
    $region10: #{_lambda_.9} parent=5 // pred_check_branch
      %194 = sbr.rel (%p191) target = $region12
    $region11: #{_lambda_.9} parent=5 // pred_region
      %s195 = ssub.s32 %s11, 1
      // Predicated region
      $region13: #{_lambda_.9} parent=11 // pred_check
        %p196 = pneg %p75
      $region14: #{_lambda_.9} parent=11 // pred_check_branch
        %198 = sbr.rel (%p196) target = $region16
      $region15: #{_lambda_.9} parent=11 // pred_region
        %p199 = scmp.lt.s32.totalorder %s21, 0
        %s200 = scalar_select %p199, %s21, 0
        %s201 = smul.addr %s200, 4
        %s202 = scalar_lea.vmem %s1, %s201
      $region16: #{_lambda_.9} parent=11 // pred_fallthru
        _
      // Predicated region
      $region17: #{_lambda_.9} parent=11 // pred_check
        %p203 = pneg %p127
      $region18: #{_lambda_.9} parent=11 // pred_check_branch
        %205 = sbr.rel (%p203) target = $region20
      $region19: #{_lambda_.9} parent=11 // pred_region
        %p206 = scmp.lt.s32.totalorder %s21, 0
        %s207 = scalar_select %p206, %s21, 0
        %s208 = smul.addr %s207, 4
        %s209 = scalar_lea.vmem %s3, %s208
      $region20: #{_lambda_.9} parent=11 // pred_fallthru
        _
      // Predicated region
      $region21: #{_lambda_.9} parent=11 // pred_check
        %p210 = pneg %p153
      $region22: #{_lambda_.9} parent=11 // pred_check_branch
        %212 = sbr.rel (%p210) target = $region24
      $region23: #{_lambda_.9} parent=11 // pred_region
        %p213 = scmp.lt.s32.totalorder %s21, 0
        %s214 = scalar_select %p213, %s21, 0
        %s215 = scalar_lea.vmem %s4, %s214
      $region24: #{_lambda_.9} parent=11 // pred_fallthru
        _
    $region12: #{_lambda_.9} parent=5 // pred_fallthru
      _
    %p216 = scmp.lt.s32.totalorder %s11, 2
    // Predicated region
    $region25: #{_lambda_.9} parent=5 // pred_check
      %p217 = pneg %p216
    $region26: #{_lambda_.9} parent=5 // pred_check_branch
      %219 = sbr.rel (%p217) target = $region28
    $region27: #{_lambda_.9} parent=5 // pred_region
      // Predicated region
      $region29: #{_lambda_.9} parent=27 // pred_check
        %p220 = pneg %p43
      $region30: #{_lambda_.9} parent=27 // pred_check_branch
        %222 = sbr.rel (%p220) target = $region32
      $region31: #{_lambda_.9} parent=27 // pred_region
        %s223 = smul.u32 32, %s18
        %p224 = scmp.lt.s32.totalorder %s223, 63
        %s225 = scalar_select %p224, %s223, 63
        %s226 = smul.addr %s225, 4
        %s227 = scalar_lea.vmem %s0, %s226
        %s228 = smul.u32 32, %s18
      $region32: #{_lambda_.9} parent=27 // pred_fallthru
        _
      // Predicated region
      $region33: #{_lambda_.9} parent=27 // pred_check
        %p229 = pneg %p95
      $region34: #{_lambda_.9} parent=27 // pred_check_branch
        %231 = sbr.rel (%p229) target = $region36
      $region35: #{_lambda_.9} parent=27 // pred_region
        %s232 = smul.u32 32, %s18
        %p233 = scmp.lt.s32.totalorder %s232, 63
        %s234 = scalar_select %p233, %s232, 63
        %s235 = smul.addr %s234, 4
        %s236 = scalar_lea.vmem %s2, %s235
        %s237 = smul.u32 32, %s18
      $region36: #{_lambda_.9} parent=27 // pred_fallthru
        _
    $region28: #{_lambda_.9} parent=5 // pred_fallthru
      _
    %p238 = scmp.le.s32.totalorder 1, %s11
    %p239 = scmp.lt.s32.totalorder %s11, 3
    %p240 = pnand %p238, %p239
    %p241 = pneg %p240
    // Predicated region
    $region37: #{_lambda_.9} parent=5 // pred_check
      _
    $region38: #{_lambda_.9} parent=5 // pred_check_branch
      %243 = sbr.rel (%p240) target = $region40
    $region39: #{_lambda_.9} parent=5 // pred_region
      %s244 = ssub.s32 %s11, 1
      %s245 = smul.u32 32, %s20
      %p246 = scmp.lt.s32.totalorder %s245, 63
      %s247 = scalar_select %p246, %s245, 63
      %s248 = smul.addr %s247, 4
      %s249 = scalar_lea.vmem %s0, %s248
      %p250 = pneg %p49
      %p251 = pneg %p46
      %p252 = scmp.lt.s32.totalorder %s21, 0
      %s253 = scalar_select %p252, %s21, 0
      %s254 = smul.addr %s253, 4
      %s255 = scalar_lea.vmem %s1, %s254
      %p256 = pneg %p75
      %p257 = pneg %p72
      %s258 = smul.u32 32, %s20
      %p259 = scmp.lt.s32.totalorder %s258, 63
      %s260 = scalar_select %p259, %s258, 63
      %s261 = smul.addr %s260, 4
      %s262 = scalar_lea.vmem %s2, %s261
      %p263 = pneg %p101
      %p264 = pneg %p98
      %p265 = scmp.lt.s32.totalorder %s21, 0
      %s266 = scalar_select %p265, %s21, 0
      %s267 = smul.addr %s266, 4
      %s268 = scalar_lea.vmem %s3, %s267
      %p269 = pneg %p127
      %p270 = pneg %p124
      %p271 = scmp.lt.s32.totalorder %s21, 0
      %s272 = scalar_select %p271, %s21, 0
      %s273 = scalar_lea.vmem %s4, %s272
      %p274 = pneg %p153
      %p275 = pneg %p150
      %p276 = pneg %p181
      %p277 = pneg %p178
      %s278 = smul.u32 32, %s20
      %p279 = scmp.lt.s32.totalorder %s278, 63
      %s280 = scalar_select %p279, %s278, 63
      %p281 = scmp.lt.s32.totalorder %s21, 0
      %s282 = scalar_select %p281, %s21, 0
      %s283 = sadd.s32 %s282, %s280
      %s284 = smul.addr %s283, 4
      %s285 = scalar_lea.vmem %s5, %s284
      %s286 = smul.u32 32, %s20
      %p287 = scmp.lt.s32.totalorder %s286, 63
      %s288 = scalar_select %p287, %s286, 63
      %s289 = smul.addr %s288, 4
      %s290 = scalar_lea.vmem %s0, %s289
      %s291 = smul.u32 32, %s20
      %p292 = scmp.lt.s32.totalorder %s21, 0
      %s293 = scalar_select %p292, %s21, 0
      %s294 = smul.addr %s293, 4
      %s295 = scalar_lea.vmem %s1, %s294
      %s296 = smul.u32 32, %s20
      %p297 = scmp.lt.s32.totalorder %s296, 63
      %s298 = scalar_select %p297, %s296, 63
      %s299 = smul.addr %s298, 4
      %s300 = scalar_lea.vmem %s2, %s299
      %s301 = smul.u32 32, %s20
      %p302 = scmp.lt.s32.totalorder %s21, 0
      %s303 = scalar_select %p302, %s21, 0
      %s304 = smul.addr %s303, 4
      %s305 = scalar_lea.vmem %s3, %s304
      %p306 = scmp.lt.s32.totalorder %s21, 0
      %s307 = scalar_select %p306, %s21, 0
      %s308 = scalar_lea.vmem %s4, %s307
      %s309 = smul.u32 32, %s20
      %p310 = scmp.lt.s32.totalorder %s309, 63
      %s311 = scalar_select %p310, %s309, 63
      %p312 = scmp.lt.s32.totalorder %s21, 0
      %s313 = scalar_select %p312, %s21, 0
      %s314 = sadd.s32 %s313, %s311
      %s315 = smul.addr %s314, 4
      %s316 = scalar_lea.vmem %s5, %s315
      %s317 = smul.u32 32, %s20
      %v319 = vld [vmem:[%s290] sm:$0xf]
      %v320 = vld [vmem:[%s290 + $0x4] sm:$0xf]
      %v321 = vld [vmem:[%s290 + $0x8] sm:$0xf]
      %v322 = vld [vmem:[%s290 + $0xc] sm:$0xf]
      %v323 = vld [vmem:[%s290 + $0x10] sm:$0xf]
      %v324 = vld [vmem:[%s290 + $0x14] sm:$0xf]
      %v325 = vld [vmem:[%s290 + $0x18] sm:$0xf]
      %v326 = vld [vmem:[%s290 + $0x1c] sm:$0xf]
      %v327 = vld [vmem:[%s290 + $0x20] sm:$0xf]
      %v328 = vld [vmem:[%s290 + $0x24] sm:$0xf]
      %v329 = vld [vmem:[%s290 + $0x28] sm:$0xf]
      %v330 = vld [vmem:[%s290 + $0x2c] sm:$0xf]
      %v331 = vld [vmem:[%s290 + $0x30] sm:$0xf]
      %v332 = vld [vmem:[%s290 + $0x34] sm:$0xf]
      %v333 = vld [vmem:[%s290 + $0x38] sm:$0xf]
      %v334 = vld [vmem:[%s290 + $0x3c] sm:$0xf]
      %v335 = vld [vmem:[%s290 + $0x40] sm:$0xf]
      %v336 = vld [vmem:[%s290 + $0x44] sm:$0xf]
      %v337 = vld [vmem:[%s290 + $0x48] sm:$0xf]
      %v338 = vld [vmem:[%s290 + $0x4c] sm:$0xf]
      %v339 = vld [vmem:[%s290 + $0x50] sm:$0xf]
      %v340 = vld [vmem:[%s290 + $0x54] sm:$0xf]
      %v341 = vld [vmem:[%s290 + $0x58] sm:$0xf]
      %v342 = vld [vmem:[%s290 + $0x5c] sm:$0xf]
      %v343 = vld [vmem:[%s290 + $0x60] sm:$0xf]
      %v344 = vld [vmem:[%s290 + $0x64] sm:$0xf]
      %v345 = vld [vmem:[%s290 + $0x68] sm:$0xf]
      %v346 = vld [vmem:[%s290 + $0x6c] sm:$0xf]
      %v347 = vld [vmem:[%s290 + $0x70] sm:$0xf]
      %v348 = vld [vmem:[%s290 + $0x74] sm:$0xf]
      %v349 = vld [vmem:[%s290 + $0x78] sm:$0xf]
      %v350 = vld [vmem:[%s290 + $0x7c] sm:$0xf]
      %v351 = vld [vmem:[%s295] sm:$0xf]
      %v352 = vld [vmem:[%s295 + $0x4] sm:$0xf]
      %v353 = vld [vmem:[%s295 + $0x8] sm:$0xf]
      %v354 = vld [vmem:[%s295 + $0xc] sm:$0xf]
      %v355 = vld [vmem:[%s295 + $0x10] sm:$0xf]
      %v356 = vld [vmem:[%s295 + $0x14] sm:$0xf]
      %v357 = vld [vmem:[%s295 + $0x18] sm:$0xf]
      %v358 = vld [vmem:[%s295 + $0x1c] sm:$0xf]
      %v359 = vld [vmem:[%s295 + $0x20] sm:$0xf]
      %v360 = vld [vmem:[%s295 + $0x24] sm:$0xf]
      %v361 = vld [vmem:[%s295 + $0x28] sm:$0xf]
      %v362 = vld [vmem:[%s295 + $0x2c] sm:$0xf]
      %v363 = vld [vmem:[%s295 + $0x30] sm:$0xf]
      %v364 = vld [vmem:[%s295 + $0x34] sm:$0xf]
      %v365 = vld [vmem:[%s295 + $0x38] sm:$0xf]
      %v366 = vld [vmem:[%s295 + $0x3c] sm:$0xf]
      %v367 = vld [vmem:[%s300] sm:$0xf]
      %v368 = vld [vmem:[%s300 + $0x4] sm:$0xf]
      %v369 = vld [vmem:[%s300 + $0x8] sm:$0xf]
      %v370 = vld [vmem:[%s300 + $0xc] sm:$0xf]
      %v371 = vld [vmem:[%s300 + $0x10] sm:$0xf]
      %v372 = vld [vmem:[%s300 + $0x14] sm:$0xf]
      %v373 = vld [vmem:[%s300 + $0x18] sm:$0xf]
      %v374 = vld [vmem:[%s300 + $0x1c] sm:$0xf]
      %v375 = vld [vmem:[%s300 + $0x20] sm:$0xf]
      %v376 = vld [vmem:[%s300 + $0x24] sm:$0xf]
      %v377 = vld [vmem:[%s300 + $0x28] sm:$0xf]
      %v378 = vld [vmem:[%s300 + $0x2c] sm:$0xf]
      %v379 = vld [vmem:[%s300 + $0x30] sm:$0xf]
      %v380 = vld [vmem:[%s300 + $0x34] sm:$0xf]
      %v381 = vld [vmem:[%s300 + $0x38] sm:$0xf]
      %v382 = vld [vmem:[%s300 + $0x3c] sm:$0xf]
      %v383 = vld [vmem:[%s300 + $0x40] sm:$0xf]
      %v384 = vld [vmem:[%s300 + $0x44] sm:$0xf]
      %v385 = vld [vmem:[%s300 + $0x48] sm:$0xf]
      %v386 = vld [vmem:[%s300 + $0x4c] sm:$0xf]
      %v387 = vld [vmem:[%s300 + $0x50] sm:$0xf]
      %v388 = vld [vmem:[%s300 + $0x54] sm:$0xf]
      %v389 = vld [vmem:[%s300 + $0x58] sm:$0xf]
      %v390 = vld [vmem:[%s300 + $0x5c] sm:$0xf]
      %v391 = vld [vmem:[%s300 + $0x60] sm:$0xf]
      %v392 = vld [vmem:[%s300 + $0x64] sm:$0xf]
      %v393 = vld [vmem:[%s300 + $0x68] sm:$0xf]
      %v394 = vld [vmem:[%s300 + $0x6c] sm:$0xf]
      %v395 = vld [vmem:[%s300 + $0x70] sm:$0xf]
      %v396 = vld [vmem:[%s300 + $0x74] sm:$0xf]
      %v397 = vld [vmem:[%s300 + $0x78] sm:$0xf]
      %v398 = vld [vmem:[%s300 + $0x7c] sm:$0xf]
      %v399 = vld [vmem:[%s305] sm:$0xf]
      %v400 = vld [vmem:[%s305 + $0x4] sm:$0xf]
      %v401 = vld [vmem:[%s305 + $0x8] sm:$0xf]
      %v402 = vld [vmem:[%s305 + $0xc] sm:$0xf]
      %v403 = vld [vmem:[%s305 + $0x10] sm:$0xf]
      %v404 = vld [vmem:[%s305 + $0x14] sm:$0xf]
      %v405 = vld [vmem:[%s305 + $0x18] sm:$0xf]
      %v406 = vld [vmem:[%s305 + $0x1c] sm:$0xf]
      %v407 = vld [vmem:[%s305 + $0x20] sm:$0xf]
      %v408 = vld [vmem:[%s305 + $0x24] sm:$0xf]
      %v409 = vld [vmem:[%s305 + $0x28] sm:$0xf]
      %v410 = vld [vmem:[%s305 + $0x2c] sm:$0xf]
      %v411 = vld [vmem:[%s305 + $0x30] sm:$0xf]
      %v412 = vld [vmem:[%s305 + $0x34] sm:$0xf]
      %v413 = vld [vmem:[%s305 + $0x38] sm:$0xf]
      %v414 = vld [vmem:[%s305 + $0x3c] sm:$0xf]
      %v447 = vunpack.c.l.b16 %v367
      %v448 = vunpack.c.l.b16 %v368
      %v449 = vunpack.c.l.b16 %v369
      %v450 = vunpack.c.l.b16 %v370
      %v451 = vunpack.c.l.b16 %v371
      %v452 = vunpack.c.l.b16 %v372
      %v453 = vunpack.c.l.b16 %v373
      %v454 = vunpack.c.l.b16 %v374
      %v455 = vunpack.c.l.b16 %v375
      %v456 = vunpack.c.l.b16 %v376
      %v457 = vunpack.c.l.b16 %v377
      %v458 = vunpack.c.l.b16 %v378
      %v459 = vunpack.c.l.b16 %v379
      %v460 = vunpack.c.l.b16 %v380
      %v461 = vunpack.c.l.b16 %v381
      %v462 = vunpack.c.l.b16 %v382
      %v463 = vunpack.c.l.b16 %v383
      %v464 = vunpack.c.l.b16 %v384
      %v465 = vunpack.c.l.b16 %v385
      %v466 = vunpack.c.l.b16 %v386
      %v467 = vunpack.c.l.b16 %v387
      %v468 = vunpack.c.l.b16 %v388
      %v469 = vunpack.c.l.b16 %v389
      %v470 = vunpack.c.l.b16 %v390
      %v471 = vunpack.c.l.b16 %v391
      %v472 = vunpack.c.l.b16 %v392
      %v473 = vunpack.c.l.b16 %v393
      %v474 = vunpack.c.l.b16 %v394
      %v475 = vunpack.c.l.b16 %v395
      %v476 = vunpack.c.l.b16 %v396
      %v477 = vunpack.c.l.b16 %v397
      %v478 = vunpack.c.l.b16 %v398
      %v479 = vpack.c.b16 %v448, %v447
      %v480 = vpack.c.b16 %v450, %v449
      %v481 = vpack.c.b16 %v452, %v451
      %v482 = vpack.c.b16 %v454, %v453
      %v483 = vpack.c.b16 %v456, %v455
      %v484 = vpack.c.b16 %v458, %v457
      %v485 = vpack.c.b16 %v460, %v459
      %v486 = vpack.c.b16 %v462, %v461
      %v487 = vpack.c.b16 %v464, %v463
      %v488 = vpack.c.b16 %v466, %v465
      %v489 = vpack.c.b16 %v468, %v467
      %v490 = vpack.c.b16 %v470, %v469
      %v491 = vpack.c.b16 %v472, %v471
      %v492 = vpack.c.b16 %v474, %v473
      %v493 = vpack.c.b16 %v476, %v475
      %v494 = vpack.c.b16 %v478, %v477
      %v527 = vunpack.c.l.b16 %v399
      %v528 = vunpack.c.l.b16 %v400
      %v529 = vunpack.c.l.b16 %v401
      %v530 = vunpack.c.l.b16 %v402
      %v531 = vunpack.c.l.b16 %v403
      %v532 = vunpack.c.l.b16 %v404
      %v533 = vunpack.c.l.b16 %v405
      %v534 = vunpack.c.l.b16 %v406
      %v535 = vunpack.c.l.b16 %v407
      %v536 = vunpack.c.l.b16 %v408
      %v537 = vunpack.c.l.b16 %v409
      %v538 = vunpack.c.l.b16 %v410
      %v539 = vunpack.c.l.b16 %v411
      %v540 = vunpack.c.l.b16 %v412
      %v541 = vunpack.c.l.b16 %v413
      %v542 = vunpack.c.l.b16 %v414
      %v543 = vpack.c.b16 %v528, %v527
      %v544 = vpack.c.b16 %v530, %v529
      %v545 = vpack.c.b16 %v532, %v531
      %v546 = vpack.c.b16 %v534, %v533
      %v547 = vpack.c.b16 %v536, %v535
      %v548 = vpack.c.b16 %v538, %v537
      %v549 = vpack.c.b16 %v540, %v539
      %v550 = vpack.c.b16 %v542, %v541
      %559 = vmatprep.subr.bf16.mxu0 0
      %560 = vmatpush1.bf16.msra.mxu0 %v550
      %561 = vmatprep.subr.bf16.mxu0 0
      %562 = vmatpush1.bf16.msra.mxu0 %v549
      %563 = vmatprep.subr.bf16.mxu0 0
      %564 = vmatpush1.bf16.msra.mxu0 %v548
      %565 = vmatprep.subr.bf16.mxu0 0
      %566 = vmatpush1.bf16.msra.mxu0 %v547
      %567 = vmatprep.subr.bf16.mxu0 0
      %568 = vmatpush1.bf16.msra.mxu0 %v546
      %569 = vmatprep.subr.bf16.mxu0 0
      %570 = vmatpush1.bf16.msra.mxu0 %v545
      %571 = vmatprep.subr.bf16.mxu0 0
      %572 = vmatpush1.bf16.msra.mxu0 %v544
      %573 = vmatprep.subr.bf16.mxu0 0
      %574 = vmatpush1.bf16.msra.mxu0 %v543
      %575 = vmatprep.subr.bf16.mxu0 0
      %576 = vmatpush2.bf16.msra.mxu0 0
      %577 = vmatprep.subr.bf16.mxu0 0
      %578 = vmatpush2.bf16.msra.mxu0 0
      %579 = vmatprep.subr.bf16.mxu0 0
      %580 = vmatpush2.bf16.msra.mxu0 0
      %581 = vmatprep.subr.bf16.mxu0 0
      %582 = vmatpush2.bf16.msra.mxu0 0
      %583 = vmatprep.subr.bf16.mxu0 0
      %584 = vmatpush2.bf16.msra.mxu0 0
      %585 = vmatprep.subr.bf16.mxu0 0
      %586 = vmatpush2.bf16.msra.mxu0 0
      %587 = vmatprep.subr.bf16.mxu0 0
      %588 = vmatpush2.bf16.msra.mxu0 0
      %589 = vmatprep.subr.bf16.mxu0 0
      %590 = vmatpush2.bf16.msra.mxu0 0
      %591 = vmatprep.mubr.bf16.mxu0 0
      %592 = vmatmul.mubr.bf16.gmra.mxu0 %v479
      %v593 = vpop.f32.mrf.mxu0
      %v594 = vadd.f32 0.0, %v593
      %v595 = vpop.f32.mrf.mxu0
      %v596 = vpop.f32.mrf.mxu0
      %v597 = vadd.f32 0.0, %v596
      %v598 = vpop.f32.mrf.mxu0
      %599 = vmatprep.mubr.bf16.mxu0 0
      %600 = vmatmul.mubr.bf16.gmra.mxu0 %v480
      %v601 = vpop.f32.mrf.mxu0
      %v602 = vadd.f32 0.0, %v601
      %v603 = vpop.f32.mrf.mxu0
      %v604 = vpop.f32.mrf.mxu0
      %v605 = vadd.f32 0.0, %v604
      %v606 = vpop.f32.mrf.mxu0
      %607 = vmatprep.mubr.bf16.mxu0 0
      %608 = vmatmul.mubr.bf16.gmra.mxu0 %v481
      %v609 = vpop.f32.mrf.mxu0
      %v610 = vadd.f32 0.0, %v609
      %v611 = vpop.f32.mrf.mxu0
      %v612 = vpop.f32.mrf.mxu0
      %v613 = vadd.f32 0.0, %v612
      %v614 = vpop.f32.mrf.mxu0
      %615 = vmatprep.mubr.bf16.mxu0 0
      %616 = vmatmul.mubr.bf16.gmra.mxu0 %v482
      %v617 = vpop.f32.mrf.mxu0
      %v618 = vadd.f32 0.0, %v617
      %v619 = vpop.f32.mrf.mxu0
      %v620 = vpop.f32.mrf.mxu0
      %v621 = vadd.f32 0.0, %v620
      %v622 = vpop.f32.mrf.mxu0
      %623 = vmatprep.mubr.bf16.mxu0 0
      %624 = vmatmul.mubr.bf16.gmra.mxu0 %v483
      %v625 = vpop.f32.mrf.mxu0
      %v626 = vadd.f32 0.0, %v625
      %v627 = vpop.f32.mrf.mxu0
      %v628 = vpop.f32.mrf.mxu0
      %v629 = vadd.f32 0.0, %v628
      %v630 = vpop.f32.mrf.mxu0
      %631 = vmatprep.mubr.bf16.mxu0 0
      %632 = vmatmul.mubr.bf16.gmra.mxu0 %v484
      %v633 = vpop.f32.mrf.mxu0
      %v634 = vadd.f32 0.0, %v633
      %v635 = vpop.f32.mrf.mxu0
      %v636 = vpop.f32.mrf.mxu0
      %v637 = vadd.f32 0.0, %v636
      %v638 = vpop.f32.mrf.mxu0
      %639 = vmatprep.mubr.bf16.mxu0 0
      %640 = vmatmul.mubr.bf16.gmra.mxu0 %v485
      %v641 = vpop.f32.mrf.mxu0
      %v642 = vadd.f32 0.0, %v641
      %v643 = vpop.f32.mrf.mxu0
      %v644 = vpop.f32.mrf.mxu0
      %v645 = vadd.f32 0.0, %v644
      %v646 = vpop.f32.mrf.mxu0
      %647 = vmatprep.mubr.bf16.mxu0 0
      %648 = vmatmul.mubr.bf16.gmra.mxu0 %v486
      %v649 = vpop.f32.mrf.mxu0
      %v650 = vadd.f32 0.0, %v649
      %v651 = vpop.f32.mrf.mxu0
      %v652 = vpop.f32.mrf.mxu0
      %v653 = vadd.f32 0.0, %v652
      %v654 = vpop.f32.mrf.mxu0
      %655 = vmatprep.mubr.bf16.mxu0 0
      %656 = vmatmul.mubr.bf16.gmra.mxu0 %v487
      %v657 = vpop.f32.mrf.mxu0
      %v658 = vadd.f32 0.0, %v657
      %v659 = vpop.f32.mrf.mxu0
      %v660 = vpop.f32.mrf.mxu0
      %v661 = vadd.f32 0.0, %v660
      %v662 = vpop.f32.mrf.mxu0
      %663 = vmatprep.mubr.bf16.mxu0 0
      %664 = vmatmul.mubr.bf16.gmra.mxu0 %v488
      %v665 = vpop.f32.mrf.mxu0
      %v666 = vadd.f32 0.0, %v665
      %v667 = vpop.f32.mrf.mxu0
      %v668 = vpop.f32.mrf.mxu0
      %v669 = vadd.f32 0.0, %v668
      %v670 = vpop.f32.mrf.mxu0
      %671 = vmatprep.mubr.bf16.mxu0 0
      %672 = vmatmul.mubr.bf16.gmra.mxu0 %v489
      %v673 = vpop.f32.mrf.mxu0
      %v674 = vadd.f32 0.0, %v673
      %v675 = vpop.f32.mrf.mxu0
      %v676 = vpop.f32.mrf.mxu0
      %v677 = vadd.f32 0.0, %v676
      %v678 = vpop.f32.mrf.mxu0
      %679 = vmatprep.mubr.bf16.mxu0 0
      %680 = vmatmul.mubr.bf16.gmra.mxu0 %v490
      %v681 = vpop.f32.mrf.mxu0
      %v682 = vadd.f32 0.0, %v681
      %v683 = vpop.f32.mrf.mxu0
      %v684 = vpop.f32.mrf.mxu0
      %v685 = vadd.f32 0.0, %v684
      %v686 = vpop.f32.mrf.mxu0
      %687 = vmatprep.mubr.bf16.mxu0 0
      %688 = vmatmul.mubr.bf16.gmra.mxu0 %v491
      %v689 = vpop.f32.mrf.mxu0
      %v690 = vadd.f32 0.0, %v689
      %v691 = vpop.f32.mrf.mxu0
      %v692 = vpop.f32.mrf.mxu0
      %v693 = vadd.f32 0.0, %v692
      %v694 = vpop.f32.mrf.mxu0
      %695 = vmatprep.mubr.bf16.mxu0 0
      %696 = vmatmul.mubr.bf16.gmra.mxu0 %v492
      %v697 = vpop.f32.mrf.mxu0
      %v698 = vadd.f32 0.0, %v697
      %v699 = vpop.f32.mrf.mxu0
      %v700 = vpop.f32.mrf.mxu0
      %v701 = vadd.f32 0.0, %v700
      %v702 = vpop.f32.mrf.mxu0
      %703 = vmatprep.mubr.bf16.mxu0 0
      %704 = vmatmul.mubr.bf16.gmra.mxu0 %v493
      %v705 = vpop.f32.mrf.mxu0
      %v706 = vadd.f32 0.0, %v705
      %v707 = vpop.f32.mrf.mxu0
      %v708 = vpop.f32.mrf.mxu0
      %v709 = vadd.f32 0.0, %v708
      %v710 = vpop.f32.mrf.mxu0
      %711 = vmatprep.mubr.bf16.mxu0 0
      %712 = vmatmul.mubr.bf16.gmra.mxu0 %v494
      %v713 = vpop.f32.mrf.mxu0
      %v714 = vadd.f32 0.0, %v713
      %v715 = vpop.f32.mrf.mxu0
      %v716 = vpop.f32.mrf.mxu0
      %v717 = vadd.f32 0.0, %v716
      %v718 = vpop.f32.mrf.mxu0
      %719 = vdwg.mxu0
      %v752 = vunpack.c.l.b16 %v319
      %v753 = vunpack.c.l.b16 %v320
      %v754 = vunpack.c.l.b16 %v321
      %v755 = vunpack.c.l.b16 %v322
      %v756 = vunpack.c.l.b16 %v323
      %v757 = vunpack.c.l.b16 %v324
      %v758 = vunpack.c.l.b16 %v325
      %v759 = vunpack.c.l.b16 %v326
      %v760 = vunpack.c.l.b16 %v327
      %v761 = vunpack.c.l.b16 %v328
      %v762 = vunpack.c.l.b16 %v329
      %v763 = vunpack.c.l.b16 %v330
      %v764 = vunpack.c.l.b16 %v331
      %v765 = vunpack.c.l.b16 %v332
      %v766 = vunpack.c.l.b16 %v333
      %v767 = vunpack.c.l.b16 %v334
      %v768 = vunpack.c.l.b16 %v335
      %v769 = vunpack.c.l.b16 %v336
      %v770 = vunpack.c.l.b16 %v337
      %v771 = vunpack.c.l.b16 %v338
      %v772 = vunpack.c.l.b16 %v339
      %v773 = vunpack.c.l.b16 %v340
      %v774 = vunpack.c.l.b16 %v341
      %v775 = vunpack.c.l.b16 %v342
      %v776 = vunpack.c.l.b16 %v343
      %v777 = vunpack.c.l.b16 %v344
      %v778 = vunpack.c.l.b16 %v345
      %v779 = vunpack.c.l.b16 %v346
      %v780 = vunpack.c.l.b16 %v347
      %v781 = vunpack.c.l.b16 %v348
      %v782 = vunpack.c.l.b16 %v349
      %v783 = vunpack.c.l.b16 %v350
      %v784 = vpack.c.b16 %v753, %v752
      %v785 = vpack.c.b16 %v755, %v754
      %v786 = vpack.c.b16 %v757, %v756
      %v787 = vpack.c.b16 %v759, %v758
      %v788 = vpack.c.b16 %v761, %v760
      %v789 = vpack.c.b16 %v763, %v762
      %v790 = vpack.c.b16 %v765, %v764
      %v791 = vpack.c.b16 %v767, %v766
      %v792 = vpack.c.b16 %v769, %v768
      %v793 = vpack.c.b16 %v771, %v770
      %v794 = vpack.c.b16 %v773, %v772
      %v795 = vpack.c.b16 %v775, %v774
      %v796 = vpack.c.b16 %v777, %v776
      %v797 = vpack.c.b16 %v779, %v778
      %v798 = vpack.c.b16 %v781, %v780
      %v799 = vpack.c.b16 %v783, %v782
      %v832 = vunpack.c.l.b16 %v351
      %v833 = vunpack.c.l.b16 %v352
      %v834 = vunpack.c.l.b16 %v353
      %v835 = vunpack.c.l.b16 %v354
      %v836 = vunpack.c.l.b16 %v355
      %v837 = vunpack.c.l.b16 %v356
      %v838 = vunpack.c.l.b16 %v357
      %v839 = vunpack.c.l.b16 %v358
      %v840 = vunpack.c.l.b16 %v359
      %v841 = vunpack.c.l.b16 %v360
      %v842 = vunpack.c.l.b16 %v361
      %v843 = vunpack.c.l.b16 %v362
      %v844 = vunpack.c.l.b16 %v363
      %v845 = vunpack.c.l.b16 %v364
      %v846 = vunpack.c.l.b16 %v365
      %v847 = vunpack.c.l.b16 %v366
      %v848 = vpack.c.b16 %v833, %v832
      %v849 = vpack.c.b16 %v835, %v834
      %v850 = vpack.c.b16 %v837, %v836
      %v851 = vpack.c.b16 %v839, %v838
      %v852 = vpack.c.b16 %v841, %v840
      %v853 = vpack.c.b16 %v843, %v842
      %v854 = vpack.c.b16 %v845, %v844
      %v855 = vpack.c.b16 %v847, %v846
      %864 = vmatprep.subr.bf16.mxu0 0
      %865 = vmatpush1.bf16.msra.mxu0 %v855
      %866 = vmatprep.subr.bf16.mxu0 0
      %867 = vmatpush1.bf16.msra.mxu0 %v854
      %868 = vmatprep.subr.bf16.mxu0 0
      %869 = vmatpush1.bf16.msra.mxu0 %v853
      %870 = vmatprep.subr.bf16.mxu0 0
      %871 = vmatpush1.bf16.msra.mxu0 %v852
      %872 = vmatprep.subr.bf16.mxu0 0
      %873 = vmatpush1.bf16.msra.mxu0 %v851
      %874 = vmatprep.subr.bf16.mxu0 0
      %875 = vmatpush1.bf16.msra.mxu0 %v850
      %876 = vmatprep.subr.bf16.mxu0 0
      %877 = vmatpush1.bf16.msra.mxu0 %v849
      %878 = vmatprep.subr.bf16.mxu0 0
      %879 = vmatpush1.bf16.msra.mxu0 %v848
      %880 = vmatprep.subr.bf16.mxu0 0
      %881 = vmatpush2.bf16.msra.mxu0 0
      %882 = vmatprep.subr.bf16.mxu0 0
      %883 = vmatpush2.bf16.msra.mxu0 0
      %884 = vmatprep.subr.bf16.mxu0 0
      %885 = vmatpush2.bf16.msra.mxu0 0
      %886 = vmatprep.subr.bf16.mxu0 0
      %887 = vmatpush2.bf16.msra.mxu0 0
      %888 = vmatprep.subr.bf16.mxu0 0
      %889 = vmatpush2.bf16.msra.mxu0 0
      %890 = vmatprep.subr.bf16.mxu0 0
      %891 = vmatpush2.bf16.msra.mxu0 0
      %892 = vmatprep.subr.bf16.mxu0 0
      %893 = vmatpush2.bf16.msra.mxu0 0
      %894 = vmatprep.subr.bf16.mxu0 0
      %895 = vmatpush2.bf16.msra.mxu0 0
      %896 = vmatprep.mubr.bf16.mxu0 0
      %897 = vmatmul.mubr.bf16.gmra.mxu0 %v784
      %v898 = vpop.f32.mrf.mxu0
      %v899 = vadd.f32 %v594, %v898
      %v900 = vpop.f32.mrf.mxu0
      %v901 = vpop.f32.mrf.mxu0
      %v902 = vadd.f32 %v597, %v901
      %v903 = vpop.f32.mrf.mxu0
      %904 = vmatprep.mubr.bf16.mxu0 0
      %905 = vmatmul.mubr.bf16.gmra.mxu0 %v785
      %v906 = vpop.f32.mrf.mxu0
      %v907 = vadd.f32 %v602, %v906
      %v908 = vpop.f32.mrf.mxu0
      %v909 = vpop.f32.mrf.mxu0
      %v910 = vadd.f32 %v605, %v909
      %v911 = vpop.f32.mrf.mxu0
      %912 = vmatprep.mubr.bf16.mxu0 0
      %913 = vmatmul.mubr.bf16.gmra.mxu0 %v786
      %v914 = vpop.f32.mrf.mxu0
      %v915 = vadd.f32 %v610, %v914
      %v916 = vpop.f32.mrf.mxu0
      %v917 = vpop.f32.mrf.mxu0
      %v918 = vadd.f32 %v613, %v917
      %v919 = vpop.f32.mrf.mxu0
      %920 = vmatprep.mubr.bf16.mxu0 0
      %921 = vmatmul.mubr.bf16.gmra.mxu0 %v787
      %v922 = vpop.f32.mrf.mxu0
      %v923 = vadd.f32 %v618, %v922
      %v924 = vpop.f32.mrf.mxu0
      %v925 = vpop.f32.mrf.mxu0
      %v926 = vadd.f32 %v621, %v925
      %v927 = vpop.f32.mrf.mxu0
      %928 = vmatprep.mubr.bf16.mxu0 0
      %929 = vmatmul.mubr.bf16.gmra.mxu0 %v788
      %v930 = vpop.f32.mrf.mxu0
      %v931 = vadd.f32 %v626, %v930
      %v932 = vpop.f32.mrf.mxu0
      %v933 = vpop.f32.mrf.mxu0
      %v934 = vadd.f32 %v629, %v933
      %v935 = vpop.f32.mrf.mxu0
      %936 = vmatprep.mubr.bf16.mxu0 0
      %937 = vmatmul.mubr.bf16.gmra.mxu0 %v789
      %v938 = vpop.f32.mrf.mxu0
      %v939 = vadd.f32 %v634, %v938
      %v940 = vpop.f32.mrf.mxu0
      %v941 = vpop.f32.mrf.mxu0
      %v942 = vadd.f32 %v637, %v941
      %v943 = vpop.f32.mrf.mxu0
      %944 = vmatprep.mubr.bf16.mxu0 0
      %945 = vmatmul.mubr.bf16.gmra.mxu0 %v790
      %v946 = vpop.f32.mrf.mxu0
      %v947 = vadd.f32 %v642, %v946
      %v948 = vpop.f32.mrf.mxu0
      %v949 = vpop.f32.mrf.mxu0
      %v950 = vadd.f32 %v645, %v949
      %v951 = vpop.f32.mrf.mxu0
      %952 = vmatprep.mubr.bf16.mxu0 0
      %953 = vmatmul.mubr.bf16.gmra.mxu0 %v791
      %v954 = vpop.f32.mrf.mxu0
      %v955 = vadd.f32 %v650, %v954
      %v956 = vpop.f32.mrf.mxu0
      %v957 = vpop.f32.mrf.mxu0
      %v958 = vadd.f32 %v653, %v957
      %v959 = vpop.f32.mrf.mxu0
      %960 = vmatprep.mubr.bf16.mxu0 0
      %961 = vmatmul.mubr.bf16.gmra.mxu0 %v792
      %v962 = vpop.f32.mrf.mxu0
      %v963 = vadd.f32 %v658, %v962
      %v964 = vpop.f32.mrf.mxu0
      %v965 = vpop.f32.mrf.mxu0
      %v966 = vadd.f32 %v661, %v965
      %v967 = vpop.f32.mrf.mxu0
      %968 = vmatprep.mubr.bf16.mxu0 0
      %969 = vmatmul.mubr.bf16.gmra.mxu0 %v793
      %v970 = vpop.f32.mrf.mxu0
      %v971 = vadd.f32 %v666, %v970
      %v972 = vpop.f32.mrf.mxu0
      %v973 = vpop.f32.mrf.mxu0
      %v974 = vadd.f32 %v669, %v973
      %v975 = vpop.f32.mrf.mxu0
      %976 = vmatprep.mubr.bf16.mxu0 0
      %977 = vmatmul.mubr.bf16.gmra.mxu0 %v794
      %v978 = vpop.f32.mrf.mxu0
      %v979 = vadd.f32 %v674, %v978
      %v980 = vpop.f32.mrf.mxu0
      %v981 = vpop.f32.mrf.mxu0
      %v982 = vadd.f32 %v677, %v981
      %v983 = vpop.f32.mrf.mxu0
      %984 = vmatprep.mubr.bf16.mxu0 0
      %985 = vmatmul.mubr.bf16.gmra.mxu0 %v795
      %v986 = vpop.f32.mrf.mxu0
      %v987 = vadd.f32 %v682, %v986
      %v988 = vpop.f32.mrf.mxu0
      %v989 = vpop.f32.mrf.mxu0
      %v990 = vadd.f32 %v685, %v989
      %v991 = vpop.f32.mrf.mxu0
      %992 = vmatprep.mubr.bf16.mxu0 0
      %993 = vmatmul.mubr.bf16.gmra.mxu0 %v796
      %v994 = vpop.f32.mrf.mxu0
      %v995 = vadd.f32 %v690, %v994
      %v996 = vpop.f32.mrf.mxu0
      %v997 = vpop.f32.mrf.mxu0
      %v998 = vadd.f32 %v693, %v997
      %v999 = vpop.f32.mrf.mxu0
      %1000 = vmatprep.mubr.bf16.mxu0 0
      %1001 = vmatmul.mubr.bf16.gmra.mxu0 %v797
      %v1002 = vpop.f32.mrf.mxu0
      %v1003 = vadd.f32 %v698, %v1002
      %v1004 = vpop.f32.mrf.mxu0
      %v1005 = vpop.f32.mrf.mxu0
      %v1006 = vadd.f32 %v701, %v1005
      %v1007 = vpop.f32.mrf.mxu0
      %1008 = vmatprep.mubr.bf16.mxu0 0
      %1009 = vmatmul.mubr.bf16.gmra.mxu0 %v798
      %v1010 = vpop.f32.mrf.mxu0
      %v1011 = vadd.f32 %v706, %v1010
      %v1012 = vpop.f32.mrf.mxu0
      %v1013 = vpop.f32.mrf.mxu0
      %v1014 = vadd.f32 %v709, %v1013
      %v1015 = vpop.f32.mrf.mxu0
      %1016 = vmatprep.mubr.bf16.mxu0 0
      %1017 = vmatmul.mubr.bf16.gmra.mxu0 %v799
      %v1018 = vpop.f32.mrf.mxu0
      %v1019 = vadd.f32 %v714, %v1018
      %v1020 = vpop.f32.mrf.mxu0
      %v1021 = vpop.f32.mrf.mxu0
      %v1022 = vadd.f32 %v717, %v1021
      %v1023 = vpop.f32.mrf.mxu0
      %1024 = vdwg.mxu0
      %v1025 = vld [vmem:[%s308] sm:$0x1]
      %v1027 = vlaneseq
      %v1028 = vshrl.u32 %v1027, 7
      %v1029 = vsub.s32 0, %v1028
      %v1030 = vrot.slane %v1025, %v1029
      %v1032 = vadd.f32 %v899, %v1030
      %v1033 = vadd.f32 %v902, %v1030
      %v1034 = vadd.f32 %v907, %v1030
      %v1035 = vadd.f32 %v910, %v1030
      %v1036 = vadd.f32 %v915, %v1030
      %v1037 = vadd.f32 %v918, %v1030
      %v1038 = vadd.f32 %v923, %v1030
      %v1039 = vadd.f32 %v926, %v1030
      %v1040 = vadd.f32 %v931, %v1030
      %v1041 = vadd.f32 %v934, %v1030
      %v1042 = vadd.f32 %v939, %v1030
      %v1043 = vadd.f32 %v942, %v1030
      %v1044 = vadd.f32 %v947, %v1030
      %v1045 = vadd.f32 %v950, %v1030
      %v1046 = vadd.f32 %v955, %v1030
      %v1047 = vadd.f32 %v958, %v1030
      %v1048 = vadd.f32 %v963, %v1030
      %v1049 = vadd.f32 %v966, %v1030
      %v1050 = vadd.f32 %v971, %v1030
      %v1051 = vadd.f32 %v974, %v1030
      %v1052 = vadd.f32 %v979, %v1030
      %v1053 = vadd.f32 %v982, %v1030
      %v1054 = vadd.f32 %v987, %v1030
      %v1055 = vadd.f32 %v990, %v1030
      %v1056 = vadd.f32 %v995, %v1030
      %v1057 = vadd.f32 %v998, %v1030
      %v1058 = vadd.f32 %v1003, %v1030
      %v1059 = vadd.f32 %v1006, %v1030
      %v1060 = vadd.f32 %v1011, %v1030
      %v1061 = vadd.f32 %v1014, %v1030
      %v1062 = vadd.f32 %v1019, %v1030
      %v1063 = vadd.f32 %v1022, %v1030
      %v1064 = vmax.f32 %v1032, 0.0
      %v1065 = vmax.f32 %v1033, 0.0
      %v1066 = vmax.f32 %v1034, 0.0
      %v1067 = vmax.f32 %v1035, 0.0
      %v1068 = vmax.f32 %v1036, 0.0
      %v1069 = vmax.f32 %v1037, 0.0
      %v1070 = vmax.f32 %v1038, 0.0
      %v1071 = vmax.f32 %v1039, 0.0
      %v1072 = vmax.f32 %v1040, 0.0
      %v1073 = vmax.f32 %v1041, 0.0
      %v1074 = vmax.f32 %v1042, 0.0
      %v1075 = vmax.f32 %v1043, 0.0
      %v1076 = vmax.f32 %v1044, 0.0
      %v1077 = vmax.f32 %v1045, 0.0
      %v1078 = vmax.f32 %v1046, 0.0
      %v1079 = vmax.f32 %v1047, 0.0
      %v1080 = vmax.f32 %v1048, 0.0
      %v1081 = vmax.f32 %v1049, 0.0
      %v1082 = vmax.f32 %v1050, 0.0
      %v1083 = vmax.f32 %v1051, 0.0
      %v1084 = vmax.f32 %v1052, 0.0
      %v1085 = vmax.f32 %v1053, 0.0
      %v1086 = vmax.f32 %v1054, 0.0
      %v1087 = vmax.f32 %v1055, 0.0
      %v1088 = vmax.f32 %v1056, 0.0
      %v1089 = vmax.f32 %v1057, 0.0
      %v1090 = vmax.f32 %v1058, 0.0
      %v1091 = vmax.f32 %v1059, 0.0
      %v1092 = vmax.f32 %v1060, 0.0
      %v1093 = vmax.f32 %v1061, 0.0
      %v1094 = vmax.f32 %v1062, 0.0
      %v1095 = vmax.f32 %v1063, 0.0
      %v1096 = vand.u32 2147483647, %v1032
      %v1097 = vand.u32 2147483647, %v1033
      %v1098 = vand.u32 2147483647, %v1034
      %v1099 = vand.u32 2147483647, %v1035
      %v1100 = vand.u32 2147483647, %v1036
      %v1101 = vand.u32 2147483647, %v1037
      %v1102 = vand.u32 2147483647, %v1038
      %v1103 = vand.u32 2147483647, %v1039
      %v1104 = vand.u32 2147483647, %v1040
      %v1105 = vand.u32 2147483647, %v1041
      %v1106 = vand.u32 2147483647, %v1042
      %v1107 = vand.u32 2147483647, %v1043
      %v1108 = vand.u32 2147483647, %v1044
      %v1109 = vand.u32 2147483647, %v1045
      %v1110 = vand.u32 2147483647, %v1046
      %v1111 = vand.u32 2147483647, %v1047
      %v1112 = vand.u32 2147483647, %v1048
      %v1113 = vand.u32 2147483647, %v1049
      %v1114 = vand.u32 2147483647, %v1050
      %v1115 = vand.u32 2147483647, %v1051
      %v1116 = vand.u32 2147483647, %v1052
      %v1117 = vand.u32 2147483647, %v1053
      %v1118 = vand.u32 2147483647, %v1054
      %v1119 = vand.u32 2147483647, %v1055
      %v1120 = vand.u32 2147483647, %v1056
      %v1121 = vand.u32 2147483647, %v1057
      %v1122 = vand.u32 2147483647, %v1058
      %v1123 = vand.u32 2147483647, %v1059
      %v1124 = vand.u32 2147483647, %v1060
      %v1125 = vand.u32 2147483647, %v1061
      %v1126 = vand.u32 2147483647, %v1062
      %v1127 = vand.u32 2147483647, %v1063
      %v1128 = vsub.f32 0.0, %v1096
      %v1129 = vsub.f32 0.0, %v1097
      %v1130 = vsub.f32 0.0, %v1098
      %v1131 = vsub.f32 0.0, %v1099
      %v1132 = vsub.f32 0.0, %v1100
      %v1133 = vsub.f32 0.0, %v1101
      %v1134 = vsub.f32 0.0, %v1102
      %v1135 = vsub.f32 0.0, %v1103
      %v1136 = vsub.f32 0.0, %v1104
      %v1137 = vsub.f32 0.0, %v1105
      %v1138 = vsub.f32 0.0, %v1106
      %v1139 = vsub.f32 0.0, %v1107
      %v1140 = vsub.f32 0.0, %v1108
      %v1141 = vsub.f32 0.0, %v1109
      %v1142 = vsub.f32 0.0, %v1110
      %v1143 = vsub.f32 0.0, %v1111
      %v1144 = vsub.f32 0.0, %v1112
      %v1145 = vsub.f32 0.0, %v1113
      %v1146 = vsub.f32 0.0, %v1114
      %v1147 = vsub.f32 0.0, %v1115
      %v1148 = vsub.f32 0.0, %v1116
      %v1149 = vsub.f32 0.0, %v1117
      %v1150 = vsub.f32 0.0, %v1118
      %v1151 = vsub.f32 0.0, %v1119
      %v1152 = vsub.f32 0.0, %v1120
      %v1153 = vsub.f32 0.0, %v1121
      %v1154 = vsub.f32 0.0, %v1122
      %v1155 = vsub.f32 0.0, %v1123
      %v1156 = vsub.f32 0.0, %v1124
      %v1157 = vsub.f32 0.0, %v1125
      %v1158 = vsub.f32 0.0, %v1126
      %v1159 = vsub.f32 0.0, %v1127
      %v1160 = vmul.f32 %v1128, 1.442695
      %v1161 = vpow.pop %v1160
      %v1162 = vmul.f32 %v1129, 1.442695
      %v1163 = vpow.pop %v1162
      %v1164 = vmul.f32 %v1130, 1.442695
      %v1165 = vpow.pop %v1164
      %v1166 = vmul.f32 %v1131, 1.442695
      %v1167 = vpow.pop %v1166
      %v1168 = vmul.f32 %v1132, 1.442695
      %v1169 = vpow.pop %v1168
      %v1170 = vmul.f32 %v1133, 1.442695
      %v1171 = vpow.pop %v1170
      %v1172 = vmul.f32 %v1134, 1.442695
      %v1173 = vpow.pop %v1172
      %v1174 = vmul.f32 %v1135, 1.442695
      %v1175 = vpow.pop %v1174
      %v1176 = vmul.f32 %v1136, 1.442695
      %v1177 = vpow.pop %v1176
      %v1178 = vmul.f32 %v1137, 1.442695
      %v1179 = vpow.pop %v1178
      %v1180 = vmul.f32 %v1138, 1.442695
      %v1181 = vpow.pop %v1180
      %v1182 = vmul.f32 %v1139, 1.442695
      %v1183 = vpow.pop %v1182
      %v1184 = vmul.f32 %v1140, 1.442695
      %v1185 = vpow.pop %v1184
      %v1186 = vmul.f32 %v1141, 1.442695
      %v1187 = vpow.pop %v1186
      %v1188 = vmul.f32 %v1142, 1.442695
      %v1189 = vpow.pop %v1188
      %v1190 = vmul.f32 %v1143, 1.442695
      %v1191 = vpow.pop %v1190
      %v1192 = vmul.f32 %v1144, 1.442695
      %v1193 = vpow.pop %v1192
      %v1194 = vmul.f32 %v1145, 1.442695
      %v1195 = vpow.pop %v1194
      %v1196 = vmul.f32 %v1146, 1.442695
      %v1197 = vpow.pop %v1196
      %v1198 = vmul.f32 %v1147, 1.442695
      %v1199 = vpow.pop %v1198
      %v1200 = vmul.f32 %v1148, 1.442695
      %v1201 = vpow.pop %v1200
      %v1202 = vmul.f32 %v1149, 1.442695
      %v1203 = vpow.pop %v1202
      %v1204 = vmul.f32 %v1150, 1.442695
      %v1205 = vpow.pop %v1204
      %v1206 = vmul.f32 %v1151, 1.442695
      %v1207 = vpow.pop %v1206
      %v1208 = vmul.f32 %v1152, 1.442695
      %v1209 = vpow.pop %v1208
      %v1210 = vmul.f32 %v1153, 1.442695
      %v1211 = vpow.pop %v1210
      %v1212 = vmul.f32 %v1154, 1.442695
      %v1213 = vpow.pop %v1212
      %v1214 = vmul.f32 %v1155, 1.442695
      %v1215 = vpow.pop %v1214
      %v1216 = vmul.f32 %v1156, 1.442695
      %v1217 = vpow.pop %v1216
      %v1218 = vmul.f32 %v1157, 1.442695
      %v1219 = vpow.pop %v1218
      %v1220 = vmul.f32 %v1158, 1.442695
      %v1221 = vpow.pop %v1220
      %v1222 = vmul.f32 %v1159, 1.442695
      %v1223 = vpow.pop %v1222
      %v1224 = vadd.f32 %v1161, 1.0
      %v1225 = vlog2.pop %v1224
      %v1226 = vmul.f32 %v1225, 0.6931472
      %v1227 = vmul.f32 -0.5, %v1161
      %v1228 = vadd.f32 %v1227, 1.0
      %v1229 = vmul.f32 %v1228, %v1161
      %v1230 = vand.u32 2147483647, %v1161
      %vm1231 = vcmp.lt.f32.partialorder %v1230, 0.0004427343
      %v1232 = vsel %vm1231, %v1229, %v1226
      %v1233 = vadd.f32 %v1163, 1.0
      %v1234 = vlog2.pop %v1233
      %v1235 = vmul.f32 %v1234, 0.6931472
      %v1236 = vmul.f32 -0.5, %v1163
      %v1237 = vadd.f32 %v1236, 1.0
      %v1238 = vmul.f32 %v1237, %v1163
      %v1239 = vand.u32 2147483647, %v1163
      %vm1240 = vcmp.lt.f32.partialorder %v1239, 0.0004427343
      %v1241 = vsel %vm1240, %v1238, %v1235
      %v1242 = vadd.f32 %v1165, 1.0
      %v1243 = vlog2.pop %v1242
      %v1244 = vmul.f32 %v1243, 0.6931472
      %v1245 = vmul.f32 -0.5, %v1165
      %v1246 = vadd.f32 %v1245, 1.0
      %v1247 = vmul.f32 %v1246, %v1165
      %v1248 = vand.u32 2147483647, %v1165
      %vm1249 = vcmp.lt.f32.partialorder %v1248, 0.0004427343
      %v1250 = vsel %vm1249, %v1247, %v1244
      %v1251 = vadd.f32 %v1167, 1.0
      %v1252 = vlog2.pop %v1251
      %v1253 = vmul.f32 %v1252, 0.6931472
      %v1254 = vmul.f32 -0.5, %v1167
      %v1255 = vadd.f32 %v1254, 1.0
      %v1256 = vmul.f32 %v1255, %v1167
      %v1257 = vand.u32 2147483647, %v1167
      %vm1258 = vcmp.lt.f32.partialorder %v1257, 0.0004427343
      %v1259 = vsel %vm1258, %v1256, %v1253
      %v1260 = vadd.f32 %v1169, 1.0
      %v1261 = vlog2.pop %v1260
      %v1262 = vmul.f32 %v1261, 0.6931472
      %v1263 = vmul.f32 -0.5, %v1169
      %v1264 = vadd.f32 %v1263, 1.0
      %v1265 = vmul.f32 %v1264, %v1169
      %v1266 = vand.u32 2147483647, %v1169
      %vm1267 = vcmp.lt.f32.partialorder %v1266, 0.0004427343
      %v1268 = vsel %vm1267, %v1265, %v1262
      %v1269 = vadd.f32 %v1171, 1.0
      %v1270 = vlog2.pop %v1269
      %v1271 = vmul.f32 %v1270, 0.6931472
      %v1272 = vmul.f32 -0.5, %v1171
      %v1273 = vadd.f32 %v1272, 1.0
      %v1274 = vmul.f32 %v1273, %v1171
      %v1275 = vand.u32 2147483647, %v1171
      %vm1276 = vcmp.lt.f32.partialorder %v1275, 0.0004427343
      %v1277 = vsel %vm1276, %v1274, %v1271
      %v1278 = vadd.f32 %v1173, 1.0
      %v1279 = vlog2.pop %v1278
      %v1280 = vmul.f32 %v1279, 0.6931472
      %v1281 = vmul.f32 -0.5, %v1173
      %v1282 = vadd.f32 %v1281, 1.0
      %v1283 = vmul.f32 %v1282, %v1173
      %v1284 = vand.u32 2147483647, %v1173
      %vm1285 = vcmp.lt.f32.partialorder %v1284, 0.0004427343
      %v1286 = vsel %vm1285, %v1283, %v1280
      %v1287 = vadd.f32 %v1175, 1.0
      %v1288 = vlog2.pop %v1287
      %v1289 = vmul.f32 %v1288, 0.6931472
      %v1290 = vmul.f32 -0.5, %v1175
      %v1291 = vadd.f32 %v1290, 1.0
      %v1292 = vmul.f32 %v1291, %v1175
      %v1293 = vand.u32 2147483647, %v1175
      %vm1294 = vcmp.lt.f32.partialorder %v1293, 0.0004427343
      %v1295 = vsel %vm1294, %v1292, %v1289
      %v1296 = vadd.f32 %v1177, 1.0
      %v1297 = vlog2.pop %v1296
      %v1298 = vmul.f32 %v1297, 0.6931472
      %v1299 = vmul.f32 -0.5, %v1177
      %v1300 = vadd.f32 %v1299, 1.0
      %v1301 = vmul.f32 %v1300, %v1177
      %v1302 = vand.u32 2147483647, %v1177
      %vm1303 = vcmp.lt.f32.partialorder %v1302, 0.0004427343
      %v1304 = vsel %vm1303, %v1301, %v1298
      %v1305 = vadd.f32 %v1179, 1.0
      %v1306 = vlog2.pop %v1305
      %v1307 = vmul.f32 %v1306, 0.6931472
      %v1308 = vmul.f32 -0.5, %v1179
      %v1309 = vadd.f32 %v1308, 1.0
      %v1310 = vmul.f32 %v1309, %v1179
      %v1311 = vand.u32 2147483647, %v1179
      %vm1312 = vcmp.lt.f32.partialorder %v1311, 0.0004427343
      %v1313 = vsel %vm1312, %v1310, %v1307
      %v1314 = vadd.f32 %v1181, 1.0
      %v1315 = vlog2.pop %v1314
      %v1316 = vmul.f32 %v1315, 0.6931472
      %v1317 = vmul.f32 -0.5, %v1181
      %v1318 = vadd.f32 %v1317, 1.0
      %v1319 = vmul.f32 %v1318, %v1181
      %v1320 = vand.u32 2147483647, %v1181
      %vm1321 = vcmp.lt.f32.partialorder %v1320, 0.0004427343
      %v1322 = vsel %vm1321, %v1319, %v1316
      %v1323 = vadd.f32 %v1183, 1.0
      %v1324 = vlog2.pop %v1323
      %v1325 = vmul.f32 %v1324, 0.6931472
      %v1326 = vmul.f32 -0.5, %v1183
      %v1327 = vadd.f32 %v1326, 1.0
      %v1328 = vmul.f32 %v1327, %v1183
      %v1329 = vand.u32 2147483647, %v1183
      %vm1330 = vcmp.lt.f32.partialorder %v1329, 0.0004427343
      %v1331 = vsel %vm1330, %v1328, %v1325
      %v1332 = vadd.f32 %v1185, 1.0
      %v1333 = vlog2.pop %v1332
      %v1334 = vmul.f32 %v1333, 0.6931472
      %v1335 = vmul.f32 -0.5, %v1185
      %v1336 = vadd.f32 %v1335, 1.0
      %v1337 = vmul.f32 %v1336, %v1185
      %v1338 = vand.u32 2147483647, %v1185
      %vm1339 = vcmp.lt.f32.partialorder %v1338, 0.0004427343
      %v1340 = vsel %vm1339, %v1337, %v1334
      %v1341 = vadd.f32 %v1187, 1.0
      %v1342 = vlog2.pop %v1341
      %v1343 = vmul.f32 %v1342, 0.6931472
      %v1344 = vmul.f32 -0.5, %v1187
      %v1345 = vadd.f32 %v1344, 1.0
      %v1346 = vmul.f32 %v1345, %v1187
      %v1347 = vand.u32 2147483647, %v1187
      %vm1348 = vcmp.lt.f32.partialorder %v1347, 0.0004427343
      %v1349 = vsel %vm1348, %v1346, %v1343
      %v1350 = vadd.f32 %v1189, 1.0
      %v1351 = vlog2.pop %v1350
      %v1352 = vmul.f32 %v1351, 0.6931472
      %v1353 = vmul.f32 -0.5, %v1189
      %v1354 = vadd.f32 %v1353, 1.0
      %v1355 = vmul.f32 %v1354, %v1189
      %v1356 = vand.u32 2147483647, %v1189
      %vm1357 = vcmp.lt.f32.partialorder %v1356, 0.0004427343
      %v1358 = vsel %vm1357, %v1355, %v1352
      %v1359 = vadd.f32 %v1191, 1.0
      %v1360 = vlog2.pop %v1359
      %v1361 = vmul.f32 %v1360, 0.6931472
      %v1362 = vmul.f32 -0.5, %v1191
      %v1363 = vadd.f32 %v1362, 1.0
      %v1364 = vmul.f32 %v1363, %v1191
      %v1365 = vand.u32 2147483647, %v1191
      %vm1366 = vcmp.lt.f32.partialorder %v1365, 0.0004427343
      %v1367 = vsel %vm1366, %v1364, %v1361
      %v1368 = vadd.f32 %v1193, 1.0
      %v1369 = vlog2.pop %v1368
      %v1370 = vmul.f32 %v1369, 0.6931472
      %v1371 = vmul.f32 -0.5, %v1193
      %v1372 = vadd.f32 %v1371, 1.0
      %v1373 = vmul.f32 %v1372, %v1193
      %v1374 = vand.u32 2147483647, %v1193
      %vm1375 = vcmp.lt.f32.partialorder %v1374, 0.0004427343
      %v1376 = vsel %vm1375, %v1373, %v1370
      %v1377 = vadd.f32 %v1195, 1.0
      %v1378 = vlog2.pop %v1377
      %v1379 = vmul.f32 %v1378, 0.6931472
      %v1380 = vmul.f32 -0.5, %v1195
      %v1381 = vadd.f32 %v1380, 1.0
      %v1382 = vmul.f32 %v1381, %v1195
      %v1383 = vand.u32 2147483647, %v1195
      %vm1384 = vcmp.lt.f32.partialorder %v1383, 0.0004427343
      %v1385 = vsel %vm1384, %v1382, %v1379
      %v1386 = vadd.f32 %v1197, 1.0
      %v1387 = vlog2.pop %v1386
      %v1388 = vmul.f32 %v1387, 0.6931472
      %v1389 = vmul.f32 -0.5, %v1197
      %v1390 = vadd.f32 %v1389, 1.0
      %v1391 = vmul.f32 %v1390, %v1197
      %v1392 = vand.u32 2147483647, %v1197
      %vm1393 = vcmp.lt.f32.partialorder %v1392, 0.0004427343
      %v1394 = vsel %vm1393, %v1391, %v1388
      %v1395 = vadd.f32 %v1199, 1.0
      %v1396 = vlog2.pop %v1395
      %v1397 = vmul.f32 %v1396, 0.6931472
      %v1398 = vmul.f32 -0.5, %v1199
      %v1399 = vadd.f32 %v1398, 1.0
      %v1400 = vmul.f32 %v1399, %v1199
      %v1401 = vand.u32 2147483647, %v1199
      %vm1402 = vcmp.lt.f32.partialorder %v1401, 0.0004427343
      %v1403 = vsel %vm1402, %v1400, %v1397
      %v1404 = vadd.f32 %v1201, 1.0
      %v1405 = vlog2.pop %v1404
      %v1406 = vmul.f32 %v1405, 0.6931472
      %v1407 = vmul.f32 -0.5, %v1201
      %v1408 = vadd.f32 %v1407, 1.0
      %v1409 = vmul.f32 %v1408, %v1201
      %v1410 = vand.u32 2147483647, %v1201
      %vm1411 = vcmp.lt.f32.partialorder %v1410, 0.0004427343
      %v1412 = vsel %vm1411, %v1409, %v1406
      %v1413 = vadd.f32 %v1203, 1.0
      %v1414 = vlog2.pop %v1413
      %v1415 = vmul.f32 %v1414, 0.6931472
      %v1416 = vmul.f32 -0.5, %v1203
      %v1417 = vadd.f32 %v1416, 1.0
      %v1418 = vmul.f32 %v1417, %v1203
      %v1419 = vand.u32 2147483647, %v1203
      %vm1420 = vcmp.lt.f32.partialorder %v1419, 0.0004427343
      %v1421 = vsel %vm1420, %v1418, %v1415
      %v1422 = vadd.f32 %v1205, 1.0
      %v1423 = vlog2.pop %v1422
      %v1424 = vmul.f32 %v1423, 0.6931472
      %v1425 = vmul.f32 -0.5, %v1205
      %v1426 = vadd.f32 %v1425, 1.0
      %v1427 = vmul.f32 %v1426, %v1205
      %v1428 = vand.u32 2147483647, %v1205
      %vm1429 = vcmp.lt.f32.partialorder %v1428, 0.0004427343
      %v1430 = vsel %vm1429, %v1427, %v1424
      %v1431 = vadd.f32 %v1207, 1.0
      %v1432 = vlog2.pop %v1431
      %v1433 = vmul.f32 %v1432, 0.6931472
      %v1434 = vmul.f32 -0.5, %v1207
      %v1435 = vadd.f32 %v1434, 1.0
      %v1436 = vmul.f32 %v1435, %v1207
      %v1437 = vand.u32 2147483647, %v1207
      %vm1438 = vcmp.lt.f32.partialorder %v1437, 0.0004427343
      %v1439 = vsel %vm1438, %v1436, %v1433
      %v1440 = vadd.f32 %v1209, 1.0
      %v1441 = vlog2.pop %v1440
      %v1442 = vmul.f32 %v1441, 0.6931472
      %v1443 = vmul.f32 -0.5, %v1209
      %v1444 = vadd.f32 %v1443, 1.0
      %v1445 = vmul.f32 %v1444, %v1209
      %v1446 = vand.u32 2147483647, %v1209
      %vm1447 = vcmp.lt.f32.partialorder %v1446, 0.0004427343
      %v1448 = vsel %vm1447, %v1445, %v1442
      %v1449 = vadd.f32 %v1211, 1.0
      %v1450 = vlog2.pop %v1449
      %v1451 = vmul.f32 %v1450, 0.6931472
      %v1452 = vmul.f32 -0.5, %v1211
      %v1453 = vadd.f32 %v1452, 1.0
      %v1454 = vmul.f32 %v1453, %v1211
      %v1455 = vand.u32 2147483647, %v1211
      %vm1456 = vcmp.lt.f32.partialorder %v1455, 0.0004427343
      %v1457 = vsel %vm1456, %v1454, %v1451
      %v1458 = vadd.f32 %v1213, 1.0
      %v1459 = vlog2.pop %v1458
      %v1460 = vmul.f32 %v1459, 0.6931472
      %v1461 = vmul.f32 -0.5, %v1213
      %v1462 = vadd.f32 %v1461, 1.0
      %v1463 = vmul.f32 %v1462, %v1213
      %v1464 = vand.u32 2147483647, %v1213
      %vm1465 = vcmp.lt.f32.partialorder %v1464, 0.0004427343
      %v1466 = vsel %vm1465, %v1463, %v1460
      %v1467 = vadd.f32 %v1215, 1.0
      %v1468 = vlog2.pop %v1467
      %v1469 = vmul.f32 %v1468, 0.6931472
      %v1470 = vmul.f32 -0.5, %v1215
      %v1471 = vadd.f32 %v1470, 1.0
      %v1472 = vmul.f32 %v1471, %v1215
      %v1473 = vand.u32 2147483647, %v1215
      %vm1474 = vcmp.lt.f32.partialorder %v1473, 0.0004427343
      %v1475 = vsel %vm1474, %v1472, %v1469
      %v1476 = vadd.f32 %v1217, 1.0
      %v1477 = vlog2.pop %v1476
      %v1478 = vmul.f32 %v1477, 0.6931472
      %v1479 = vmul.f32 -0.5, %v1217
      %v1480 = vadd.f32 %v1479, 1.0
      %v1481 = vmul.f32 %v1480, %v1217
      %v1482 = vand.u32 2147483647, %v1217
      %vm1483 = vcmp.lt.f32.partialorder %v1482, 0.0004427343
      %v1484 = vsel %vm1483, %v1481, %v1478
      %v1485 = vadd.f32 %v1219, 1.0
      %v1486 = vlog2.pop %v1485
      %v1487 = vmul.f32 %v1486, 0.6931472
      %v1488 = vmul.f32 -0.5, %v1219
      %v1489 = vadd.f32 %v1488, 1.0
      %v1490 = vmul.f32 %v1489, %v1219
      %v1491 = vand.u32 2147483647, %v1219
      %vm1492 = vcmp.lt.f32.partialorder %v1491, 0.0004427343
      %v1493 = vsel %vm1492, %v1490, %v1487
      %v1494 = vadd.f32 %v1221, 1.0
      %v1495 = vlog2.pop %v1494
      %v1496 = vmul.f32 %v1495, 0.6931472
      %v1497 = vmul.f32 -0.5, %v1221
      %v1498 = vadd.f32 %v1497, 1.0
      %v1499 = vmul.f32 %v1498, %v1221
      %v1500 = vand.u32 2147483647, %v1221
      %vm1501 = vcmp.lt.f32.partialorder %v1500, 0.0004427343
      %v1502 = vsel %vm1501, %v1499, %v1496
      %v1503 = vadd.f32 %v1223, 1.0
      %v1504 = vlog2.pop %v1503
      %v1505 = vmul.f32 %v1504, 0.6931472
      %v1506 = vmul.f32 -0.5, %v1223
      %v1507 = vadd.f32 %v1506, 1.0
      %v1508 = vmul.f32 %v1507, %v1223
      %v1509 = vand.u32 2147483647, %v1223
      %vm1510 = vcmp.lt.f32.partialorder %v1509, 0.0004427343
      %v1511 = vsel %vm1510, %v1508, %v1505
      %v1512 = vadd.f32 %v1064, %v1232
      %v1513 = vadd.f32 %v1065, %v1241
      %v1514 = vadd.f32 %v1066, %v1250
      %v1515 = vadd.f32 %v1067, %v1259
      %v1516 = vadd.f32 %v1068, %v1268
      %v1517 = vadd.f32 %v1069, %v1277
      %v1518 = vadd.f32 %v1070, %v1286
      %v1519 = vadd.f32 %v1071, %v1295
      %v1520 = vadd.f32 %v1072, %v1304
      %v1521 = vadd.f32 %v1073, %v1313
      %v1522 = vadd.f32 %v1074, %v1322
      %v1523 = vadd.f32 %v1075, %v1331
      %v1524 = vadd.f32 %v1076, %v1340
      %v1525 = vadd.f32 %v1077, %v1349
      %v1526 = vadd.f32 %v1078, %v1358
      %v1527 = vadd.f32 %v1079, %v1367
      %v1528 = vadd.f32 %v1080, %v1376
      %v1529 = vadd.f32 %v1081, %v1385
      %v1530 = vadd.f32 %v1082, %v1394
      %v1531 = vadd.f32 %v1083, %v1403
      %v1532 = vadd.f32 %v1084, %v1412
      %v1533 = vadd.f32 %v1085, %v1421
      %v1534 = vadd.f32 %v1086, %v1430
      %v1535 = vadd.f32 %v1087, %v1439
      %v1536 = vadd.f32 %v1088, %v1448
      %v1537 = vadd.f32 %v1089, %v1457
      %v1538 = vadd.f32 %v1090, %v1466
      %v1539 = vadd.f32 %v1091, %v1475
      %v1540 = vadd.f32 %v1092, %v1484
      %v1541 = vadd.f32 %v1093, %v1493
      %v1542 = vadd.f32 %v1094, %v1502
      %v1543 = vadd.f32 %v1095, %v1511
      %v1544 = vtanh.pop %v1512
      %v1545 = vtanh.pop %v1513
      %v1546 = vtanh.pop %v1514
      %v1547 = vtanh.pop %v1515
      %v1548 = vtanh.pop %v1516
      %v1549 = vtanh.pop %v1517
      %v1550 = vtanh.pop %v1518
      %v1551 = vtanh.pop %v1519
      %v1552 = vtanh.pop %v1520
      %v1553 = vtanh.pop %v1521
      %v1554 = vtanh.pop %v1522
      %v1555 = vtanh.pop %v1523
      %v1556 = vtanh.pop %v1524
      %v1557 = vtanh.pop %v1525
      %v1558 = vtanh.pop %v1526
      %v1559 = vtanh.pop %v1527
      %v1560 = vtanh.pop %v1528
      %v1561 = vtanh.pop %v1529
      %v1562 = vtanh.pop %v1530
      %v1563 = vtanh.pop %v1531
      %v1564 = vtanh.pop %v1532
      %v1565 = vtanh.pop %v1533
      %v1566 = vtanh.pop %v1534
      %v1567 = vtanh.pop %v1535
      %v1568 = vtanh.pop %v1536
      %v1569 = vtanh.pop %v1537
      %v1570 = vtanh.pop %v1538
      %v1571 = vtanh.pop %v1539
      %v1572 = vtanh.pop %v1540
      %v1573 = vtanh.pop %v1541
      %v1574 = vtanh.pop %v1542
      %v1575 = vtanh.pop %v1543
      %v1576 = vmul.f32 %v1032, %v1544
      %v1577 = vmul.f32 %v1033, %v1545
      %v1578 = vmul.f32 %v1034, %v1546
      %v1579 = vmul.f32 %v1035, %v1547
      %v1580 = vmul.f32 %v1036, %v1548
      %v1581 = vmul.f32 %v1037, %v1549
      %v1582 = vmul.f32 %v1038, %v1550
      %v1583 = vmul.f32 %v1039, %v1551
      %v1584 = vmul.f32 %v1040, %v1552
      %v1585 = vmul.f32 %v1041, %v1553
      %v1586 = vmul.f32 %v1042, %v1554
      %v1587 = vmul.f32 %v1043, %v1555
      %v1588 = vmul.f32 %v1044, %v1556
      %v1589 = vmul.f32 %v1045, %v1557
      %v1590 = vmul.f32 %v1046, %v1558
      %v1591 = vmul.f32 %v1047, %v1559
      %v1592 = vmul.f32 %v1048, %v1560
      %v1593 = vmul.f32 %v1049, %v1561
      %v1594 = vmul.f32 %v1050, %v1562
      %v1595 = vmul.f32 %v1051, %v1563
      %v1596 = vmul.f32 %v1052, %v1564
      %v1597 = vmul.f32 %v1053, %v1565
      %v1598 = vmul.f32 %v1054, %v1566
      %v1599 = vmul.f32 %v1055, %v1567
      %v1600 = vmul.f32 %v1056, %v1568
      %v1601 = vmul.f32 %v1057, %v1569
      %v1602 = vmul.f32 %v1058, %v1570
      %v1603 = vmul.f32 %v1059, %v1571
      %v1604 = vmul.f32 %v1060, %v1572
      %v1605 = vmul.f32 %v1061, %v1573
      %v1606 = vmul.f32 %v1062, %v1574
      %v1607 = vmul.f32 %v1063, %v1575
      %v1608 = vpack.c.bf16 %v1577, %v1576
      %v1609 = vpack.c.bf16 %v1579, %v1578
      %v1610 = vpack.c.bf16 %v1581, %v1580
      %v1611 = vpack.c.bf16 %v1583, %v1582
      %v1612 = vpack.c.bf16 %v1585, %v1584
      %v1613 = vpack.c.bf16 %v1587, %v1586
      %v1614 = vpack.c.bf16 %v1589, %v1588
      %v1615 = vpack.c.bf16 %v1591, %v1590
      %v1616 = vpack.c.bf16 %v1593, %v1592
      %v1617 = vpack.c.bf16 %v1595, %v1594
      %v1618 = vpack.c.bf16 %v1597, %v1596
      %v1619 = vpack.c.bf16 %v1599, %v1598
      %v1620 = vpack.c.bf16 %v1601, %v1600
      %v1621 = vpack.c.bf16 %v1603, %v1602
      %v1622 = vpack.c.bf16 %v1605, %v1604
      %v1623 = vpack.c.bf16 %v1607, %v1606
      %v1640 = vunpack.c.l.b16 %v1608
      %v1641 = vunpack.c.h.b16 %v1608
      %v1642 = vunpack.c.l.b16 %v1609
      %v1643 = vunpack.c.h.b16 %v1609
      %v1644 = vunpack.c.l.b16 %v1610
      %v1645 = vunpack.c.h.b16 %v1610
      %v1646 = vunpack.c.l.b16 %v1611
      %v1647 = vunpack.c.h.b16 %v1611
      %v1648 = vunpack.c.l.b16 %v1612
      %v1649 = vunpack.c.h.b16 %v1612
      %v1650 = vunpack.c.l.b16 %v1613
      %v1651 = vunpack.c.h.b16 %v1613
      %v1652 = vunpack.c.l.b16 %v1614
      %v1653 = vunpack.c.h.b16 %v1614
      %v1654 = vunpack.c.l.b16 %v1615
      %v1655 = vunpack.c.h.b16 %v1615
      %v1656 = vunpack.c.l.b16 %v1616
      %v1657 = vunpack.c.h.b16 %v1616
      %v1658 = vunpack.c.l.b16 %v1617
      %v1659 = vunpack.c.h.b16 %v1617
      %v1660 = vunpack.c.l.b16 %v1618
      %v1661 = vunpack.c.h.b16 %v1618
      %v1662 = vunpack.c.l.b16 %v1619
      %v1663 = vunpack.c.h.b16 %v1619
      %v1664 = vunpack.c.l.b16 %v1620
      %v1665 = vunpack.c.h.b16 %v1620
      %v1666 = vunpack.c.l.b16 %v1621
      %v1667 = vunpack.c.h.b16 %v1621
      %v1668 = vunpack.c.l.b16 %v1622
      %v1669 = vunpack.c.h.b16 %v1622
      %v1670 = vunpack.c.l.b16 %v1623
      %v1671 = vunpack.c.h.b16 %v1623
      %v1672 = vpack.c.b16 %v1640, %v1640
      %v1673 = vpack.c.b16 %v1641, %v1641
      %v1674 = vpack.c.b16 %v1642, %v1642
      %v1675 = vpack.c.b16 %v1643, %v1643
      %v1676 = vpack.c.b16 %v1644, %v1644
      %v1677 = vpack.c.b16 %v1645, %v1645
      %v1678 = vpack.c.b16 %v1646, %v1646
      %v1679 = vpack.c.b16 %v1647, %v1647
      %v1680 = vpack.c.b16 %v1648, %v1648
      %v1681 = vpack.c.b16 %v1649, %v1649
      %v1682 = vpack.c.b16 %v1650, %v1650
      %v1683 = vpack.c.b16 %v1651, %v1651
      %v1684 = vpack.c.b16 %v1652, %v1652
      %v1685 = vpack.c.b16 %v1653, %v1653
      %v1686 = vpack.c.b16 %v1654, %v1654
      %v1687 = vpack.c.b16 %v1655, %v1655
      %v1688 = vpack.c.b16 %v1656, %v1656
      %v1689 = vpack.c.b16 %v1657, %v1657
      %v1690 = vpack.c.b16 %v1658, %v1658
      %v1691 = vpack.c.b16 %v1659, %v1659
      %v1692 = vpack.c.b16 %v1660, %v1660
      %v1693 = vpack.c.b16 %v1661, %v1661
      %v1694 = vpack.c.b16 %v1662, %v1662
      %v1695 = vpack.c.b16 %v1663, %v1663
      %v1696 = vpack.c.b16 %v1664, %v1664
      %v1697 = vpack.c.b16 %v1665, %v1665
      %v1698 = vpack.c.b16 %v1666, %v1666
      %v1699 = vpack.c.b16 %v1667, %v1667
      %v1700 = vpack.c.b16 %v1668, %v1668
      %v1701 = vpack.c.b16 %v1669, %v1669
      %v1702 = vpack.c.b16 %v1670, %v1670
      %v1703 = vpack.c.b16 %v1671, %v1671
      %1736 = vst [vmem:[%s316] sm:$0xf] %v1672
      %1737 = vst [vmem:[%s316 + $0x4] sm:$0xf] %v1673
      %1738 = vst [vmem:[%s316 + $0x8] sm:$0xf] %v1674
      %1739 = vst [vmem:[%s316 + $0xc] sm:$0xf] %v1675
      %1740 = vst [vmem:[%s316 + $0x10] sm:$0xf] %v1676
      %1741 = vst [vmem:[%s316 + $0x14] sm:$0xf] %v1677
      %1742 = vst [vmem:[%s316 + $0x18] sm:$0xf] %v1678
      %1743 = vst [vmem:[%s316 + $0x1c] sm:$0xf] %v1679
      %1744 = vst [vmem:[%s316 + $0x20] sm:$0xf] %v1680
      %1745 = vst [vmem:[%s316 + $0x24] sm:$0xf] %v1681
      %1746 = vst [vmem:[%s316 + $0x28] sm:$0xf] %v1682
      %1747 = vst [vmem:[%s316 + $0x2c] sm:$0xf] %v1683
      %1748 = vst [vmem:[%s316 + $0x30] sm:$0xf] %v1684
      %1749 = vst [vmem:[%s316 + $0x34] sm:$0xf] %v1685
      %1750 = vst [vmem:[%s316 + $0x38] sm:$0xf] %v1686
      %1751 = vst [vmem:[%s316 + $0x3c] sm:$0xf] %v1687
      %1752 = vst [vmem:[%s316 + $0x40] sm:$0xf] %v1688
      %1753 = vst [vmem:[%s316 + $0x44] sm:$0xf] %v1689
      %1754 = vst [vmem:[%s316 + $0x48] sm:$0xf] %v1690
      %1755 = vst [vmem:[%s316 + $0x4c] sm:$0xf] %v1691
      %1756 = vst [vmem:[%s316 + $0x50] sm:$0xf] %v1692
      %1757 = vst [vmem:[%s316 + $0x54] sm:$0xf] %v1693
      %1758 = vst [vmem:[%s316 + $0x58] sm:$0xf] %v1694
      %1759 = vst [vmem:[%s316 + $0x5c] sm:$0xf] %v1695
      %1760 = vst [vmem:[%s316 + $0x60] sm:$0xf] %v1696
      %1761 = vst [vmem:[%s316 + $0x64] sm:$0xf] %v1697
      %1762 = vst [vmem:[%s316 + $0x68] sm:$0xf] %v1698
      %1763 = vst [vmem:[%s316 + $0x6c] sm:$0xf] %v1699
      %1764 = vst [vmem:[%s316 + $0x70] sm:$0xf] %v1700
      %1765 = vst [vmem:[%s316 + $0x74] sm:$0xf] %v1701
      %1766 = vst [vmem:[%s316 + $0x78] sm:$0xf] %v1702
      %1767 = vst [vmem:[%s316 + $0x7c] sm:$0xf] %v1703
      %s1768 = smul.u32 32, %s20
      %p1769 = scmp.lt.s32.totalorder %s1768, 63
      %s1770 = scalar_select %p1769, %s1768, 63
      %p1771 = scmp.lt.s32.totalorder %s21, 0
      %s1772 = scalar_select %p1771, %s21, 0
      %s1773 = sadd.s32 %s1772, %s1770
      %s1774 = smul.addr %s1773, 4
      %s1775 = scalar_lea.vmem %s5, %s1774
      // Predicated region
      $region41: #{_lambda_.9} parent=39 // pred_check
        %p1776 = pneg %p178
      $region42: #{_lambda_.9} parent=39 // pred_check_branch
        %1778 = sbr.rel (%p1776) target = $region44
      $region43: #{_lambda_.9} parent=39 // pred_region
        %s1779 = smul.u32 32, %s20
      $region44: #{_lambda_.9} parent=39 // pred_fallthru
        _
    $region40: #{_lambda_.9} parent=5 // pred_fallthru
      _
    %p1780 = scmp.le.s32.totalorder 2, %s11
    // Predicated region
    $region45: #{_lambda_.9} parent=5 // pred_check
      %p1781 = pneg %p1780
    $region46: #{_lambda_.9} parent=5 // pred_check_branch
      %1783 = sbr.rel (%p1781) target = $region48
    $region47: #{_lambda_.9} parent=5 // pred_region
      %s1784 = ssub.s32 %s11, 2
      // Predicated region
      $region49: #{_lambda_.9} parent=47 // pred_check
        %p1785 = pneg %p184
      $region50: #{_lambda_.9} parent=47 // pred_check_branch
        %1787 = sbr.rel (%p1785) target = $region52
      $region51: #{_lambda_.9} parent=47 // pred_region
        %s1788 = smul.u32 32, %s22
        %p1789 = scmp.lt.s32.totalorder %s1788, 63
        %s1790 = scalar_select %p1789, %s1788, 63
        %p1791 = scmp.lt.s32.totalorder %s23, 0
        %s1792 = scalar_select %p1791, %s23, 0
        %s1793 = sadd.s32 %s1792, %s1790
        %s1794 = smul.addr %s1793, 4
        %s1795 = scalar_lea.vmem %s5, %s1794
      $region52: #{_lambda_.9} parent=47 // pred_fallthru
        _
    $region48: #{_lambda_.9} parent=5 // pred_fallthru
      _
  $region6: #{_lambda_.9} parent=0 // loop_footer
    %s15 = sadd.s32 1, %s11
  $region7: #{_lambda_.9} parent=0 // loop_footer_branch
    %10 = sbr.rel target = $region3
  $region8: #{_lambda_.9} parent=0 // loop_exit
    _

</llo_original>
